<compile_context>
chip_gen: v7x
topology: tpu7x:2x2x1
jax: 0.10.0
libtpu: 0.0.40
codegen_flags: <defaults>
</compile_context>

<pallas_src>
import functools

import jax
import jax.numpy as jnp
from jax.experimental import pallas as pl
from jax.experimental.pallas import tpu as pltpu


def gru_recurrence_kernel(x_ref, wi_ref, wh_ref, bi_ref, bh_ref, hs_ref, gi_ref,
                          *, seq_len, batch_p, hidden):
    """Fused GRU layer over the whole sequence (single kernel invocation).

    x_ref  : (T*Bp, E)  time-major embedded inputs (batch zero-padded to Bp)
    wi_ref : (E, 3H)    input->gates weights, gate order [r, z, n]
    wh_ref : (H, 3H)    hidden->gates weights
    bi_ref : (1, 3H)    input bias
    bh_ref : (1, 3H)    hidden bias
    hs_ref : (T*Bp, H)  output: all hidden states h_1..h_T (time-major, lane-dense)
    gi_ref : (T*Bp, 3H) VMEM scratch for the hoisted input->gate projections
    """
    H = hidden
    Bp = batch_p

    # Hoisted out of the recurrence: one large MXU matmul (M = T*Bp) computes
    # the input->gate projection for every timestep, with b_ih folded in here.
    gi_ref[...] = (
        jnp.dot(x_ref[...], wi_ref[...], preferred_element_type=jnp.float32)
        + bi_ref[...]
    )

    bh = bh_ref[...]                      # (1, 3H), hoisted load
    h = jnp.zeros((Bp, H), jnp.float32)   # PyTorch default initial hidden state

    # Fully-unrolled static time loop: only the (Bp,H)x(H,3H) hidden matmul and
    # the gate elementwise math remain on the serialized path.
    for t in range(seq_len):
        lo = t * Bp
        gi = gi_ref[lo:lo + Bp, :]                                     # (Bp, 3H)
        gh = jnp.dot(h, wh_ref[...], preferred_element_type=jnp.float32) + bh

        r = jax.nn.sigmoid(gi[:, 0:H] + gh[:, 0:H])
        z = jax.nn.sigmoid(gi[:, H:2 * H] + gh[:, H:2 * H])
        n = jnp.tanh(gi[:, 2 * H:3 * H] + r * gh[:, 2 * H:3 * H])
        h = (1.0 - z) * n + z * h

        hs_ref[lo:lo + Bp, :] = h          # lane-dense (Bp, 256) unmasked store


def linear_kernel(h_ref, wp_ref, bp_ref, out_ref):
    """Batched output projection: (T*B, H) @ (H, C) + b, one MXU call."""
    out_ref[...] = (
        jnp.dot(h_ref[...], wp_ref[...], preferred_element_type=jnp.float32)
        + bp_ref[...]
    ).astype(out_ref.dtype)


def my_layer_forward(token_ids, params):
    """Equivalent of MyLayer.forward: proj(rnn(embedding(x))[0])."""
    emb_table = params["embedding"]      # (n_symbols, E)
    wi = params["w_ih_t"]                # (E, 3H)
    wh = params["w_hh_t"]                # (H, 3H)
    bi = params["b_ih"]                  # (1, 3H)
    bh = params["b_hh"]                  # (1, 3H)
    wp = params["w_proj_t"]              # (H, C)
    bp = params["b_proj"]                # (1, C)

    B, T = token_ids.shape
    E = emb_table.shape[1]
    H = wh.shape[0]
    C = wp.shape[1]
    Bp = ((B + 7) // 8) * 8              # pad batch to a full f32 sublane tile

    # Embedding gather straight into time-major layout: transpose the tiny
    # (B, T) int32 id matrix instead of the (B, T, E) activation tensor.
    embedded_tm = jnp.take(emb_table, token_ids.T, axis=0)          # (T, B, E)
    if Bp != B:
        embedded_tm = jnp.pad(embedded_tm, ((0, 0), (0, Bp - B), (0, 0)))
    x_flat = embedded_tm.reshape(T * Bp, E)                         # (T*Bp, E)

    # Single gridless invocation: all weights + the whole (tiny) sequence live
    # in VMEM once; no per-timestep grid/pipeline overhead.
    hs_flat = pl.pallas_call(
        functools.partial(gru_recurrence_kernel,
                          seq_len=T, batch_p=Bp, hidden=H),
        out_shape=jax.ShapeDtypeStruct((T * Bp, H), jnp.float32),
        scratch_shapes=[pltpu.VMEM((T * Bp, 3 * H), jnp.float32)],
    )(x_flat, wi, wh, bi, bh)

    # Drop padded batch rows, then one batched MXU projection over all (t, b).
    hs_valid = hs_flat.reshape(T, Bp, H)[:, :B, :].reshape(T * B, H)
    logits = pl.pallas_call(
        linear_kernel,
        out_shape=jax.ShapeDtypeStruct((T * B, C), jnp.float32),
    )(hs_valid, wp, bp)

    return logits.reshape(T, B, C).transpose(1, 0, 2)               # (B, T, C)


def reference_forward(token_ids, params):
    """Pure-JAX reference matching PyTorch GRU semantics."""
    emb_table = params["embedding"]
    wi, wh = params["w_ih_t"], params["w_hh_t"]
    bi, bh = params["b_ih"], params["b_hh"]
    wp, bp = params["w_proj_t"], params["b_proj"]
    H = wh.shape[0]

    x = jnp.take(emb_table, token_ids, axis=0)            # (B, T, E)
    B, T, _ = x.shape
    h = jnp.zeros((B, H), jnp.float32)
    outs = []
    for t in range(T):
        gi = x[:, t, :] @ wi + bi
        gh = h @ wh + bh
        r = jax.nn.sigmoid(gi[:, :H] + gh[:, :H])
        z = jax.nn.sigmoid(gi[:, H:2 * H] + gh[:, H:2 * H])
        n = jnp.tanh(gi[:, 2 * H:] + r * gh[:, 2 * H:])
        h = (1.0 - z) * n + z * h
        outs.append(h @ wp + bp)
    return jnp.stack(outs, axis=1)                         # (B, T, C)


def init_params(key, n_symbols, n_classes, n_embed, n_hidden):
    ks = jax.random.split(key, 7)
    scale = 0.1
    emb = scale * jax.random.normal(ks[0], (n_symbols, n_embed), jnp.float32)
    w_ih = scale * jax.random.normal(ks[1], (3 * n_hidden, n_embed), jnp.float32)
    w_hh = scale * jax.random.normal(ks[2], (3 * n_hidden, n_hidden), jnp.float32)
    b_ih = scale * jax.random.normal(ks[3], (3 * n_hidden,), jnp.float32)
    b_hh = scale * jax.random.normal(ks[4], (3 * n_hidden,), jnp.float32)
    w_proj = scale * jax.random.normal(ks[5], (n_classes, n_hidden), jnp.float32)
    b_proj = scale * jax.random.normal(ks[6], (n_classes,), jnp.float32)
    return {
        "embedding": emb,
        "w_ih_t": w_ih.T,                    # (E, 3H)
        "w_hh_t": w_hh.T,                    # (H, 3H)
        "b_ih": b_ih.reshape(1, -1),         # (1, 3H)
        "b_hh": b_hh.reshape(1, -1),         # (1, 3H)
        "w_proj_t": w_proj.T,                # (H, C)
        "b_proj": b_proj.reshape(1, -1),     # (1, C)
    }


if __name__ == "__main__":
    # Small shapes consistent with MyLayer(n_symbols, n_classes, n_embed=64, n_hidden=256).
    n_symbols, n_classes = 16, 8
    n_embed, n_hidden = 64, 256
    B, T = 2, 8

    key = jax.random.PRNGKey(0)
    k_param, k_data = jax.random.split(key)
    params = init_params(k_param, n_symbols, n_classes, n_embed, n_hidden)
    token_ids = jax.random.randint(k_data, (B, T), 0, n_symbols, dtype=jnp.int32)

    out = my_layer_forward(token_ids, params)
    out = jax.block_until_ready(out)

    ref = reference_forward(token_ids, params)
    assert out.shape == (B, T, n_classes), out.shape
    assert jnp.allclose(out, ref, atol=1e-3, rtol=1e-3), float(jnp.max(jnp.abs(out - ref)))

    print("KERNEL_OK")
</pallas_src>

<mosaic_0001>
module attributes {stable_mosaic.version = 11 : i64} {
  func.func @gru_recurrence_kernel(%arg0: memref<64x64xf32, #tpu.memory_space<vmem>>, %arg1: memref<64x768xf32, #tpu.memory_space<vmem>>, %arg2: memref<256x768xf32, #tpu.memory_space<vmem>>, %arg3: memref<1x768xf32, #tpu.memory_space<vmem>>, %arg4: memref<1x768xf32, #tpu.memory_space<vmem>>, %arg5: memref<64x256xf32, #tpu.memory_space<vmem>>, %arg6: memref<64x768xf32, #tpu.memory_space<vmem>>) attributes {dimension_semantics = [], scalar_prefetch = 0 : i64, scratch_operands = 1 : i64, tpu.core_type = #tpu.core_type<tc>} {
    %c0 = arith.constant 0 : index
    %c0_0 = arith.constant 0 : index
    %0 = vector.load %arg0[%c0, %c0_0] : memref<64x64xf32, #tpu.memory_space<vmem>>, vector<64x64xf32>
    %c0_1 = arith.constant 0 : index
    %c0_2 = arith.constant 0 : index
    %1 = vector.load %arg1[%c0_1, %c0_2] : memref<64x768xf32, #tpu.memory_space<vmem>>, vector<64x768xf32>
    %cst = arith.constant dense<0.000000e+00> : vector<64x768xf32>
    %2 = tpu.matmul %0, %1, %cst {dimension_numbers = #tpu.dot_dimension_numbers<[1], [0], [0], [1], [0, 0, 1, 1], [], []>} : vector<64x64xf32>, vector<64x768xf32>, vector<64x768xf32> -> vector<64x768xf32>
    %c0_3 = arith.constant 0 : index
    %c0_4 = arith.constant 0 : index
    %3 = vector.load %arg3[%c0_3, %c0_4] : memref<1x768xf32, #tpu.memory_space<vmem>>, vector<1x768xf32>
    %4 = vector.broadcast %3 : vector<1x768xf32> to vector<64x768xf32>
    %5 = arith.addf %2, %4 : vector<64x768xf32>
    %c0_5 = arith.constant 0 : index
    %c0_6 = arith.constant 0 : index
    %6 = vector.load %arg6[%c0_5, %c0_6] : memref<64x768xf32, #tpu.memory_space<vmem>>, vector<64x768xf32>
    tpu.vector_store %arg6[%c0_5, %c0_6], %5 {strides = array<i32>} : memref<64x768xf32, #tpu.memory_space<vmem>>, vector<64x768xf32>,
    %c0_7 = arith.constant 0 : index
    %c0_8 = arith.constant 0 : index
    %7 = vector.load %arg4[%c0_7, %c0_8] : memref<1x768xf32, #tpu.memory_space<vmem>>, vector<1x768xf32>
    %cst_9 = arith.constant 0.000000e+00 : f32
    %8 = vector.broadcast %cst_9 : f32 to vector<8x256xf32>
    %c0_10 = arith.constant 0 : index
    %c0_11 = arith.constant 0 : index
    %9 = vector.load %arg6[%c0_10, %c0_11] : memref<64x768xf32, #tpu.memory_space<vmem>>, vector<8x768xf32>
    %c0_12 = arith.constant 0 : index
    %c0_13 = arith.constant 0 : index
    %10 = vector.load %arg2[%c0_12, %c0_13] : memref<256x768xf32, #tpu.memory_space<vmem>>, vector<256x768xf32>
    %cst_14 = arith.constant dense<0.000000e+00> : vector<8x768xf32>
    %11 = tpu.matmul %8, %10, %cst_14 {dimension_numbers = #tpu.dot_dimension_numbers<[1], [0], [0], [1], [0, 0, 1, 1], [], []>} : vector<8x256xf32>, vector<256x768xf32>, vector<8x768xf32> -> vector<8x768xf32>
    %12 = vector.broadcast %7 : vector<1x768xf32> to vector<8x768xf32>
    %13 = arith.addf %11, %12 : vector<8x768xf32>
    %14 = vector.extract_strided_slice %9 {offsets = [0, 0], sizes = [8, 256], strides = [1, 1]} : vector<8x768xf32> to vector<8x256xf32>
    %15 = vector.extract_strided_slice %13 {offsets = [0, 0], sizes = [8, 256], strides = [1, 1]} : vector<8x768xf32> to vector<8x256xf32>
    %16 = arith.addf %14, %15 : vector<8x256xf32>
    %17 = arith.negf %16 : vector<8x256xf32>
    %18 = math.exp %17 : vector<8x256xf32>
    %cst_15 = arith.constant 1.000000e+00 : f32
    %19 = vector.broadcast %cst_15 : f32 to vector<8x256xf32>
    %20 = arith.addf %19, %18 : vector<8x256xf32>
    %21 = arith.divf %19, %20 : vector<8x256xf32>
    %22 = vector.extract_strided_slice %9 {offsets = [0, 256], sizes = [8, 256], strides = [1, 1]} : vector<8x768xf32> to vector<8x256xf32>
    %23 = vector.extract_strided_slice %13 {offsets = [0, 256], sizes = [8, 256], strides = [1, 1]} : vector<8x768xf32> to vector<8x256xf32>
    %24 = arith.addf %22, %23 : vector<8x256xf32>
    %25 = arith.negf %24 : vector<8x256xf32>
    %26 = math.exp %25 : vector<8x256xf32>
    %cst_16 = arith.constant 1.000000e+00 : f32
    %27 = vector.broadcast %cst_16 : f32 to vector<8x256xf32>
    %28 = arith.addf %27, %26 : vector<8x256xf32>
    %29 = arith.divf %27, %28 : vector<8x256xf32>
    %30 = vector.extract_strided_slice %9 {offsets = [0, 512], sizes = [8, 256], strides = [1, 1]} : vector<8x768xf32> to vector<8x256xf32>
    %31 = vector.extract_strided_slice %13 {offsets = [0, 512], sizes = [8, 256], strides = [1, 1]} : vector<8x768xf32> to vector<8x256xf32>
    %32 = arith.mulf %21, %31 : vector<8x256xf32>
    %33 = arith.addf %30, %32 : vector<8x256xf32>
    %34 = math.tanh %33 : vector<8x256xf32>
    %cst_17 = arith.constant 1.000000e+00 : f32
    %35 = vector.broadcast %cst_17 : f32 to vector<8x256xf32>
    %36 = arith.subf %35, %29 : vector<8x256xf32>
    %37 = arith.mulf %36, %34 : vector<8x256xf32>
    %38 = arith.mulf %29, %8 : vector<8x256xf32>
    %39 = arith.addf %37, %38 : vector<8x256xf32>
    %c0_18 = arith.constant 0 : index
    %c0_19 = arith.constant 0 : index
    %40 = vector.load %arg5[%c0_18, %c0_19] : memref<64x256xf32, #tpu.memory_space<vmem>>, vector<8x256xf32>
    tpu.vector_store %arg5[%c0_18, %c0_19], %39 {strides = array<i32>} : memref<64x256xf32, #tpu.memory_space<vmem>>, vector<8x256xf32>,
    %c8 = arith.constant 8 : index
    %c0_20 = arith.constant 0 : index
    %41 = vector.load %arg6[%c8, %c0_20] : memref<64x768xf32, #tpu.memory_space<vmem>>, vector<8x768xf32>
    %c0_21 = arith.constant 0 : index
    %c0_22 = arith.constant 0 : index
    %42 = vector.load %arg2[%c0_21, %c0_22] : memref<256x768xf32, #tpu.memory_space<vmem>>, vector<256x768xf32>
    %cst_23 = arith.constant dense<0.000000e+00> : vector<8x768xf32>
    %43 = tpu.matmul %39, %42, %cst_23 {dimension_numbers = #tpu.dot_dimension_numbers<[1], [0], [0], [1], [0, 0, 1, 1], [], []>} : vector<8x256xf32>, vector<256x768xf32>, vector<8x768xf32> -> vector<8x768xf32>
    %44 = vector.broadcast %7 : vector<1x768xf32> to vector<8x768xf32>
    %45 = arith.addf %43, %44 : vector<8x768xf32>
    %46 = vector.extract_strided_slice %41 {offsets = [0, 0], sizes = [8, 256], strides = [1, 1]} : vector<8x768xf32> to vector<8x256xf32>
    %47 = vector.extract_strided_slice %45 {offsets = [0, 0], sizes = [8, 256], strides = [1, 1]} : vector<8x768xf32> to vector<8x256xf32>
    %48 = arith.addf %46, %47 : vector<8x256xf32>
    %49 = arith.negf %48 : vector<8x256xf32>
    %50 = math.exp %49 : vector<8x256xf32>
    %cst_24 = arith.constant 1.000000e+00 : f32
    %51 = vector.broadcast %cst_24 : f32 to vector<8x256xf32>
    %52 = arith.addf %51, %50 : vector<8x256xf32>
    %53 = arith.divf %51, %52 : vector<8x256xf32>
    %54 = vector.extract_strided_slice %41 {offsets = [0, 256], sizes = [8, 256], strides = [1, 1]} : vector<8x768xf32> to vector<8x256xf32>
    %55 = vector.extract_strided_slice %45 {offsets = [0, 256], sizes = [8, 256], strides = [1, 1]} : vector<8x768xf32> to vector<8x256xf32>
    %56 = arith.addf %54, %55 : vector<8x256xf32>
    %57 = arith.negf %56 : vector<8x256xf32>
    %58 = math.exp %57 : vector<8x256xf32>
    %cst_25 = arith.constant 1.000000e+00 : f32
    %59 = vector.broadcast %cst_25 : f32 to vector<8x256xf32>
    %60 = arith.addf %59, %58 : vector<8x256xf32>
    %61 = arith.divf %59, %60 : vector<8x256xf32>
    %62 = vector.extract_strided_slice %41 {offsets = [0, 512], sizes = [8, 256], strides = [1, 1]} : vector<8x768xf32> to vector<8x256xf32>
    %63 = vector.extract_strided_slice %45 {offsets = [0, 512], sizes = [8, 256], strides = [1, 1]} : vector<8x768xf32> to vector<8x256xf32>
    %64 = arith.mulf %53, %63 : vector<8x256xf32>
    %65 = arith.addf %62, %64 : vector<8x256xf32>
    %66 = math.tanh %65 : vector<8x256xf32>
    %cst_26 = arith.constant 1.000000e+00 : f32
    %67 = vector.broadcast %cst_26 : f32 to vector<8x256xf32>
    %68 = arith.subf %67, %61 : vector<8x256xf32>
    %69 = arith.mulf %68, %66 : vector<8x256xf32>
    %70 = arith.mulf %61, %39 : vector<8x256xf32>
    %71 = arith.addf %69, %70 : vector<8x256xf32>
    %c8_27 = arith.constant 8 : index
    %c0_28 = arith.constant 0 : index
    %72 = vector.load %arg5[%c8_27, %c0_28] : memref<64x256xf32, #tpu.memory_space<vmem>>, vector<8x256xf32>
    tpu.vector_store %arg5[%c8_27, %c0_28], %71 {strides = array<i32>} : memref<64x256xf32, #tpu.memory_space<vmem>>, vector<8x256xf32>,
    %c16 = arith.constant 16 : index
    %c0_29 = arith.constant 0 : index
    %73 = vector.load %arg6[%c16, %c0_29] : memref<64x768xf32, #tpu.memory_space<vmem>>, vector<8x768xf32>
    %c0_30 = arith.constant 0 : index
    %c0_31 = arith.constant 0 : index
    %74 = vector.load %arg2[%c0_30, %c0_31] : memref<256x768xf32, #tpu.memory_space<vmem>>, vector<256x768xf32>
    %cst_32 = arith.constant dense<0.000000e+00> : vector<8x768xf32>
    %75 = tpu.matmul %71, %74, %cst_32 {dimension_numbers = #tpu.dot_dimension_numbers<[1], [0], [0], [1], [0, 0, 1, 1], [], []>} : vector<8x256xf32>, vector<256x768xf32>, vector<8x768xf32> -> vector<8x768xf32>
    %76 = vector.broadcast %7 : vector<1x768xf32> to vector<8x768xf32>
    %77 = arith.addf %75, %76 : vector<8x768xf32>
    %78 = vector.extract_strided_slice %73 {offsets = [0, 0], sizes = [8, 256], strides = [1, 1]} : vector<8x768xf32> to vector<8x256xf32>
    %79 = vector.extract_strided_slice %77 {offsets = [0, 0], sizes = [8, 256], strides = [1, 1]} : vector<8x768xf32> to vector<8x256xf32>
    %80 = arith.addf %78, %79 : vector<8x256xf32>
    %81 = arith.negf %80 : vector<8x256xf32>
    %82 = math.exp %81 : vector<8x256xf32>
    %cst_33 = arith.constant 1.000000e+00 : f32
    %83 = vector.broadcast %cst_33 : f32 to vector<8x256xf32>
    %84 = arith.addf %83, %82 : vector<8x256xf32>
    %85 = arith.divf %83, %84 : vector<8x256xf32>
    %86 = vector.extract_strided_slice %73 {offsets = [0, 256], sizes = [8, 256], strides = [1, 1]} : vector<8x768xf32> to vector<8x256xf32>
    %87 = vector.extract_strided_slice %77 {offsets = [0, 256], sizes = [8, 256], strides = [1, 1]} : vector<8x768xf32> to vector<8x256xf32>
    %88 = arith.addf %86, %87 : vector<8x256xf32>
    %89 = arith.negf %88 : vector<8x256xf32>
    %90 = math.exp %89 : vector<8x256xf32>
    %cst_34 = arith.constant 1.000000e+00 : f32
    %91 = vector.broadcast %cst_34 : f32 to vector<8x256xf32>
    %92 = arith.addf %91, %90 : vector<8x256xf32>
    %93 = arith.divf %91, %92 : vector<8x256xf32>
    %94 = vector.extract_strided_slice %73 {offsets = [0, 512], sizes = [8, 256], strides = [1, 1]} : vector<8x768xf32> to vector<8x256xf32>
    %95 = vector.extract_strided_slice %77 {offsets = [0, 512], sizes = [8, 256], strides = [1, 1]} : vector<8x768xf32> to vector<8x256xf32>
    %96 = arith.mulf %85, %95 : vector<8x256xf32>
    %97 = arith.addf %94, %96 : vector<8x256xf32>
    %98 = math.tanh %97 : vector<8x256xf32>
    %cst_35 = arith.constant 1.000000e+00 : f32
    %99 = vector.broadcast %cst_35 : f32 to vector<8x256xf32>
    %100 = arith.subf %99, %93 : vector<8x256xf32>
    %101 = arith.mulf %100, %98 : vector<8x256xf32>
    %102 = arith.mulf %93, %71 : vector<8x256xf32>
    %103 = arith.addf %101, %102 : vector<8x256xf32>
    %c16_36 = arith.constant 16 : index
    %c0_37 = arith.constant 0 : index
    %104 = vector.load %arg5[%c16_36, %c0_37] : memref<64x256xf32, #tpu.memory_space<vmem>>, vector<8x256xf32>
    tpu.vector_store %arg5[%c16_36, %c0_37], %103 {strides = array<i32>} : memref<64x256xf32, #tpu.memory_space<vmem>>, vector<8x256xf32>,
    %c24 = arith.constant 24 : index
    %c0_38 = arith.constant 0 : index
    %105 = vector.load %arg6[%c24, %c0_38] : memref<64x768xf32, #tpu.memory_space<vmem>>, vector<8x768xf32>
    %c0_39 = arith.constant 0 : index
    %c0_40 = arith.constant 0 : index
    %106 = vector.load %arg2[%c0_39, %c0_40] : memref<256x768xf32, #tpu.memory_space<vmem>>, vector<256x768xf32>
    %cst_41 = arith.constant dense<0.000000e+00> : vector<8x768xf32>
    %107 = tpu.matmul %103, %106, %cst_41 {dimension_numbers = #tpu.dot_dimension_numbers<[1], [0], [0], [1], [0, 0, 1, 1], [], []>} : vector<8x256xf32>, vector<256x768xf32>, vector<8x768xf32> -> vector<8x768xf32>
    %108 = vector.broadcast %7 : vector<1x768xf32> to vector<8x768xf32>
    %109 = arith.addf %107, %108 : vector<8x768xf32>
    %110 = vector.extract_strided_slice %105 {offsets = [0, 0], sizes = [8, 256], strides = [1, 1]} : vector<8x768xf32> to vector<8x256xf32>
    %111 = vector.extract_strided_slice %109 {offsets = [0, 0], sizes = [8, 256], strides = [1, 1]} : vector<8x768xf32> to vector<8x256xf32>
    %112 = arith.addf %110, %111 : vector<8x256xf32>
    %113 = arith.negf %112 : vector<8x256xf32>
    %114 = math.exp %113 : vector<8x256xf32>
    %cst_42 = arith.constant 1.000000e+00 : f32
    %115 = vector.broadcast %cst_42 : f32 to vector<8x256xf32>
    %116 = arith.addf %115, %114 : vector<8x256xf32>
    %117 = arith.divf %115, %116 : vector<8x256xf32>
    %118 = vector.extract_strided_slice %105 {offsets = [0, 256], sizes = [8, 256], strides = [1, 1]} : vector<8x768xf32> to vector<8x256xf32>
    %119 = vector.extract_strided_slice %109 {offsets = [0, 256], sizes = [8, 256], strides = [1, 1]} : vector<8x768xf32> to vector<8x256xf32>
    %120 = arith.addf %118, %119 : vector<8x256xf32>
    %121 = arith.negf %120 : vector<8x256xf32>
    %122 = math.exp %121 : vector<8x256xf32>
    %cst_43 = arith.constant 1.000000e+00 : f32
    %123 = vector.broadcast %cst_43 : f32 to vector<8x256xf32>
    %124 = arith.addf %123, %122 : vector<8x256xf32>
    %125 = arith.divf %123, %124 : vector<8x256xf32>
    %126 = vector.extract_strided_slice %105 {offsets = [0, 512], sizes = [8, 256], strides = [1, 1]} : vector<8x768xf32> to vector<8x256xf32>
    %127 = vector.extract_strided_slice %109 {offsets = [0, 512], sizes = [8, 256], strides = [1, 1]} : vector<8x768xf32> to vector<8x256xf32>
    %128 = arith.mulf %117, %127 : vector<8x256xf32>
    %129 = arith.addf %126, %128 : vector<8x256xf32>
    %130 = math.tanh %129 : vector<8x256xf32>
    %cst_44 = arith.constant 1.000000e+00 : f32
    %131 = vector.broadcast %cst_44 : f32 to vector<8x256xf32>
    %132 = arith.subf %131, %125 : vector<8x256xf32>
    %133 = arith.mulf %132, %130 : vector<8x256xf32>
    %134 = arith.mulf %125, %103 : vector<8x256xf32>
    %135 = arith.addf %133, %134 : vector<8x256xf32>
    %c24_45 = arith.constant 24 : index
    %c0_46 = arith.constant 0 : index
    %136 = vector.load %arg5[%c24_45, %c0_46] : memref<64x256xf32, #tpu.memory_space<vmem>>, vector<8x256xf32>
    tpu.vector_store %arg5[%c24_45, %c0_46], %135 {strides = array<i32>} : memref<64x256xf32, #tpu.memory_space<vmem>>, vector<8x256xf32>,
    %c32 = arith.constant 32 : index
    %c0_47 = arith.constant 0 : index
    %137 = vector.load %arg6[%c32, %c0_47] : memref<64x768xf32, #tpu.memory_space<vmem>>, vector<8x768xf32>
    %c0_48 = arith.constant 0 : index
    %c0_49 = arith.constant 0 : index
    %138 = vector.load %arg2[%c0_48, %c0_49] : memref<256x768xf32, #tpu.memory_space<vmem>>, vector<256x768xf32>
    %cst_50 = arith.constant dense<0.000000e+00> : vector<8x768xf32>
    %139 = tpu.matmul %135, %138, %cst_50 {dimension_numbers = #tpu.dot_dimension_numbers<[1], [0], [0], [1], [0, 0, 1, 1], [], []>} : vector<8x256xf32>, vector<256x768xf32>, vector<8x768xf32> -> vector<8x768xf32>
    %140 = vector.broadcast %7 : vector<1x768xf32> to vector<8x768xf32>
    %141 = arith.addf %139, %140 : vector<8x768xf32>
    %142 = vector.extract_strided_slice %137 {offsets = [0, 0], sizes = [8, 256], strides = [1, 1]} : vector<8x768xf32> to vector<8x256xf32>
    %143 = vector.extract_strided_slice %141 {offsets = [0, 0], sizes = [8, 256], strides = [1, 1]} : vector<8x768xf32> to vector<8x256xf32>
    %144 = arith.addf %142, %143 : vector<8x256xf32>
    %145 = arith.negf %144 : vector<8x256xf32>
    %146 = math.exp %145 : vector<8x256xf32>
    %cst_51 = arith.constant 1.000000e+00 : f32
    %147 = vector.broadcast %cst_51 : f32 to vector<8x256xf32>
    %148 = arith.addf %147, %146 : vector<8x256xf32>
    %149 = arith.divf %147, %148 : vector<8x256xf32>
    %150 = vector.extract_strided_slice %137 {offsets = [0, 256], sizes = [8, 256], strides = [1, 1]} : vector<8x768xf32> to vector<8x256xf32>
    %151 = vector.extract_strided_slice %141 {offsets = [0, 256], sizes = [8, 256], strides = [1, 1]} : vector<8x768xf32> to vector<8x256xf32>
    %152 = arith.addf %150, %151 : vector<8x256xf32>
    %153 = arith.negf %152 : vector<8x256xf32>
    %154 = math.exp %153 : vector<8x256xf32>
    %cst_52 = arith.constant 1.000000e+00 : f32
    %155 = vector.broadcast %cst_52 : f32 to vector<8x256xf32>
    %156 = arith.addf %155, %154 : vector<8x256xf32>
    %157 = arith.divf %155, %156 : vector<8x256xf32>
    %158 = vector.extract_strided_slice %137 {offsets = [0, 512], sizes = [8, 256], strides = [1, 1]} : vector<8x768xf32> to vector<8x256xf32>
    %159 = vector.extract_strided_slice %141 {offsets = [0, 512], sizes = [8, 256], strides = [1, 1]} : vector<8x768xf32> to vector<8x256xf32>
    %160 = arith.mulf %149, %159 : vector<8x256xf32>
    %161 = arith.addf %158, %160 : vector<8x256xf32>
    %162 = math.tanh %161 : vector<8x256xf32>
    %cst_53 = arith.constant 1.000000e+00 : f32
    %163 = vector.broadcast %cst_53 : f32 to vector<8x256xf32>
    %164 = arith.subf %163, %157 : vector<8x256xf32>
    %165 = arith.mulf %164, %162 : vector<8x256xf32>
    %166 = arith.mulf %157, %135 : vector<8x256xf32>
    %167 = arith.addf %165, %166 : vector<8x256xf32>
    %c32_54 = arith.constant 32 : index
    %c0_55 = arith.constant 0 : index
    %168 = vector.load %arg5[%c32_54, %c0_55] : memref<64x256xf32, #tpu.memory_space<vmem>>, vector<8x256xf32>
    tpu.vector_store %arg5[%c32_54, %c0_55], %167 {strides = array<i32>} : memref<64x256xf32, #tpu.memory_space<vmem>>, vector<8x256xf32>,
    %c40 = arith.constant 40 : index
    %c0_56 = arith.constant 0 : index
    %169 = vector.load %arg6[%c40, %c0_56] : memref<64x768xf32, #tpu.memory_space<vmem>>, vector<8x768xf32>
    %c0_57 = arith.constant 0 : index
    %c0_58 = arith.constant 0 : index
    %170 = vector.load %arg2[%c0_57, %c0_58] : memref<256x768xf32, #tpu.memory_space<vmem>>, vector<256x768xf32>
    %cst_59 = arith.constant dense<0.000000e+00> : vector<8x768xf32>
    %171 = tpu.matmul %167, %170, %cst_59 {dimension_numbers = #tpu.dot_dimension_numbers<[1], [0], [0], [1], [0, 0, 1, 1], [], []>} : vector<8x256xf32>, vector<256x768xf32>, vector<8x768xf32> -> vector<8x768xf32>
    %172 = vector.broadcast %7 : vector<1x768xf32> to vector<8x768xf32>
    %173 = arith.addf %171, %172 : vector<8x768xf32>
    %174 = vector.extract_strided_slice %169 {offsets = [0, 0], sizes = [8, 256], strides = [1, 1]} : vector<8x768xf32> to vector<8x256xf32>
    %175 = vector.extract_strided_slice %173 {offsets = [0, 0], sizes = [8, 256], strides = [1, 1]} : vector<8x768xf32> to vector<8x256xf32>
    %176 = arith.addf %174, %175 : vector<8x256xf32>
    %177 = arith.negf %176 : vector<8x256xf32>
    %178 = math.exp %177 : vector<8x256xf32>
    %cst_60 = arith.constant 1.000000e+00 : f32
    %179 = vector.broadcast %cst_60 : f32 to vector<8x256xf32>
    %180 = arith.addf %179, %178 : vector<8x256xf32>
    %181 = arith.divf %179, %180 : vector<8x256xf32>
    %182 = vector.extract_strided_slice %169 {offsets = [0, 256], sizes = [8, 256], strides = [1, 1]} : vector<8x768xf32> to vector<8x256xf32>
    %183 = vector.extract_strided_slice %173 {offsets = [0, 256], sizes = [8, 256], strides = [1, 1]} : vector<8x768xf32> to vector<8x256xf32>
    %184 = arith.addf %182, %183 : vector<8x256xf32>
    %185 = arith.negf %184 : vector<8x256xf32>
    %186 = math.exp %185 : vector<8x256xf32>
    %cst_61 = arith.constant 1.000000e+00 : f32
    %187 = vector.broadcast %cst_61 : f32 to vector<8x256xf32>
    %188 = arith.addf %187, %186 : vector<8x256xf32>
    %189 = arith.divf %187, %188 : vector<8x256xf32>
    %190 = vector.extract_strided_slice %169 {offsets = [0, 512], sizes = [8, 256], strides = [1, 1]} : vector<8x768xf32> to vector<8x256xf32>
    %191 = vector.extract_strided_slice %173 {offsets = [0, 512], sizes = [8, 256], strides = [1, 1]} : vector<8x768xf32> to vector<8x256xf32>
    %192 = arith.mulf %181, %191 : vector<8x256xf32>
    %193 = arith.addf %190, %192 : vector<8x256xf32>
    %194 = math.tanh %193 : vector<8x256xf32>
    %cst_62 = arith.constant 1.000000e+00 : f32
    %195 = vector.broadcast %cst_62 : f32 to vector<8x256xf32>
    %196 = arith.subf %195, %189 : vector<8x256xf32>
    %197 = arith.mulf %196, %194 : vector<8x256xf32>
    %198 = arith.mulf %189, %167 : vector<8x256xf32>
    %199 = arith.addf %197, %198 : vector<8x256xf32>
    %c40_63 = arith.constant 40 : index
    %c0_64 = arith.constant 0 : index
    %200 = vector.load %arg5[%c40_63, %c0_64] : memref<64x256xf32, #tpu.memory_space<vmem>>, vector<8x256xf32>
    tpu.vector_store %arg5[%c40_63, %c0_64], %199 {strides = array<i32>} : memref<64x256xf32, #tpu.memory_space<vmem>>, vector<8x256xf32>,
    %c48 = arith.constant 48 : index
    %c0_65 = arith.constant 0 : index
    %201 = vector.load %arg6[%c48, %c0_65] : memref<64x768xf32, #tpu.memory_space<vmem>>, vector<8x768xf32>
    %c0_66 = arith.constant 0 : index
    %c0_67 = arith.constant 0 : index
    %202 = vector.load %arg2[%c0_66, %c0_67] : memref<256x768xf32, #tpu.memory_space<vmem>>, vector<256x768xf32>
    %cst_68 = arith.constant dense<0.000000e+00> : vector<8x768xf32>
    %203 = tpu.matmul %199, %202, %cst_68 {dimension_numbers = #tpu.dot_dimension_numbers<[1], [0], [0], [1], [0, 0, 1, 1], [], []>} : vector<8x256xf32>, vector<256x768xf32>, vector<8x768xf32> -> vector<8x768xf32>
    %204 = vector.broadcast %7 : vector<1x768xf32> to vector<8x768xf32>
    %205 = arith.addf %203, %204 : vector<8x768xf32>
    %206 = vector.extract_strided_slice %201 {offsets = [0, 0], sizes = [8, 256], strides = [1, 1]} : vector<8x768xf32> to vector<8x256xf32>
    %207 = vector.extract_strided_slice %205 {offsets = [0, 0], sizes = [8, 256], strides = [1, 1]} : vector<8x768xf32> to vector<8x256xf32>
    %208 = arith.addf %206, %207 : vector<8x256xf32>
    %209 = arith.negf %208 : vector<8x256xf32>
    %210 = math.exp %209 : vector<8x256xf32>
    %cst_69 = arith.constant 1.000000e+00 : f32
    %211 = vector.broadcast %cst_69 : f32 to vector<8x256xf32>
    %212 = arith.addf %211, %210 : vector<8x256xf32>
    %213 = arith.divf %211, %212 : vector<8x256xf32>
    %214 = vector.extract_strided_slice %201 {offsets = [0, 256], sizes = [8, 256], strides = [1, 1]} : vector<8x768xf32> to vector<8x256xf32>
    %215 = vector.extract_strided_slice %205 {offsets = [0, 256], sizes = [8, 256], strides = [1, 1]} : vector<8x768xf32> to vector<8x256xf32>
    %216 = arith.addf %214, %215 : vector<8x256xf32>
    %217 = arith.negf %216 : vector<8x256xf32>
    %218 = math.exp %217 : vector<8x256xf32>
    %cst_70 = arith.constant 1.000000e+00 : f32
    %219 = vector.broadcast %cst_70 : f32 to vector<8x256xf32>
    %220 = arith.addf %219, %218 : vector<8x256xf32>
    %221 = arith.divf %219, %220 : vector<8x256xf32>
    %222 = vector.extract_strided_slice %201 {offsets = [0, 512], sizes = [8, 256], strides = [1, 1]} : vector<8x768xf32> to vector<8x256xf32>
    %223 = vector.extract_strided_slice %205 {offsets = [0, 512], sizes = [8, 256], strides = [1, 1]} : vector<8x768xf32> to vector<8x256xf32>
    %224 = arith.mulf %213, %223 : vector<8x256xf32>
    %225 = arith.addf %222, %224 : vector<8x256xf32>
    %226 = math.tanh %225 : vector<8x256xf32>
    %cst_71 = arith.constant 1.000000e+00 : f32
    %227 = vector.broadcast %cst_71 : f32 to vector<8x256xf32>
    %228 = arith.subf %227, %221 : vector<8x256xf32>
    %229 = arith.mulf %228, %226 : vector<8x256xf32>
    %230 = arith.mulf %221, %199 : vector<8x256xf32>
    %231 = arith.addf %229, %230 : vector<8x256xf32>
    %c48_72 = arith.constant 48 : index
    %c0_73 = arith.constant 0 : index
    %232 = vector.load %arg5[%c48_72, %c0_73] : memref<64x256xf32, #tpu.memory_space<vmem>>, vector<8x256xf32>
    tpu.vector_store %arg5[%c48_72, %c0_73], %231 {strides = array<i32>} : memref<64x256xf32, #tpu.memory_space<vmem>>, vector<8x256xf32>,
    %c56 = arith.constant 56 : index
    %c0_74 = arith.constant 0 : index
    %233 = vector.load %arg6[%c56, %c0_74] : memref<64x768xf32, #tpu.memory_space<vmem>>, vector<8x768xf32>
    %c0_75 = arith.constant 0 : index
    %c0_76 = arith.constant 0 : index
    %234 = vector.load %arg2[%c0_75, %c0_76] : memref<256x768xf32, #tpu.memory_space<vmem>>, vector<256x768xf32>
    %cst_77 = arith.constant dense<0.000000e+00> : vector<8x768xf32>
    %235 = tpu.matmul %231, %234, %cst_77 {dimension_numbers = #tpu.dot_dimension_numbers<[1], [0], [0], [1], [0, 0, 1, 1], [], []>} : vector<8x256xf32>, vector<256x768xf32>, vector<8x768xf32> -> vector<8x768xf32>
    %236 = vector.broadcast %7 : vector<1x768xf32> to vector<8x768xf32>
    %237 = arith.addf %235, %236 : vector<8x768xf32>
    %238 = vector.extract_strided_slice %233 {offsets = [0, 0], sizes = [8, 256], strides = [1, 1]} : vector<8x768xf32> to vector<8x256xf32>
    %239 = vector.extract_strided_slice %237 {offsets = [0, 0], sizes = [8, 256], strides = [1, 1]} : vector<8x768xf32> to vector<8x256xf32>
    %240 = arith.addf %238, %239 : vector<8x256xf32>
    %241 = arith.negf %240 : vector<8x256xf32>
    %242 = math.exp %241 : vector<8x256xf32>
    %cst_78 = arith.constant 1.000000e+00 : f32
    %243 = vector.broadcast %cst_78 : f32 to vector<8x256xf32>
    %244 = arith.addf %243, %242 : vector<8x256xf32>
    %245 = arith.divf %243, %244 : vector<8x256xf32>
    %246 = vector.extract_strided_slice %233 {offsets = [0, 256], sizes = [8, 256], strides = [1, 1]} : vector<8x768xf32> to vector<8x256xf32>
    %247 = vector.extract_strided_slice %237 {offsets = [0, 256], sizes = [8, 256], strides = [1, 1]} : vector<8x768xf32> to vector<8x256xf32>
    %248 = arith.addf %246, %247 : vector<8x256xf32>
    %249 = arith.negf %248 : vector<8x256xf32>
    %250 = math.exp %249 : vector<8x256xf32>
    %cst_79 = arith.constant 1.000000e+00 : f32
    %251 = vector.broadcast %cst_79 : f32 to vector<8x256xf32>
    %252 = arith.addf %251, %250 : vector<8x256xf32>
    %253 = arith.divf %251, %252 : vector<8x256xf32>
    %254 = vector.extract_strided_slice %233 {offsets = [0, 512], sizes = [8, 256], strides = [1, 1]} : vector<8x768xf32> to vector<8x256xf32>
    %255 = vector.extract_strided_slice %237 {offsets = [0, 512], sizes = [8, 256], strides = [1, 1]} : vector<8x768xf32> to vector<8x256xf32>
    %256 = arith.mulf %245, %255 : vector<8x256xf32>
    %257 = arith.addf %254, %256 : vector<8x256xf32>
    %258 = math.tanh %257 : vector<8x256xf32>
    %cst_80 = arith.constant 1.000000e+00 : f32
    %259 = vector.broadcast %cst_80 : f32 to vector<8x256xf32>
    %260 = arith.subf %259, %253 : vector<8x256xf32>
    %261 = arith.mulf %260, %258 : vector<8x256xf32>
    %262 = arith.mulf %253, %231 : vector<8x256xf32>
    %263 = arith.addf %261, %262 : vector<8x256xf32>
    %c56_81 = arith.constant 56 : index
    %c0_82 = arith.constant 0 : index
    %264 = vector.load %arg5[%c56_81, %c0_82] : memref<64x256xf32, #tpu.memory_space<vmem>>, vector<8x256xf32>
    tpu.vector_store %arg5[%c56_81, %c0_82], %263 {strides = array<i32>} : memref<64x256xf32, #tpu.memory_space<vmem>>, vector<8x256xf32>,
    return
  }
}

</mosaic_0001>

<llo_original>
// kernel: tpu_custom_call.1
$region0: #{tpu_custom_call.1}
  #allocation0 [shape = 'u32[]', space=smem, size = 0x4, offset = 0x4, fixed_abs, tag = 'smem constant byte address 0x4 - core index']
  #allocation1 [shape = 'u32[144,128]{1,0:T(1,128)}', space=vmem, size = 0x12000, scoped, tag = 'internal scratch']
  #allocation2 [shape = 'f32[64,768]{1,0:T(8,128)}', space=vmem, size = 0x30000, scoped, tag = 'scratch operand']
  %s0 = inlined_call_operand.hbm [shape: f32[64,64], index: 0, kind: input, shape index: {}]
  %s1 = inlined_call_operand.hbm [shape: f32[64,768], index: 1, kind: input, shape index: {}]
  %s2 = inlined_call_operand.hbm [shape: f32[256,768], index: 2, kind: input, shape index: {}]
  %s3 = inlined_call_operand.vmem [shape: f32[1,768], index: 3, kind: input, shape index: {}]
  %s4 = inlined_call_operand.vmem [shape: f32[1,768], index: 4, kind: input, shape index: {}]
  %s5 = inlined_call_operand.hbm [shape: f32[64,256], index: 5, kind: output, shape index: {}]
  %s6 = sld [smem:[#allocation0]]
  $region42: #{tpu_custom_call.1} parent=0
    _
  %s8 = ssub.s32 1, %s6
  %s9 = scalar_select 0, %s8, %s6
  $region1: #{tpu_custom_call.1} parent=0
    #allocation3 [shape = 'u8[32768]{0}', space=vmem, size = 0x8000, scoped, tag = 'input window, operand 0, single buffered']
    #allocation4 [shape = 's32[1]{0}', space=sflag, size = 0x4, scoped, tag = 'scoped memory for tpu_custom_call.1']
    #allocation5 [shape = 's32[1]{0}', space=sflag, size = 0x4, scoped, tag = 'scoped memory for tpu_custom_call.1']
    #allocation6 [shape = 'u8[196608]{0}', space=vmem, size = 0x30000, scoped, tag = 'input window, operand 1, single buffered']
    #allocation7 [shape = 's32[1]{0}', space=sflag, size = 0x4, scoped, tag = 'scoped memory for tpu_custom_call.1']
    #allocation8 [shape = 'u8[786432]{0}', space=vmem, size = 0xc0000, scoped, tag = 'input window, operand 2, single buffered']
    #allocation9 [shape = 'u8[65536]{0}', space=vmem, size = 0x10000, scoped, tag = 'output window, operand 0, single buffered']
    %10 = vsyncpa [#allocation4], 0
    %11 = vsyncpa [#allocation7], 0
    %12 = vsyncpa [#allocation5], 0
    // Predicated region
    $region2: #{tpu_custom_call.1} parent=1 // pred_check
      _
    $region3: #{tpu_custom_call.1} parent=1 // pred_check_branch
      %14 = sbr.rel (0) target = $region5
    $region4: #{tpu_custom_call.1} parent=1 // pred_region
      %s16 = ssub.s32 1024, 1024
      %17 = vsyncadd [#allocation4], %s16
      %s18 = sshll.u32 [#allocation3], 4
      %s19 = int_to_ptr.vmem [resolvable:$true] %s18
      %24 = dma.hbm_to_vmem [thread:$0]  %s0, 1024, %s19, [#allocation4], 128, 128, 8
    $region5: #{tpu_custom_call.1} parent=1 // pred_fallthru
      _
    // Predicated region
    $region6: #{tpu_custom_call.1} parent=1 // pred_check
      _
    $region7: #{tpu_custom_call.1} parent=1 // pred_check_branch
      %26 = sbr.rel (0) target = $region9
    $region8: #{tpu_custom_call.1} parent=1 // pred_region
      %s28 = ssub.s32 6144, 6144
      %29 = vsyncadd [#allocation7], %s28
      %s30 = sshll.u32 [#allocation6], 4
      %s31 = int_to_ptr.vmem [resolvable:$true] %s30
      %36 = dma.hbm_to_vmem [thread:$0]  %s1, 6144, %s31, [#allocation7], 768, 768, 48
    $region9: #{tpu_custom_call.1} parent=1 // pred_fallthru
      _
    // Predicated region
    $region10: #{tpu_custom_call.1} parent=1 // pred_check
      _
    $region11: #{tpu_custom_call.1} parent=1 // pred_check_branch
      %38 = sbr.rel (0) target = $region13
    $region12: #{tpu_custom_call.1} parent=1 // pred_region
      %s40 = ssub.s32 24576, 24576
      %41 = vsyncadd [#allocation7], %s40
      %s42 = sshll.u32 [#allocation8], 4
      %s43 = int_to_ptr.vmem [resolvable:$true] %s42
      %48 = dma.hbm_to_vmem [thread:$0]  %s2, 24576, %s43, [#allocation7], 768, 768, 48
    $region13: #{tpu_custom_call.1} parent=1 // pred_fallthru
      _
    // Predicated region
    $region14: #{tpu_custom_call.1} parent=1 // pred_check
      _
    $region15: #{tpu_custom_call.1} parent=1 // pred_check_branch
      %50 = sbr.rel (0) target = $region17
    $region16: #{tpu_custom_call.1} parent=1 // pred_region
      _
    $region17: #{tpu_custom_call.1} parent=1 // pred_fallthru
      _
    // Predicated region
    $region18: #{tpu_custom_call.1} parent=1 // pred_check
      _
    $region19: #{tpu_custom_call.1} parent=1 // pred_check_branch
      %52 = sbr.rel (0) target = $region21
    $region20: #{tpu_custom_call.1} parent=1 // pred_region
      _
    $region21: #{tpu_custom_call.1} parent=1 // pred_fallthru
      _
    // Predicated region
    $region22: #{tpu_custom_call.1} parent=1 // pred_check
      _
    $region23: #{tpu_custom_call.1} parent=1 // pred_check_branch
      %54 = sbr.rel (0) target = $region25
    $region24: #{tpu_custom_call.1} parent=1 // pred_region
      %55 = dma.done [#allocation4], 1024
    $region25: #{tpu_custom_call.1} parent=1 // pred_fallthru
      _
    // Predicated region
    $region26: #{tpu_custom_call.1} parent=1 // pred_check
      _
    $region27: #{tpu_custom_call.1} parent=1 // pred_check_branch
      %57 = sbr.rel (0) target = $region29
    $region28: #{tpu_custom_call.1} parent=1 // pred_region
      %58 = dma.done [#allocation7], 6144
    $region29: #{tpu_custom_call.1} parent=1 // pred_fallthru
      _
    // Predicated region
    $region30: #{tpu_custom_call.1} parent=1 // pred_check
      _
    $region31: #{tpu_custom_call.1} parent=1 // pred_check_branch
      %60 = sbr.rel (0) target = $region33
    $region32: #{tpu_custom_call.1} parent=1 // pred_region
      %61 = dma.done [#allocation7], 24576
    $region33: #{tpu_custom_call.1} parent=1 // pred_fallthru
      _
    %v62 = vld [vmem:[#allocation3] sm:$0xff]
    %v63 = vld [vmem:[#allocation3 + $0x8] sm:$0xff]
    %v64 = vld [vmem:[#allocation3 + $0x10] sm:$0xff]
    %v65 = vld [vmem:[#allocation3 + $0x18] sm:$0xff]
    %v66 = vld [vmem:[#allocation3 + $0x20] sm:$0xff]
    %v67 = vld [vmem:[#allocation3 + $0x28] sm:$0xff]
    %v68 = vld [vmem:[#allocation3 + $0x30] sm:$0xff]
    %v69 = vld [vmem:[#allocation3 + $0x38] sm:$0xff]
    %v70 = vld [vmem:[#allocation6] sm:$0xff]
    %v71 = vld [vmem:[#allocation6 + $0x8] sm:$0xff]
    %v72 = vld [vmem:[#allocation6 + $0x10] sm:$0xff]
    %v73 = vld [vmem:[#allocation6 + $0x18] sm:$0xff]
    %v74 = vld [vmem:[#allocation6 + $0x20] sm:$0xff]
    %v75 = vld [vmem:[#allocation6 + $0x28] sm:$0xff]
    %v76 = vld [vmem:[#allocation6 + $0x30] sm:$0xff]
    %v77 = vld [vmem:[#allocation6 + $0x38] sm:$0xff]
    %v78 = vld [vmem:[#allocation6 + $0x40] sm:$0xff]
    %v79 = vld [vmem:[#allocation6 + $0x48] sm:$0xff]
    %v80 = vld [vmem:[#allocation6 + $0x50] sm:$0xff]
    %v81 = vld [vmem:[#allocation6 + $0x58] sm:$0xff]
    %v82 = vld [vmem:[#allocation6 + $0x60] sm:$0xff]
    %v83 = vld [vmem:[#allocation6 + $0x68] sm:$0xff]
    %v84 = vld [vmem:[#allocation6 + $0x70] sm:$0xff]
    %v85 = vld [vmem:[#allocation6 + $0x78] sm:$0xff]
    %v86 = vld [vmem:[#allocation6 + $0x80] sm:$0xff]
    %v87 = vld [vmem:[#allocation6 + $0x88] sm:$0xff]
    %v88 = vld [vmem:[#allocation6 + $0x90] sm:$0xff]
    %v89 = vld [vmem:[#allocation6 + $0x98] sm:$0xff]
    %v90 = vld [vmem:[#allocation6 + $0xa0] sm:$0xff]
    %v91 = vld [vmem:[#allocation6 + $0xa8] sm:$0xff]
    %v92 = vld [vmem:[#allocation6 + $0xb0] sm:$0xff]
    %v93 = vld [vmem:[#allocation6 + $0xb8] sm:$0xff]
    %v94 = vld [vmem:[#allocation6 + $0xc0] sm:$0xff]
    %v95 = vld [vmem:[#allocation6 + $0xc8] sm:$0xff]
    %v96 = vld [vmem:[#allocation6 + $0xd0] sm:$0xff]
    %v97 = vld [vmem:[#allocation6 + $0xd8] sm:$0xff]
    %v98 = vld [vmem:[#allocation6 + $0xe0] sm:$0xff]
    %v99 = vld [vmem:[#allocation6 + $0xe8] sm:$0xff]
    %v100 = vld [vmem:[#allocation6 + $0xf0] sm:$0xff]
    %v101 = vld [vmem:[#allocation6 + $0xf8] sm:$0xff]
    %v102 = vld [vmem:[#allocation6 + $0x100] sm:$0xff]
    %v103 = vld [vmem:[#allocation6 + $0x108] sm:$0xff]
    %v104 = vld [vmem:[#allocation6 + $0x110] sm:$0xff]
    %v105 = vld [vmem:[#allocation6 + $0x118] sm:$0xff]
    %v106 = vld [vmem:[#allocation6 + $0x120] sm:$0xff]
    %v107 = vld [vmem:[#allocation6 + $0x128] sm:$0xff]
    %v108 = vld [vmem:[#allocation6 + $0x130] sm:$0xff]
    %v109 = vld [vmem:[#allocation6 + $0x138] sm:$0xff]
    %v110 = vld [vmem:[#allocation6 + $0x140] sm:$0xff]
    %v111 = vld [vmem:[#allocation6 + $0x148] sm:$0xff]
    %v112 = vld [vmem:[#allocation6 + $0x150] sm:$0xff]
    %v113 = vld [vmem:[#allocation6 + $0x158] sm:$0xff]
    %v114 = vld [vmem:[#allocation6 + $0x160] sm:$0xff]
    %v115 = vld [vmem:[#allocation6 + $0x168] sm:$0xff]
    %v116 = vld [vmem:[#allocation6 + $0x170] sm:$0xff]
    %v117 = vld [vmem:[#allocation6 + $0x178] sm:$0xff]
    %v118 = vld [vmem:[%s3] sm:$0x3f]
    %v120 = vlaneseq
    %v121 = vshrl.u32 %v120, 7
    %v122 = vsub.s32 0, %v121
    %v123 = vrot.slane %v118, %v122
    %v124 = vlaneseq
    %v125 = vshrl.u32 %v124, 7
    %v126 = vsub.s32 1, %v125
    %v127 = vrot.slane %v118, %v126
    %v128 = vlaneseq
    %v129 = vshrl.u32 %v128, 7
    %v130 = vsub.s32 2, %v129
    %v131 = vrot.slane %v118, %v130
    %v132 = vlaneseq
    %v133 = vshrl.u32 %v132, 7
    %v134 = vsub.s32 3, %v133
    %v135 = vrot.slane %v118, %v134
    %v136 = vlaneseq
    %v137 = vshrl.u32 %v136, 7
    %v138 = vsub.s32 4, %v137
    %v139 = vrot.slane %v118, %v138
    %v140 = vlaneseq
    %v141 = vshrl.u32 %v140, 7
    %v142 = vsub.s32 5, %v141
    %v143 = vrot.slane %v118, %v142
    %vm150 = vcmask 523264
    %v152 = vsel %vm150, %v62, 0
    %v155 = vsel %vm150, %v63, 0
    %v158 = vsel %vm150, %v64, 0
    %v161 = vsel %vm150, %v65, 0
    %v164 = vsel %vm150, %v66, 0
    %v167 = vsel %vm150, %v67, 0
    %v170 = vsel %vm150, %v68, 0
    %v173 = vsel %vm150, %v69, 0
    %175 = vmatprep.subr.mxu0 %v71
    %176 = vmatpush1.msra.mxu0 %v70
    %177 = vmatprep.subr.mxu0 %v77
    %178 = vmatpush1.msra.mxu0 %v76
    %179 = vmatprep.subr.mxu0 %v83
    %180 = vmatpush1.msra.mxu0 %v82
    %181 = vmatprep.subr.mxu0 %v89
    %182 = vmatpush1.msra.mxu0 %v88
    %183 = vmatprep.subr.mxu0 %v95
    %184 = vmatpush1.msra.mxu0 %v94
    %185 = vmatprep.subr.mxu0 %v101
    %186 = vmatpush1.msra.mxu0 %v100
    %187 = vmatprep.subr.mxu0 %v107
    %188 = vmatpush1.msra.mxu0 %v106
    %189 = vmatprep.subr.mxu0 %v113
    %190 = vmatpush1.msra.mxu0 %v112
    %191 = vmatprep.subr.mxu0 0.0
    %192 = vmatpush1.msra.mxu0 0.0
    %193 = vmatprep.subr.mxu0 0.0
    %194 = vmatpush1.msra.mxu0 0.0
    %195 = vmatprep.subr.mxu0 0.0
    %196 = vmatpush1.msra.mxu0 0.0
    %197 = vmatprep.subr.mxu0 0.0
    %198 = vmatpush1.msra.mxu0 0.0
    %199 = vmatprep.subr.mxu0 0.0
    %200 = vmatpush1.msra.mxu0 0.0
    %201 = vmatprep.subr.mxu0 0.0
    %202 = vmatpush1.msra.mxu0 0.0
    %203 = vmatprep.subr.mxu0 0.0
    %204 = vmatpush1.msra.mxu0 0.0
    %205 = vmatprep.subr.mxu0 0.0
    %206 = vmatpush1.msra.mxu0 0.0
    %207 = vmatprep.subr.mxu0 0.0
    %208 = vmatpush1.msra.mxu0 0.0
    %209 = vmatprep.subr.mxu0 0.0
    %210 = vmatpush1.msra.mxu0 0.0
    %211 = vmatprep.subr.mxu0 0.0
    %212 = vmatpush1.msra.mxu0 0.0
    %213 = vmatprep.subr.mxu0 0.0
    %214 = vmatpush1.msra.mxu0 0.0
    %215 = vmatprep.subr.mxu0 0.0
    %216 = vmatpush1.msra.mxu0 0.0
    %217 = vmatprep.subr.mxu0 0.0
    %218 = vmatpush1.msra.mxu0 0.0
    %219 = vmatprep.subr.mxu0 0.0
    %220 = vmatpush1.msra.mxu0 0.0
    %221 = vmatprep.subr.mxu0 0.0
    %222 = vmatpush1.msra.mxu0 0.0
    %223 = vmatprep.subr.mxu0 0.0
    %224 = vmatpush1.msra.mxu0 0.0
    %225 = vmatprep.subr.mxu0 0.0
    %226 = vmatpush1.msra.mxu0 0.0
    %227 = vmatprep.subr.mxu0 0.0
    %228 = vmatpush1.msra.mxu0 0.0
    %229 = vmatprep.subr.mxu0 0.0
    %230 = vmatpush1.msra.mxu0 0.0
    %231 = vmatprep.subr.mxu0 0.0
    %232 = vmatpush1.msra.mxu0 0.0
    %233 = vmatprep.subr.mxu0 0.0
    %234 = vmatpush1.msra.mxu0 0.0
    %235 = vmatprep.subr.mxu0 0.0
    %236 = vmatpush1.msra.mxu0 0.0
    %237 = vmatprep.subr.mxu0 0.0
    %238 = vmatpush1.msra.mxu0 0.0
    %239 = vmatprep.mubr.f32.mxu0 0.0
    %240 = vmatmul.mubr.f32.gmra.mrb[0].mxu0 %v152
    %v241 = vpop.f32.mrb[0].mxu0
    %v242 = vadd.f32 %v123, %v241
    %v243 = vpop.f32.mrb[0].mxu0
    %v244 = vadd.f32 %v127, %v243
    %245 = vmatprep.mubr.f32.mxu0 0.0
    %246 = vmatmul.mubr.f32.gmra.mrb[0].mxu0 %v155
    %v247 = vpop.f32.mrb[0].mxu0
    %v248 = vadd.f32 %v123, %v247
    %v249 = vpop.f32.mrb[0].mxu0
    %v250 = vadd.f32 %v127, %v249
    %251 = vmatprep.mubr.f32.mxu0 0.0
    %252 = vmatmul.mubr.f32.gmra.mrb[0].mxu0 %v158
    %v253 = vpop.f32.mrb[0].mxu0
    %v254 = vadd.f32 %v123, %v253
    %v255 = vpop.f32.mrb[0].mxu0
    %v256 = vadd.f32 %v127, %v255
    %257 = vmatprep.mubr.f32.mxu0 0.0
    %258 = vmatmul.mubr.f32.gmra.mrb[0].mxu0 %v161
    %v259 = vpop.f32.mrb[0].mxu0
    %v260 = vadd.f32 %v123, %v259
    %v261 = vpop.f32.mrb[0].mxu0
    %v262 = vadd.f32 %v127, %v261
    %263 = vmatprep.mubr.f32.mxu0 0.0
    %264 = vmatmul.mubr.f32.gmra.mrb[0].mxu0 %v164
    %v265 = vpop.f32.mrb[0].mxu0
    %v266 = vadd.f32 %v123, %v265
    %v267 = vpop.f32.mrb[0].mxu0
    %v268 = vadd.f32 %v127, %v267
    %269 = vmatprep.mubr.f32.mxu0 0.0
    %270 = vmatmul.mubr.f32.gmra.mrb[0].mxu0 %v167
    %v271 = vpop.f32.mrb[0].mxu0
    %v272 = vadd.f32 %v123, %v271
    %v273 = vpop.f32.mrb[0].mxu0
    %v274 = vadd.f32 %v127, %v273
    %275 = vmatprep.mubr.f32.mxu0 0.0
    %276 = vmatmul.mubr.f32.gmra.mrb[0].mxu0 %v170
    %v277 = vpop.f32.mrb[0].mxu0
    %v278 = vadd.f32 %v123, %v277
    %v279 = vpop.f32.mrb[0].mxu0
    %v280 = vadd.f32 %v127, %v279
    %281 = vmatprep.mubr.f32.mxu0 0.0
    %282 = vmatmul.mubr.f32.gmra.mrb[0].mxu0 %v173
    %v283 = vpop.f32.mrb[0].mxu0
    %v284 = vadd.f32 %v123, %v283
    %v285 = vpop.f32.mrb[0].mxu0
    %v286 = vadd.f32 %v127, %v285
    %287 = vdwg.mxu0
    %288 = vmatprep.subr.mxu0 %v73
    %289 = vmatpush1.msra.mxu0 %v72
    %290 = vmatprep.subr.mxu0 %v79
    %291 = vmatpush1.msra.mxu0 %v78
    %292 = vmatprep.subr.mxu0 %v85
    %293 = vmatpush1.msra.mxu0 %v84
    %294 = vmatprep.subr.mxu0 %v91
    %295 = vmatpush1.msra.mxu0 %v90
    %296 = vmatprep.subr.mxu0 %v97
    %297 = vmatpush1.msra.mxu0 %v96
    %298 = vmatprep.subr.mxu0 %v103
    %299 = vmatpush1.msra.mxu0 %v102
    %300 = vmatprep.subr.mxu0 %v109
    %301 = vmatpush1.msra.mxu0 %v108
    %302 = vmatprep.subr.mxu0 %v115
    %303 = vmatpush1.msra.mxu0 %v114
    %304 = vmatprep.subr.mxu0 0.0
    %305 = vmatpush1.msra.mxu0 0.0
    %306 = vmatprep.subr.mxu0 0.0
    %307 = vmatpush1.msra.mxu0 0.0
    %308 = vmatprep.subr.mxu0 0.0
    %309 = vmatpush1.msra.mxu0 0.0
    %310 = vmatprep.subr.mxu0 0.0
    %311 = vmatpush1.msra.mxu0 0.0
    %312 = vmatprep.subr.mxu0 0.0
    %313 = vmatpush1.msra.mxu0 0.0
    %314 = vmatprep.subr.mxu0 0.0
    %315 = vmatpush1.msra.mxu0 0.0
    %316 = vmatprep.subr.mxu0 0.0
    %317 = vmatpush1.msra.mxu0 0.0
    %318 = vmatprep.subr.mxu0 0.0
    %319 = vmatpush1.msra.mxu0 0.0
    %320 = vmatprep.subr.mxu0 0.0
    %321 = vmatpush1.msra.mxu0 0.0
    %322 = vmatprep.subr.mxu0 0.0
    %323 = vmatpush1.msra.mxu0 0.0
    %324 = vmatprep.subr.mxu0 0.0
    %325 = vmatpush1.msra.mxu0 0.0
    %326 = vmatprep.subr.mxu0 0.0
    %327 = vmatpush1.msra.mxu0 0.0
    %328 = vmatprep.subr.mxu0 0.0
    %329 = vmatpush1.msra.mxu0 0.0
    %330 = vmatprep.subr.mxu0 0.0
    %331 = vmatpush1.msra.mxu0 0.0
    %332 = vmatprep.subr.mxu0 0.0
    %333 = vmatpush1.msra.mxu0 0.0
    %334 = vmatprep.subr.mxu0 0.0
    %335 = vmatpush1.msra.mxu0 0.0
    %336 = vmatprep.subr.mxu0 0.0
    %337 = vmatpush1.msra.mxu0 0.0
    %338 = vmatprep.subr.mxu0 0.0
    %339 = vmatpush1.msra.mxu0 0.0
    %340 = vmatprep.subr.mxu0 0.0
    %341 = vmatpush1.msra.mxu0 0.0
    %342 = vmatprep.subr.mxu0 0.0
    %343 = vmatpush1.msra.mxu0 0.0
    %344 = vmatprep.subr.mxu0 0.0
    %345 = vmatpush1.msra.mxu0 0.0
    %346 = vmatprep.subr.mxu0 0.0
    %347 = vmatpush1.msra.mxu0 0.0
    %348 = vmatprep.subr.mxu0 0.0
    %349 = vmatpush1.msra.mxu0 0.0
    %350 = vmatprep.subr.mxu0 0.0
    %351 = vmatpush1.msra.mxu0 0.0
    %352 = vmatprep.mubr.f32.mxu0 0.0
    %353 = vmatmul.mubr.f32.gmra.mrb[0].mxu0 %v152
    %v354 = vpop.f32.mrb[0].mxu0
    %v355 = vadd.f32 %v131, %v354
    %v356 = vpop.f32.mrb[0].mxu0
    %v357 = vadd.f32 %v135, %v356
    %358 = vmatprep.mubr.f32.mxu0 0.0
    %359 = vmatmul.mubr.f32.gmra.mrb[0].mxu0 %v155
    %v360 = vpop.f32.mrb[0].mxu0
    %v361 = vadd.f32 %v131, %v360
    %v362 = vpop.f32.mrb[0].mxu0
    %v363 = vadd.f32 %v135, %v362
    %364 = vmatprep.mubr.f32.mxu0 0.0
    %365 = vmatmul.mubr.f32.gmra.mrb[0].mxu0 %v158
    %v366 = vpop.f32.mrb[0].mxu0
    %v367 = vadd.f32 %v131, %v366
    %v368 = vpop.f32.mrb[0].mxu0
    %v369 = vadd.f32 %v135, %v368
    %370 = vmatprep.mubr.f32.mxu0 0.0
    %371 = vmatmul.mubr.f32.gmra.mrb[0].mxu0 %v161
    %v372 = vpop.f32.mrb[0].mxu0
    %v373 = vadd.f32 %v131, %v372
    %v374 = vpop.f32.mrb[0].mxu0
    %v375 = vadd.f32 %v135, %v374
    %376 = vmatprep.mubr.f32.mxu0 0.0
    %377 = vmatmul.mubr.f32.gmra.mrb[0].mxu0 %v164
    %v378 = vpop.f32.mrb[0].mxu0
    %v379 = vadd.f32 %v131, %v378
    %v380 = vpop.f32.mrb[0].mxu0
    %v381 = vadd.f32 %v135, %v380
    %382 = vmatprep.mubr.f32.mxu0 0.0
    %383 = vmatmul.mubr.f32.gmra.mrb[0].mxu0 %v167
    %v384 = vpop.f32.mrb[0].mxu0
    %v385 = vadd.f32 %v131, %v384
    %v386 = vpop.f32.mrb[0].mxu0
    %v387 = vadd.f32 %v135, %v386
    %388 = vmatprep.mubr.f32.mxu0 0.0
    %389 = vmatmul.mubr.f32.gmra.mrb[0].mxu0 %v170
    %v390 = vpop.f32.mrb[0].mxu0
    %v391 = vadd.f32 %v131, %v390
    %v392 = vpop.f32.mrb[0].mxu0
    %v393 = vadd.f32 %v135, %v392
    %394 = vmatprep.mubr.f32.mxu0 0.0
    %395 = vmatmul.mubr.f32.gmra.mrb[0].mxu0 %v173
    %v396 = vpop.f32.mrb[0].mxu0
    %v397 = vadd.f32 %v131, %v396
    %v398 = vpop.f32.mrb[0].mxu0
    %v399 = vadd.f32 %v135, %v398
    %400 = vdwg.mxu0
    %401 = vmatprep.subr.mxu0 %v75
    %402 = vmatpush1.msra.mxu0 %v74
    %403 = vmatprep.subr.mxu0 %v81
    %404 = vmatpush1.msra.mxu0 %v80
    %405 = vmatprep.subr.mxu0 %v87
    %406 = vmatpush1.msra.mxu0 %v86
    %407 = vmatprep.subr.mxu0 %v93
    %408 = vmatpush1.msra.mxu0 %v92
    %409 = vmatprep.subr.mxu0 %v99
    %410 = vmatpush1.msra.mxu0 %v98
    %411 = vmatprep.subr.mxu0 %v105
    %412 = vmatpush1.msra.mxu0 %v104
    %413 = vmatprep.subr.mxu0 %v111
    %414 = vmatpush1.msra.mxu0 %v110
    %415 = vmatprep.subr.mxu0 %v117
    %416 = vmatpush1.msra.mxu0 %v116
    %417 = vmatprep.subr.mxu0 0.0
    %418 = vmatpush1.msra.mxu0 0.0
    %419 = vmatprep.subr.mxu0 0.0
    %420 = vmatpush1.msra.mxu0 0.0
    %421 = vmatprep.subr.mxu0 0.0
    %422 = vmatpush1.msra.mxu0 0.0
    %423 = vmatprep.subr.mxu0 0.0
    %424 = vmatpush1.msra.mxu0 0.0
    %425 = vmatprep.subr.mxu0 0.0
    %426 = vmatpush1.msra.mxu0 0.0
    %427 = vmatprep.subr.mxu0 0.0
    %428 = vmatpush1.msra.mxu0 0.0
    %429 = vmatprep.subr.mxu0 0.0
    %430 = vmatpush1.msra.mxu0 0.0
    %431 = vmatprep.subr.mxu0 0.0
    %432 = vmatpush1.msra.mxu0 0.0
    %433 = vmatprep.subr.mxu0 0.0
    %434 = vmatpush1.msra.mxu0 0.0
    %435 = vmatprep.subr.mxu0 0.0
    %436 = vmatpush1.msra.mxu0 0.0
    %437 = vmatprep.subr.mxu0 0.0
    %438 = vmatpush1.msra.mxu0 0.0
    %439 = vmatprep.subr.mxu0 0.0
    %440 = vmatpush1.msra.mxu0 0.0
    %441 = vmatprep.subr.mxu0 0.0
    %442 = vmatpush1.msra.mxu0 0.0
    %443 = vmatprep.subr.mxu0 0.0
    %444 = vmatpush1.msra.mxu0 0.0
    %445 = vmatprep.subr.mxu0 0.0
    %446 = vmatpush1.msra.mxu0 0.0
    %447 = vmatprep.subr.mxu0 0.0
    %448 = vmatpush1.msra.mxu0 0.0
    %449 = vmatprep.subr.mxu0 0.0
    %450 = vmatpush1.msra.mxu0 0.0
    %451 = vmatprep.subr.mxu0 0.0
    %452 = vmatpush1.msra.mxu0 0.0
    %453 = vmatprep.subr.mxu0 0.0
    %454 = vmatpush1.msra.mxu0 0.0
    %455 = vmatprep.subr.mxu0 0.0
    %456 = vmatpush1.msra.mxu0 0.0
    %457 = vmatprep.subr.mxu0 0.0
    %458 = vmatpush1.msra.mxu0 0.0
    %459 = vmatprep.subr.mxu0 0.0
    %460 = vmatpush1.msra.mxu0 0.0
    %461 = vmatprep.subr.mxu0 0.0
    %462 = vmatpush1.msra.mxu0 0.0
    %463 = vmatprep.subr.mxu0 0.0
    %464 = vmatpush1.msra.mxu0 0.0
    %465 = vmatprep.mubr.f32.mxu0 0.0
    %466 = vmatmul.mubr.f32.gmra.mrb[0].mxu0 %v152
    %v467 = vpop.f32.mrb[0].mxu0
    %v468 = vadd.f32 %v139, %v467
    %v469 = vpop.f32.mrb[0].mxu0
    %v470 = vadd.f32 %v143, %v469
    %471 = vmatprep.mubr.f32.mxu0 0.0
    %472 = vmatmul.mubr.f32.gmra.mrb[0].mxu0 %v155
    %v473 = vpop.f32.mrb[0].mxu0
    %v474 = vadd.f32 %v139, %v473
    %v475 = vpop.f32.mrb[0].mxu0
    %v476 = vadd.f32 %v143, %v475
    %477 = vmatprep.mubr.f32.mxu0 0.0
    %478 = vmatmul.mubr.f32.gmra.mrb[0].mxu0 %v158
    %v479 = vpop.f32.mrb[0].mxu0
    %v480 = vadd.f32 %v139, %v479
    %v481 = vpop.f32.mrb[0].mxu0
    %v482 = vadd.f32 %v143, %v481
    %483 = vmatprep.mubr.f32.mxu0 0.0
    %484 = vmatmul.mubr.f32.gmra.mrb[0].mxu0 %v161
    %v485 = vpop.f32.mrb[0].mxu0
    %v486 = vadd.f32 %v139, %v485
    %v487 = vpop.f32.mrb[0].mxu0
    %v488 = vadd.f32 %v143, %v487
    %489 = vmatprep.mubr.f32.mxu0 0.0
    %490 = vmatmul.mubr.f32.gmra.mrb[0].mxu0 %v164
    %v491 = vpop.f32.mrb[0].mxu0
    %v492 = vadd.f32 %v139, %v491
    %v493 = vpop.f32.mrb[0].mxu0
    %v494 = vadd.f32 %v143, %v493
    %495 = vmatprep.mubr.f32.mxu0 0.0
    %496 = vmatmul.mubr.f32.gmra.mrb[0].mxu0 %v167
    %v497 = vpop.f32.mrb[0].mxu0
    %v498 = vadd.f32 %v139, %v497
    %v499 = vpop.f32.mrb[0].mxu0
    %v500 = vadd.f32 %v143, %v499
    %501 = vmatprep.mubr.f32.mxu0 0.0
    %502 = vmatmul.mubr.f32.gmra.mrb[0].mxu0 %v170
    %v503 = vpop.f32.mrb[0].mxu0
    %v504 = vadd.f32 %v139, %v503
    %v505 = vpop.f32.mrb[0].mxu0
    %v506 = vadd.f32 %v143, %v505
    %507 = vmatprep.mubr.f32.mxu0 0.0
    %508 = vmatmul.mubr.f32.gmra.mrb[0].mxu0 %v173
    %v509 = vpop.f32.mrb[0].mxu0
    %v510 = vadd.f32 %v139, %v509
    %v511 = vpop.f32.mrb[0].mxu0
    %v512 = vadd.f32 %v143, %v511
    %513 = vdwg.mxu0
    %514 = vst [vmem:[#allocation2] sm:$0xff] %v242
    %515 = vst [vmem:[#allocation2 + $0x8] sm:$0xff] %v244
    %516 = vst [vmem:[#allocation2 + $0x10] sm:$0xff] %v355
    %517 = vst [vmem:[#allocation2 + $0x18] sm:$0xff] %v357
    %518 = vst [vmem:[#allocation2 + $0x20] sm:$0xff] %v468
    %519 = vst [vmem:[#allocation2 + $0x28] sm:$0xff] %v470
    %520 = vst [vmem:[#allocation2 + $0x30] sm:$0xff] %v248
    %521 = vst [vmem:[#allocation2 + $0x38] sm:$0xff] %v250
    %522 = vst [vmem:[#allocation2 + $0x40] sm:$0xff] %v361
    %523 = vst [vmem:[#allocation2 + $0x48] sm:$0xff] %v363
    %524 = vst [vmem:[#allocation2 + $0x50] sm:$0xff] %v474
    %525 = vst [vmem:[#allocation2 + $0x58] sm:$0xff] %v476
    %526 = vst [vmem:[#allocation2 + $0x60] sm:$0xff] %v254
    %527 = vst [vmem:[#allocation2 + $0x68] sm:$0xff] %v256
    %528 = vst [vmem:[#allocation2 + $0x70] sm:$0xff] %v367
    %529 = vst [vmem:[#allocation2 + $0x78] sm:$0xff] %v369
    %530 = vst [vmem:[#allocation2 + $0x80] sm:$0xff] %v480
    %531 = vst [vmem:[#allocation2 + $0x88] sm:$0xff] %v482
    %532 = vst [vmem:[#allocation2 + $0x90] sm:$0xff] %v260
    %533 = vst [vmem:[#allocation2 + $0x98] sm:$0xff] %v262
    %534 = vst [vmem:[#allocation2 + $0xa0] sm:$0xff] %v373
    %535 = vst [vmem:[#allocation2 + $0xa8] sm:$0xff] %v375
    %536 = vst [vmem:[#allocation2 + $0xb0] sm:$0xff] %v486
    %537 = vst [vmem:[#allocation2 + $0xb8] sm:$0xff] %v488
    %538 = vst [vmem:[#allocation2 + $0xc0] sm:$0xff] %v266
    %539 = vst [vmem:[#allocation2 + $0xc8] sm:$0xff] %v268
    %540 = vst [vmem:[#allocation2 + $0xd0] sm:$0xff] %v379
    %541 = vst [vmem:[#allocation2 + $0xd8] sm:$0xff] %v381
    %542 = vst [vmem:[#allocation2 + $0xe0] sm:$0xff] %v492
    %543 = vst [vmem:[#allocation2 + $0xe8] sm:$0xff] %v494
    %544 = vst [vmem:[#allocation2 + $0xf0] sm:$0xff] %v272
    %545 = vst [vmem:[#allocation2 + $0xf8] sm:$0xff] %v274
    %546 = vst [vmem:[#allocation2 + $0x100] sm:$0xff] %v385
    %547 = vst [vmem:[#allocation2 + $0x108] sm:$0xff] %v387
    %548 = vst [vmem:[#allocation2 + $0x110] sm:$0xff] %v498
    %549 = vst [vmem:[#allocation2 + $0x118] sm:$0xff] %v500
    %550 = vst [vmem:[#allocation2 + $0x120] sm:$0xff] %v278
    %551 = vst [vmem:[#allocation2 + $0x128] sm:$0xff] %v280
    %552 = vst [vmem:[#allocation2 + $0x130] sm:$0xff] %v391
    %553 = vst [vmem:[#allocation2 + $0x138] sm:$0xff] %v393
    %554 = vst [vmem:[#allocation2 + $0x140] sm:$0xff] %v504
    %555 = vst [vmem:[#allocation2 + $0x148] sm:$0xff] %v506
    %556 = vst [vmem:[#allocation2 + $0x150] sm:$0xff] %v284
    %557 = vst [vmem:[#allocation2 + $0x158] sm:$0xff] %v286
    %558 = vst [vmem:[#allocation2 + $0x160] sm:$0xff] %v397
    %559 = vst [vmem:[#allocation2 + $0x168] sm:$0xff] %v399
    %560 = vst [vmem:[#allocation2 + $0x170] sm:$0xff] %v510
    %561 = vst [vmem:[#allocation2 + $0x178] sm:$0xff] %v512
    %v562 = vld [vmem:[%s4] sm:$0x3f]
    %v563 = vld [vmem:[#allocation2] sm:$0xff]
    %v564 = vld [vmem:[#allocation2 + $0x8] sm:$0xff]
    %v565 = vld [vmem:[#allocation2 + $0x10] sm:$0xff]
    %v566 = vld [vmem:[#allocation2 + $0x18] sm:$0xff]
    %v567 = vld [vmem:[#allocation2 + $0x20] sm:$0xff]
    %v568 = vld [vmem:[#allocation2 + $0x28] sm:$0xff]
    %v569 = vld [vmem:[#allocation8] sm:$0xff]
    %v570 = vld [vmem:[#allocation8 + $0x8] sm:$0xff]
    %v571 = vld [vmem:[#allocation8 + $0x10] sm:$0xff]
    %v572 = vld [vmem:[#allocation8 + $0x18] sm:$0xff]
    %v573 = vld [vmem:[#allocation8 + $0x20] sm:$0xff]
    %v574 = vld [vmem:[#allocation8 + $0x28] sm:$0xff]
    %v575 = vld [vmem:[#allocation8 + $0x30] sm:$0xff]
    %v576 = vld [vmem:[#allocation8 + $0x38] sm:$0xff]
    %v577 = vld [vmem:[#allocation8 + $0x40] sm:$0xff]
    %v578 = vld [vmem:[#allocation8 + $0x48] sm:$0xff]
    %v579 = vld [vmem:[#allocation8 + $0x50] sm:$0xff]
    %v580 = vld [vmem:[#allocation8 + $0x58] sm:$0xff]
    %v581 = vld [vmem:[#allocation8 + $0x60] sm:$0xff]
    %v582 = vld [vmem:[#allocation8 + $0x68] sm:$0xff]
    %v583 = vld [vmem:[#allocation8 + $0x70] sm:$0xff]
    %v584 = vld [vmem:[#allocation8 + $0x78] sm:$0xff]
    %v585 = vld [vmem:[#allocation8 + $0x80] sm:$0xff]
    %v586 = vld [vmem:[#allocation8 + $0x88] sm:$0xff]
    %v587 = vld [vmem:[#allocation8 + $0x90] sm:$0xff]
    %v588 = vld [vmem:[#allocation8 + $0x98] sm:$0xff]
    %v589 = vld [vmem:[#allocation8 + $0xa0] sm:$0xff]
    %v590 = vld [vmem:[#allocation8 + $0xa8] sm:$0xff]
    %v591 = vld [vmem:[#allocation8 + $0xb0] sm:$0xff]
    %v592 = vld [vmem:[#allocation8 + $0xb8] sm:$0xff]
    %v593 = vld [vmem:[#allocation8 + $0xc0] sm:$0xff]
    %v594 = vld [vmem:[#allocation8 + $0xc8] sm:$0xff]
    %v595 = vld [vmem:[#allocation8 + $0xd0] sm:$0xff]
    %v596 = vld [vmem:[#allocation8 + $0xd8] sm:$0xff]
    %v597 = vld [vmem:[#allocation8 + $0xe0] sm:$0xff]
    %v598 = vld [vmem:[#allocation8 + $0xe8] sm:$0xff]
    %v599 = vld [vmem:[#allocation8 + $0xf0] sm:$0xff]
    %v600 = vld [vmem:[#allocation8 + $0xf8] sm:$0xff]
    %v601 = vld [vmem:[#allocation8 + $0x100] sm:$0xff]
    %v602 = vld [vmem:[#allocation8 + $0x108] sm:$0xff]
    %v603 = vld [vmem:[#allocation8 + $0x110] sm:$0xff]
    %v604 = vld [vmem:[#allocation8 + $0x118] sm:$0xff]
    %v605 = vld [vmem:[#allocation8 + $0x120] sm:$0xff]
    %v606 = vld [vmem:[#allocation8 + $0x128] sm:$0xff]
    %v607 = vld [vmem:[#allocation8 + $0x130] sm:$0xff]
    %v608 = vld [vmem:[#allocation8 + $0x138] sm:$0xff]
    %v609 = vld [vmem:[#allocation8 + $0x140] sm:$0xff]
    %v610 = vld [vmem:[#allocation8 + $0x148] sm:$0xff]
    %v611 = vld [vmem:[#allocation8 + $0x150] sm:$0xff]
    %v612 = vld [vmem:[#allocation8 + $0x158] sm:$0xff]
    %v613 = vld [vmem:[#allocation8 + $0x160] sm:$0xff]
    %v614 = vld [vmem:[#allocation8 + $0x168] sm:$0xff]
    %v615 = vld [vmem:[#allocation8 + $0x170] sm:$0xff]
    %v616 = vld [vmem:[#allocation8 + $0x178] sm:$0xff]
    %v617 = vld [vmem:[#allocation8 + $0x180] sm:$0xff]
    %v618 = vld [vmem:[#allocation8 + $0x188] sm:$0xff]
    %v619 = vld [vmem:[#allocation8 + $0x190] sm:$0xff]
    %v620 = vld [vmem:[#allocation8 + $0x198] sm:$0xff]
    %v621 = vld [vmem:[#allocation8 + $0x1a0] sm:$0xff]
    %v622 = vld [vmem:[#allocation8 + $0x1a8] sm:$0xff]
    %v623 = vld [vmem:[#allocation8 + $0x1b0] sm:$0xff]
    %v624 = vld [vmem:[#allocation8 + $0x1b8] sm:$0xff]
    %v625 = vld [vmem:[#allocation8 + $0x1c0] sm:$0xff]
    %v626 = vld [vmem:[#allocation8 + $0x1c8] sm:$0xff]
    %v627 = vld [vmem:[#allocation8 + $0x1d0] sm:$0xff]
    %v628 = vld [vmem:[#allocation8 + $0x1d8] sm:$0xff]
    %v629 = vld [vmem:[#allocation8 + $0x1e0] sm:$0xff]
    %v630 = vld [vmem:[#allocation8 + $0x1e8] sm:$0xff]
    %v631 = vld [vmem:[#allocation8 + $0x1f0] sm:$0xff]
    %v632 = vld [vmem:[#allocation8 + $0x1f8] sm:$0xff]
    %v633 = vld [vmem:[#allocation8 + $0x200] sm:$0xff]
    %v634 = vld [vmem:[#allocation8 + $0x208] sm:$0xff]
    %v635 = vld [vmem:[#allocation8 + $0x210] sm:$0xff]
    %v636 = vld [vmem:[#allocation8 + $0x218] sm:$0xff]
    %v637 = vld [vmem:[#allocation8 + $0x220] sm:$0xff]
    %v638 = vld [vmem:[#allocation8 + $0x228] sm:$0xff]
    %v639 = vld [vmem:[#allocation8 + $0x230] sm:$0xff]
    %v640 = vld [vmem:[#allocation8 + $0x238] sm:$0xff]
    %v641 = vld [vmem:[#allocation8 + $0x240] sm:$0xff]
    %v642 = vld [vmem:[#allocation8 + $0x248] sm:$0xff]
    %v643 = vld [vmem:[#allocation8 + $0x250] sm:$0xff]
    %v644 = vld [vmem:[#allocation8 + $0x258] sm:$0xff]
    %v645 = vld [vmem:[#allocation8 + $0x260] sm:$0xff]
    %v646 = vld [vmem:[#allocation8 + $0x268] sm:$0xff]
    %v647 = vld [vmem:[#allocation8 + $0x270] sm:$0xff]
    %v648 = vld [vmem:[#allocation8 + $0x278] sm:$0xff]
    %v649 = vld [vmem:[#allocation8 + $0x280] sm:$0xff]
    %v650 = vld [vmem:[#allocation8 + $0x288] sm:$0xff]
    %v651 = vld [vmem:[#allocation8 + $0x290] sm:$0xff]
    %v652 = vld [vmem:[#allocation8 + $0x298] sm:$0xff]
    %v653 = vld [vmem:[#allocation8 + $0x2a0] sm:$0xff]
    %v654 = vld [vmem:[#allocation8 + $0x2a8] sm:$0xff]
    %v655 = vld [vmem:[#allocation8 + $0x2b0] sm:$0xff]
    %v656 = vld [vmem:[#allocation8 + $0x2b8] sm:$0xff]
    %v657 = vld [vmem:[#allocation8 + $0x2c0] sm:$0xff]
    %v658 = vld [vmem:[#allocation8 + $0x2c8] sm:$0xff]
    %v659 = vld [vmem:[#allocation8 + $0x2d0] sm:$0xff]
    %v660 = vld [vmem:[#allocation8 + $0x2d8] sm:$0xff]
    %v661 = vld [vmem:[#allocation8 + $0x2e0] sm:$0xff]
    %v662 = vld [vmem:[#allocation8 + $0x2e8] sm:$0xff]
    %v663 = vld [vmem:[#allocation8 + $0x2f0] sm:$0xff]
    %v664 = vld [vmem:[#allocation8 + $0x2f8] sm:$0xff]
    %v665 = vld [vmem:[#allocation8 + $0x300] sm:$0xff]
    %v666 = vld [vmem:[#allocation8 + $0x308] sm:$0xff]
    %v667 = vld [vmem:[#allocation8 + $0x310] sm:$0xff]
    %v668 = vld [vmem:[#allocation8 + $0x318] sm:$0xff]
    %v669 = vld [vmem:[#allocation8 + $0x320] sm:$0xff]
    %v670 = vld [vmem:[#allocation8 + $0x328] sm:$0xff]
    %v671 = vld [vmem:[#allocation8 + $0x330] sm:$0xff]
    %v672 = vld [vmem:[#allocation8 + $0x338] sm:$0xff]
    %v673 = vld [vmem:[#allocation8 + $0x340] sm:$0xff]
    %v674 = vld [vmem:[#allocation8 + $0x348] sm:$0xff]
    %v675 = vld [vmem:[#allocation8 + $0x350] sm:$0xff]
    %v676 = vld [vmem:[#allocation8 + $0x358] sm:$0xff]
    %v677 = vld [vmem:[#allocation8 + $0x360] sm:$0xff]
    %v678 = vld [vmem:[#allocation8 + $0x368] sm:$0xff]
    %v679 = vld [vmem:[#allocation8 + $0x370] sm:$0xff]
    %v680 = vld [vmem:[#allocation8 + $0x378] sm:$0xff]
    %v681 = vld [vmem:[#allocation8 + $0x380] sm:$0xff]
    %v682 = vld [vmem:[#allocation8 + $0x388] sm:$0xff]
    %v683 = vld [vmem:[#allocation8 + $0x390] sm:$0xff]
    %v684 = vld [vmem:[#allocation8 + $0x398] sm:$0xff]
    %v685 = vld [vmem:[#allocation8 + $0x3a0] sm:$0xff]
    %v686 = vld [vmem:[#allocation8 + $0x3a8] sm:$0xff]
    %v687 = vld [vmem:[#allocation8 + $0x3b0] sm:$0xff]
    %v688 = vld [vmem:[#allocation8 + $0x3b8] sm:$0xff]
    %v689 = vld [vmem:[#allocation8 + $0x3c0] sm:$0xff]
    %v690 = vld [vmem:[#allocation8 + $0x3c8] sm:$0xff]
    %v691 = vld [vmem:[#allocation8 + $0x3d0] sm:$0xff]
    %v692 = vld [vmem:[#allocation8 + $0x3d8] sm:$0xff]
    %v693 = vld [vmem:[#allocation8 + $0x3e0] sm:$0xff]
    %v694 = vld [vmem:[#allocation8 + $0x3e8] sm:$0xff]
    %v695 = vld [vmem:[#allocation8 + $0x3f0] sm:$0xff]
    %v696 = vld [vmem:[#allocation8 + $0x3f8] sm:$0xff]
    %v697 = vld [vmem:[#allocation8 + $0x400] sm:$0xff]
    %v698 = vld [vmem:[#allocation8 + $0x408] sm:$0xff]
    %v699 = vld [vmem:[#allocation8 + $0x410] sm:$0xff]
    %v700 = vld [vmem:[#allocation8 + $0x418] sm:$0xff]
    %v701 = vld [vmem:[#allocation8 + $0x420] sm:$0xff]
    %v702 = vld [vmem:[#allocation8 + $0x428] sm:$0xff]
    %v703 = vld [vmem:[#allocation8 + $0x430] sm:$0xff]
    %v704 = vld [vmem:[#allocation8 + $0x438] sm:$0xff]
    %v705 = vld [vmem:[#allocation8 + $0x440] sm:$0xff]
    %v706 = vld [vmem:[#allocation8 + $0x448] sm:$0xff]
    %v707 = vld [vmem:[#allocation8 + $0x450] sm:$0xff]
    %v708 = vld [vmem:[#allocation8 + $0x458] sm:$0xff]
    %v709 = vld [vmem:[#allocation8 + $0x460] sm:$0xff]
    %v710 = vld [vmem:[#allocation8 + $0x468] sm:$0xff]
    %v711 = vld [vmem:[#allocation8 + $0x470] sm:$0xff]
    %v712 = vld [vmem:[#allocation8 + $0x478] sm:$0xff]
    %v713 = vld [vmem:[#allocation8 + $0x480] sm:$0xff]
    %v714 = vld [vmem:[#allocation8 + $0x488] sm:$0xff]
    %v715 = vld [vmem:[#allocation8 + $0x490] sm:$0xff]
    %v716 = vld [vmem:[#allocation8 + $0x498] sm:$0xff]
    %v717 = vld [vmem:[#allocation8 + $0x4a0] sm:$0xff]
    %v718 = vld [vmem:[#allocation8 + $0x4a8] sm:$0xff]
    %v719 = vld [vmem:[#allocation8 + $0x4b0] sm:$0xff]
    %v720 = vld [vmem:[#allocation8 + $0x4b8] sm:$0xff]
    %v721 = vld [vmem:[#allocation8 + $0x4c0] sm:$0xff]
    %v722 = vld [vmem:[#allocation8 + $0x4c8] sm:$0xff]
    %v723 = vld [vmem:[#allocation8 + $0x4d0] sm:$0xff]
    %v724 = vld [vmem:[#allocation8 + $0x4d8] sm:$0xff]
    %v725 = vld [vmem:[#allocation8 + $0x4e0] sm:$0xff]
    %v726 = vld [vmem:[#allocation8 + $0x4e8] sm:$0xff]
    %v727 = vld [vmem:[#allocation8 + $0x4f0] sm:$0xff]
    %v728 = vld [vmem:[#allocation8 + $0x4f8] sm:$0xff]
    %v729 = vld [vmem:[#allocation8 + $0x500] sm:$0xff]
    %v730 = vld [vmem:[#allocation8 + $0x508] sm:$0xff]
    %v731 = vld [vmem:[#allocation8 + $0x510] sm:$0xff]
    %v732 = vld [vmem:[#allocation8 + $0x518] sm:$0xff]
    %v733 = vld [vmem:[#allocation8 + $0x520] sm:$0xff]
    %v734 = vld [vmem:[#allocation8 + $0x528] sm:$0xff]
    %v735 = vld [vmem:[#allocation8 + $0x530] sm:$0xff]
    %v736 = vld [vmem:[#allocation8 + $0x538] sm:$0xff]
    %v737 = vld [vmem:[#allocation8 + $0x540] sm:$0xff]
    %v738 = vld [vmem:[#allocation8 + $0x548] sm:$0xff]
    %v739 = vld [vmem:[#allocation8 + $0x550] sm:$0xff]
    %v740 = vld [vmem:[#allocation8 + $0x558] sm:$0xff]
    %v741 = vld [vmem:[#allocation8 + $0x560] sm:$0xff]
    %v742 = vld [vmem:[#allocation8 + $0x568] sm:$0xff]
    %v743 = vld [vmem:[#allocation8 + $0x570] sm:$0xff]
    %v744 = vld [vmem:[#allocation8 + $0x578] sm:$0xff]
    %v745 = vld [vmem:[#allocation8 + $0x580] sm:$0xff]
    %v746 = vld [vmem:[#allocation8 + $0x588] sm:$0xff]
    %v747 = vld [vmem:[#allocation8 + $0x590] sm:$0xff]
    %v748 = vld [vmem:[#allocation8 + $0x598] sm:$0xff]
    %v749 = vld [vmem:[#allocation8 + $0x5a0] sm:$0xff]
    %v750 = vld [vmem:[#allocation8 + $0x5a8] sm:$0xff]
    %v751 = vld [vmem:[#allocation8 + $0x5b0] sm:$0xff]
    %v752 = vld [vmem:[#allocation8 + $0x5b8] sm:$0xff]
    %v753 = vld [vmem:[#allocation8 + $0x5c0] sm:$0xff]
    %v754 = vld [vmem:[#allocation8 + $0x5c8] sm:$0xff]
    %v755 = vld [vmem:[#allocation8 + $0x5d0] sm:$0xff]
    %v756 = vld [vmem:[#allocation8 + $0x5d8] sm:$0xff]
    %v757 = vld [vmem:[#allocation8 + $0x5e0] sm:$0xff]
    %v758 = vld [vmem:[#allocation8 + $0x5e8] sm:$0xff]
    %v759 = vld [vmem:[#allocation8 + $0x5f0] sm:$0xff]
    %v760 = vld [vmem:[#allocation8 + $0x5f8] sm:$0xff]
    %v762 = vlaneseq
    %v763 = vshrl.u32 %v762, 7
    %v764 = vsub.s32 0, %v763
    %v765 = vrot.slane %v562, %v764
    %v766 = vlaneseq
    %v767 = vshrl.u32 %v766, 7
    %v768 = vsub.s32 1, %v767
    %v769 = vrot.slane %v562, %v768
    %v770 = vlaneseq
    %v771 = vshrl.u32 %v770, 7
    %v772 = vsub.s32 2, %v771
    %v773 = vrot.slane %v562, %v772
    %v774 = vlaneseq
    %v775 = vshrl.u32 %v774, 7
    %v776 = vsub.s32 3, %v775
    %v777 = vrot.slane %v562, %v776
    %v778 = vlaneseq
    %v779 = vshrl.u32 %v778, 7
    %v780 = vsub.s32 4, %v779
    %v781 = vrot.slane %v562, %v780
    %v782 = vlaneseq
    %v783 = vshrl.u32 %v782, 7
    %v784 = vsub.s32 5, %v783
    %v785 = vrot.slane %v562, %v784
    %792 = vmatprep.subr.mxu0 %v570
    %793 = vmatpush1.msra.mxu0 %v569
    %794 = vmatprep.subr.mxu0 %v576
    %795 = vmatpush1.msra.mxu0 %v575
    %796 = vmatprep.subr.mxu0 %v582
    %797 = vmatpush1.msra.mxu0 %v581
    %798 = vmatprep.subr.mxu0 %v588
    %799 = vmatpush1.msra.mxu0 %v587
    %800 = vmatprep.subr.mxu0 %v594
    %801 = vmatpush1.msra.mxu0 %v593
    %802 = vmatprep.subr.mxu0 %v600
    %803 = vmatpush1.msra.mxu0 %v599
    %804 = vmatprep.subr.mxu0 %v606
    %805 = vmatpush1.msra.mxu0 %v605
    %806 = vmatprep.subr.mxu0 %v612
    %807 = vmatpush1.msra.mxu0 %v611
    %808 = vmatprep.subr.mxu0 %v618
    %809 = vmatpush1.msra.mxu0 %v617
    %810 = vmatprep.subr.mxu0 %v624
    %811 = vmatpush1.msra.mxu0 %v623
    %812 = vmatprep.subr.mxu0 %v630
    %813 = vmatpush1.msra.mxu0 %v629
    %814 = vmatprep.subr.mxu0 %v636
    %815 = vmatpush1.msra.mxu0 %v635
    %816 = vmatprep.subr.mxu0 %v642
    %817 = vmatpush1.msra.mxu0 %v641
    %818 = vmatprep.subr.mxu0 %v648
    %819 = vmatpush1.msra.mxu0 %v647
    %820 = vmatprep.subr.mxu0 %v654
    %821 = vmatpush1.msra.mxu0 %v653
    %822 = vmatprep.subr.mxu0 %v660
    %823 = vmatpush1.msra.mxu0 %v659
    %824 = vmatprep.subr.mxu0 %v666
    %825 = vmatpush1.msra.mxu0 %v665
    %826 = vmatprep.subr.mxu0 %v672
    %827 = vmatpush1.msra.mxu0 %v671
    %828 = vmatprep.subr.mxu0 %v678
    %829 = vmatpush1.msra.mxu0 %v677
    %830 = vmatprep.subr.mxu0 %v684
    %831 = vmatpush1.msra.mxu0 %v683
    %832 = vmatprep.subr.mxu0 %v690
    %833 = vmatpush1.msra.mxu0 %v689
    %834 = vmatprep.subr.mxu0 %v696
    %835 = vmatpush1.msra.mxu0 %v695
    %836 = vmatprep.subr.mxu0 %v702
    %837 = vmatpush1.msra.mxu0 %v701
    %838 = vmatprep.subr.mxu0 %v708
    %839 = vmatpush1.msra.mxu0 %v707
    %840 = vmatprep.subr.mxu0 %v714
    %841 = vmatpush1.msra.mxu0 %v713
    %842 = vmatprep.subr.mxu0 %v720
    %843 = vmatpush1.msra.mxu0 %v719
    %844 = vmatprep.subr.mxu0 %v726
    %845 = vmatpush1.msra.mxu0 %v725
    %846 = vmatprep.subr.mxu0 %v732
    %847 = vmatpush1.msra.mxu0 %v731
    %848 = vmatprep.subr.mxu0 %v738
    %849 = vmatpush1.msra.mxu0 %v737
    %850 = vmatprep.subr.mxu0 %v744
    %851 = vmatpush1.msra.mxu0 %v743
    %852 = vmatprep.subr.mxu0 %v750
    %853 = vmatpush1.msra.mxu0 %v749
    %854 = vmatprep.subr.mxu0 %v756
    %855 = vmatpush1.msra.mxu0 %v755
    %856 = vmatprep.mubr.f32.mxu0 0.0
    %857 = vmatmul.mubr.f32.gmra.mrb[0].mxu0 0.0
    %v858 = vpop.f32.mrb[0].mxu0
    %v859 = vadd.f32 %v765, %v858
    %v860 = vpop.f32.mrb[0].mxu0
    %v861 = vadd.f32 %v769, %v860
    %862 = vdwg.mxu0
    %863 = vmatprep.subr.mxu0 %v572
    %864 = vmatpush1.msra.mxu0 %v571
    %865 = vmatprep.subr.mxu0 %v578
    %866 = vmatpush1.msra.mxu0 %v577
    %867 = vmatprep.subr.mxu0 %v584
    %868 = vmatpush1.msra.mxu0 %v583
    %869 = vmatprep.subr.mxu0 %v590
    %870 = vmatpush1.msra.mxu0 %v589
    %871 = vmatprep.subr.mxu0 %v596
    %872 = vmatpush1.msra.mxu0 %v595
    %873 = vmatprep.subr.mxu0 %v602
    %874 = vmatpush1.msra.mxu0 %v601
    %875 = vmatprep.subr.mxu0 %v608
    %876 = vmatpush1.msra.mxu0 %v607
    %877 = vmatprep.subr.mxu0 %v614
    %878 = vmatpush1.msra.mxu0 %v613
    %879 = vmatprep.subr.mxu0 %v620
    %880 = vmatpush1.msra.mxu0 %v619
    %881 = vmatprep.subr.mxu0 %v626
    %882 = vmatpush1.msra.mxu0 %v625
    %883 = vmatprep.subr.mxu0 %v632
    %884 = vmatpush1.msra.mxu0 %v631
    %885 = vmatprep.subr.mxu0 %v638
    %886 = vmatpush1.msra.mxu0 %v637
    %887 = vmatprep.subr.mxu0 %v644
    %888 = vmatpush1.msra.mxu0 %v643
    %889 = vmatprep.subr.mxu0 %v650
    %890 = vmatpush1.msra.mxu0 %v649
    %891 = vmatprep.subr.mxu0 %v656
    %892 = vmatpush1.msra.mxu0 %v655
    %893 = vmatprep.subr.mxu0 %v662
    %894 = vmatpush1.msra.mxu0 %v661
    %895 = vmatprep.subr.mxu0 %v668
    %896 = vmatpush1.msra.mxu0 %v667
    %897 = vmatprep.subr.mxu0 %v674
    %898 = vmatpush1.msra.mxu0 %v673
    %899 = vmatprep.subr.mxu0 %v680
    %900 = vmatpush1.msra.mxu0 %v679
    %901 = vmatprep.subr.mxu0 %v686
    %902 = vmatpush1.msra.mxu0 %v685
    %903 = vmatprep.subr.mxu0 %v692
    %904 = vmatpush1.msra.mxu0 %v691
    %905 = vmatprep.subr.mxu0 %v698
    %906 = vmatpush1.msra.mxu0 %v697
    %907 = vmatprep.subr.mxu0 %v704
    %908 = vmatpush1.msra.mxu0 %v703
    %909 = vmatprep.subr.mxu0 %v710
    %910 = vmatpush1.msra.mxu0 %v709
    %911 = vmatprep.subr.mxu0 %v716
    %912 = vmatpush1.msra.mxu0 %v715
    %913 = vmatprep.subr.mxu0 %v722
    %914 = vmatpush1.msra.mxu0 %v721
    %915 = vmatprep.subr.mxu0 %v728
    %916 = vmatpush1.msra.mxu0 %v727
    %917 = vmatprep.subr.mxu0 %v734
    %918 = vmatpush1.msra.mxu0 %v733
    %919 = vmatprep.subr.mxu0 %v740
    %920 = vmatpush1.msra.mxu0 %v739
    %921 = vmatprep.subr.mxu0 %v746
    %922 = vmatpush1.msra.mxu0 %v745
    %923 = vmatprep.subr.mxu0 %v752
    %924 = vmatpush1.msra.mxu0 %v751
    %925 = vmatprep.subr.mxu0 %v758
    %926 = vmatpush1.msra.mxu0 %v757
    %927 = vmatprep.mubr.f32.mxu0 0.0
    %928 = vmatmul.mubr.f32.gmra.mrb[0].mxu0 0.0
    %v929 = vpop.f32.mrb[0].mxu0
    %v930 = vadd.f32 %v773, %v929
    %v931 = vpop.f32.mrb[0].mxu0
    %v932 = vadd.f32 %v777, %v931
    %933 = vdwg.mxu0
    %934 = vmatprep.subr.mxu0 %v574
    %935 = vmatpush1.msra.mxu0 %v573
    %936 = vmatprep.subr.mxu0 %v580
    %937 = vmatpush1.msra.mxu0 %v579
    %938 = vmatprep.subr.mxu0 %v586
    %939 = vmatpush1.msra.mxu0 %v585
    %940 = vmatprep.subr.mxu0 %v592
    %941 = vmatpush1.msra.mxu0 %v591
    %942 = vmatprep.subr.mxu0 %v598
    %943 = vmatpush1.msra.mxu0 %v597
    %944 = vmatprep.subr.mxu0 %v604
    %945 = vmatpush1.msra.mxu0 %v603
    %946 = vmatprep.subr.mxu0 %v610
    %947 = vmatpush1.msra.mxu0 %v609
    %948 = vmatprep.subr.mxu0 %v616
    %949 = vmatpush1.msra.mxu0 %v615
    %950 = vmatprep.subr.mxu0 %v622
    %951 = vmatpush1.msra.mxu0 %v621
    %952 = vmatprep.subr.mxu0 %v628
    %953 = vmatpush1.msra.mxu0 %v627
    %954 = vmatprep.subr.mxu0 %v634
    %955 = vmatpush1.msra.mxu0 %v633
    %956 = vmatprep.subr.mxu0 %v640
    %957 = vmatpush1.msra.mxu0 %v639
    %958 = vmatprep.subr.mxu0 %v646
    %959 = vmatpush1.msra.mxu0 %v645
    %960 = vmatprep.subr.mxu0 %v652
    %961 = vmatpush1.msra.mxu0 %v651
    %962 = vmatprep.subr.mxu0 %v658
    %963 = vmatpush1.msra.mxu0 %v657
    %964 = vmatprep.subr.mxu0 %v664
    %965 = vmatpush1.msra.mxu0 %v663
    %966 = vmatprep.subr.mxu0 %v670
    %967 = vmatpush1.msra.mxu0 %v669
    %968 = vmatprep.subr.mxu0 %v676
    %969 = vmatpush1.msra.mxu0 %v675
    %970 = vmatprep.subr.mxu0 %v682
    %971 = vmatpush1.msra.mxu0 %v681
    %972 = vmatprep.subr.mxu0 %v688
    %973 = vmatpush1.msra.mxu0 %v687
    %974 = vmatprep.subr.mxu0 %v694
    %975 = vmatpush1.msra.mxu0 %v693
    %976 = vmatprep.subr.mxu0 %v700
    %977 = vmatpush1.msra.mxu0 %v699
    %978 = vmatprep.subr.mxu0 %v706
    %979 = vmatpush1.msra.mxu0 %v705
    %980 = vmatprep.subr.mxu0 %v712
    %981 = vmatpush1.msra.mxu0 %v711
    %982 = vmatprep.subr.mxu0 %v718
    %983 = vmatpush1.msra.mxu0 %v717
    %984 = vmatprep.subr.mxu0 %v724
    %985 = vmatpush1.msra.mxu0 %v723
    %986 = vmatprep.subr.mxu0 %v730
    %987 = vmatpush1.msra.mxu0 %v729
    %988 = vmatprep.subr.mxu0 %v736
    %989 = vmatpush1.msra.mxu0 %v735
    %990 = vmatprep.subr.mxu0 %v742
    %991 = vmatpush1.msra.mxu0 %v741
    %992 = vmatprep.subr.mxu0 %v748
    %993 = vmatpush1.msra.mxu0 %v747
    %994 = vmatprep.subr.mxu0 %v754
    %995 = vmatpush1.msra.mxu0 %v753
    %996 = vmatprep.subr.mxu0 %v760
    %997 = vmatpush1.msra.mxu0 %v759
    %998 = vmatprep.mubr.f32.mxu0 0.0
    %999 = vmatmul.mubr.f32.gmra.mrb[0].mxu0 0.0
    %v1000 = vpop.f32.mrb[0].mxu0
    %v1001 = vadd.f32 %v781, %v1000
    %v1002 = vpop.f32.mrb[0].mxu0
    %v1003 = vadd.f32 %v785, %v1002
    %1004 = vdwg.mxu0
    %v1005 = vadd.f32 %v563, %v859
    %v1006 = vadd.f32 %v564, %v861
    %v1007 = vxor.u32 %v1005, 2147483648
    %v1008 = vxor.u32 %v1006, 2147483648
    %v1009 = vmul.f32 %v1007, 1.442695
    %v1010 = vpow.pop %v1009
    %v1011 = vmul.f32 %v1008, 1.442695
    %v1012 = vpow.pop %v1011
    %v1013 = vadd.f32 %v1010, 1.0
    %v1014 = vadd.f32 %v1012, 1.0
    %v1015 = vrcp.pop %v1013
    %v1016 = vmul.f32 1.0, %v1015
    %v1017 = vrcp.pop %v1014
    %v1018 = vmul.f32 1.0, %v1017
    %v1019 = vadd.f32 %v565, %v930
    %v1020 = vadd.f32 %v566, %v932
    %v1021 = vxor.u32 %v1019, 2147483648
    %v1022 = vxor.u32 %v1020, 2147483648
    %v1023 = vmul.f32 %v1021, 1.442695
    %v1024 = vpow.pop %v1023
    %v1025 = vmul.f32 %v1022, 1.442695
    %v1026 = vpow.pop %v1025
    %v1027 = vadd.f32 %v1024, 1.0
    %v1028 = vadd.f32 %v1026, 1.0
    %v1029 = vrcp.pop %v1027
    %v1030 = vmul.f32 1.0, %v1029
    %v1031 = vrcp.pop %v1028
    %v1032 = vmul.f32 1.0, %v1031
    %v1033 = vmul.f32 %v1016, %v1001
    %v1034 = vmul.f32 %v1018, %v1003
    %v1035 = vadd.f32 %v567, %v1033
    %v1036 = vadd.f32 %v568, %v1034
    %v1037 = vtanh.pop %v1035
    %v1038 = vtanh.pop %v1036
    %v1039 = vsub.f32 1.0, %v1030
    %v1040 = vsub.f32 1.0, %v1032
    %v1041 = vmul.f32 %v1039, %v1037
    %v1042 = vmul.f32 %v1040, %v1038
    %v1043 = vmul.f32 %v1030, 0.0
    %v1044 = vmul.f32 %v1032, 0.0
    %v1045 = vadd.f32 %v1041, %v1043
    %v1046 = vadd.f32 %v1042, %v1044
    %1047 = vst [vmem:[#allocation9] sm:$0xff] %v1045
    %1048 = vst [vmem:[#allocation9 + $0x8] sm:$0xff] %v1046
    %v1049 = vld [vmem:[#allocation2 + $0x30] sm:$0xff]
    %v1050 = vld [vmem:[#allocation2 + $0x38] sm:$0xff]
    %v1051 = vld [vmem:[#allocation2 + $0x40] sm:$0xff]
    %v1052 = vld [vmem:[#allocation2 + $0x48] sm:$0xff]
    %v1053 = vld [vmem:[#allocation2 + $0x50] sm:$0xff]
    %v1054 = vld [vmem:[#allocation2 + $0x58] sm:$0xff]
    %v1055 = vld [vmem:[#allocation8] sm:$0xff]
    %v1056 = vld [vmem:[#allocation8 + $0x8] sm:$0xff]
    %v1057 = vld [vmem:[#allocation8 + $0x10] sm:$0xff]
    %v1058 = vld [vmem:[#allocation8 + $0x18] sm:$0xff]
    %v1059 = vld [vmem:[#allocation8 + $0x20] sm:$0xff]
    %v1060 = vld [vmem:[#allocation8 + $0x28] sm:$0xff]
    %v1061 = vld [vmem:[#allocation8 + $0x30] sm:$0xff]
    %v1062 = vld [vmem:[#allocation8 + $0x38] sm:$0xff]
    %v1063 = vld [vmem:[#allocation8 + $0x40] sm:$0xff]
    %v1064 = vld [vmem:[#allocation8 + $0x48] sm:$0xff]
    %v1065 = vld [vmem:[#allocation8 + $0x50] sm:$0xff]
    %v1066 = vld [vmem:[#allocation8 + $0x58] sm:$0xff]
    %v1067 = vld [vmem:[#allocation8 + $0x60] sm:$0xff]
    %v1068 = vld [vmem:[#allocation8 + $0x68] sm:$0xff]
    %v1069 = vld [vmem:[#allocation8 + $0x70] sm:$0xff]
    %v1070 = vld [vmem:[#allocation8 + $0x78] sm:$0xff]
    %v1071 = vld [vmem:[#allocation8 + $0x80] sm:$0xff]
    %v1072 = vld [vmem:[#allocation8 + $0x88] sm:$0xff]
    %v1073 = vld [vmem:[#allocation8 + $0x90] sm:$0xff]
    %v1074 = vld [vmem:[#allocation8 + $0x98] sm:$0xff]
    %v1075 = vld [vmem:[#allocation8 + $0xa0] sm:$0xff]
    %v1076 = vld [vmem:[#allocation8 + $0xa8] sm:$0xff]
    %v1077 = vld [vmem:[#allocation8 + $0xb0] sm:$0xff]
    %v1078 = vld [vmem:[#allocation8 + $0xb8] sm:$0xff]
    %v1079 = vld [vmem:[#allocation8 + $0xc0] sm:$0xff]
    %v1080 = vld [vmem:[#allocation8 + $0xc8] sm:$0xff]
    %v1081 = vld [vmem:[#allocation8 + $0xd0] sm:$0xff]
    %v1082 = vld [vmem:[#allocation8 + $0xd8] sm:$0xff]
    %v1083 = vld [vmem:[#allocation8 + $0xe0] sm:$0xff]
    %v1084 = vld [vmem:[#allocation8 + $0xe8] sm:$0xff]
    %v1085 = vld [vmem:[#allocation8 + $0xf0] sm:$0xff]
    %v1086 = vld [vmem:[#allocation8 + $0xf8] sm:$0xff]
    %v1087 = vld [vmem:[#allocation8 + $0x100] sm:$0xff]
    %v1088 = vld [vmem:[#allocation8 + $0x108] sm:$0xff]
    %v1089 = vld [vmem:[#allocation8 + $0x110] sm:$0xff]
    %v1090 = vld [vmem:[#allocation8 + $0x118] sm:$0xff]
    %v1091 = vld [vmem:[#allocation8 + $0x120] sm:$0xff]
    %v1092 = vld [vmem:[#allocation8 + $0x128] sm:$0xff]
    %v1093 = vld [vmem:[#allocation8 + $0x130] sm:$0xff]
    %v1094 = vld [vmem:[#allocation8 + $0x138] sm:$0xff]
    %v1095 = vld [vmem:[#allocation8 + $0x140] sm:$0xff]
    %v1096 = vld [vmem:[#allocation8 + $0x148] sm:$0xff]
    %v1097 = vld [vmem:[#allocation8 + $0x150] sm:$0xff]
    %v1098 = vld [vmem:[#allocation8 + $0x158] sm:$0xff]
    %v1099 = vld [vmem:[#allocation8 + $0x160] sm:$0xff]
    %v1100 = vld [vmem:[#allocation8 + $0x168] sm:$0xff]
    %v1101 = vld [vmem:[#allocation8 + $0x170] sm:$0xff]
    %v1102 = vld [vmem:[#allocation8 + $0x178] sm:$0xff]
    %v1103 = vld [vmem:[#allocation8 + $0x180] sm:$0xff]
    %v1104 = vld [vmem:[#allocation8 + $0x188] sm:$0xff]
    %v1105 = vld [vmem:[#allocation8 + $0x190] sm:$0xff]
    %v1106 = vld [vmem:[#allocation8 + $0x198] sm:$0xff]
    %v1107 = vld [vmem:[#allocation8 + $0x1a0] sm:$0xff]
    %v1108 = vld [vmem:[#allocation8 + $0x1a8] sm:$0xff]
    %v1109 = vld [vmem:[#allocation8 + $0x1b0] sm:$0xff]
    %v1110 = vld [vmem:[#allocation8 + $0x1b8] sm:$0xff]
    %v1111 = vld [vmem:[#allocation8 + $0x1c0] sm:$0xff]
    %v1112 = vld [vmem:[#allocation8 + $0x1c8] sm:$0xff]
    %v1113 = vld [vmem:[#allocation8 + $0x1d0] sm:$0xff]
    %v1114 = vld [vmem:[#allocation8 + $0x1d8] sm:$0xff]
    %v1115 = vld [vmem:[#allocation8 + $0x1e0] sm:$0xff]
    %v1116 = vld [vmem:[#allocation8 + $0x1e8] sm:$0xff]
    %v1117 = vld [vmem:[#allocation8 + $0x1f0] sm:$0xff]
    %v1118 = vld [vmem:[#allocation8 + $0x1f8] sm:$0xff]
    %v1119 = vld [vmem:[#allocation8 + $0x200] sm:$0xff]
    %v1120 = vld [vmem:[#allocation8 + $0x208] sm:$0xff]
    %v1121 = vld [vmem:[#allocation8 + $0x210] sm:$0xff]
    %v1122 = vld [vmem:[#allocation8 + $0x218] sm:$0xff]
    %v1123 = vld [vmem:[#allocation8 + $0x220] sm:$0xff]
    %v1124 = vld [vmem:[#allocation8 + $0x228] sm:$0xff]
    %v1125 = vld [vmem:[#allocation8 + $0x230] sm:$0xff]
    %v1126 = vld [vmem:[#allocation8 + $0x238] sm:$0xff]
    %v1127 = vld [vmem:[#allocation8 + $0x240] sm:$0xff]
    %v1128 = vld [vmem:[#allocation8 + $0x248] sm:$0xff]
    %v1129 = vld [vmem:[#allocation8 + $0x250] sm:$0xff]
    %v1130 = vld [vmem:[#allocation8 + $0x258] sm:$0xff]
    %v1131 = vld [vmem:[#allocation8 + $0x260] sm:$0xff]
    %v1132 = vld [vmem:[#allocation8 + $0x268] sm:$0xff]
    %v1133 = vld [vmem:[#allocation8 + $0x270] sm:$0xff]
    %v1134 = vld [vmem:[#allocation8 + $0x278] sm:$0xff]
    %v1135 = vld [vmem:[#allocation8 + $0x280] sm:$0xff]
    %v1136 = vld [vmem:[#allocation8 + $0x288] sm:$0xff]
    %v1137 = vld [vmem:[#allocation8 + $0x290] sm:$0xff]
    %v1138 = vld [vmem:[#allocation8 + $0x298] sm:$0xff]
    %v1139 = vld [vmem:[#allocation8 + $0x2a0] sm:$0xff]
    %v1140 = vld [vmem:[#allocation8 + $0x2a8] sm:$0xff]
    %v1141 = vld [vmem:[#allocation8 + $0x2b0] sm:$0xff]
    %v1142 = vld [vmem:[#allocation8 + $0x2b8] sm:$0xff]
    %v1143 = vld [vmem:[#allocation8 + $0x2c0] sm:$0xff]
    %v1144 = vld [vmem:[#allocation8 + $0x2c8] sm:$0xff]
    %v1145 = vld [vmem:[#allocation8 + $0x2d0] sm:$0xff]
    %v1146 = vld [vmem:[#allocation8 + $0x2d8] sm:$0xff]
    %v1147 = vld [vmem:[#allocation8 + $0x2e0] sm:$0xff]
    %v1148 = vld [vmem:[#allocation8 + $0x2e8] sm:$0xff]
    %v1149 = vld [vmem:[#allocation8 + $0x2f0] sm:$0xff]
    %v1150 = vld [vmem:[#allocation8 + $0x2f8] sm:$0xff]
    %v1151 = vld [vmem:[#allocation8 + $0x300] sm:$0xff]
    %v1152 = vld [vmem:[#allocation8 + $0x308] sm:$0xff]
    %v1153 = vld [vmem:[#allocation8 + $0x310] sm:$0xff]
    %v1154 = vld [vmem:[#allocation8 + $0x318] sm:$0xff]
    %v1155 = vld [vmem:[#allocation8 + $0x320] sm:$0xff]
    %v1156 = vld [vmem:[#allocation8 + $0x328] sm:$0xff]
    %v1157 = vld [vmem:[#allocation8 + $0x330] sm:$0xff]
    %v1158 = vld [vmem:[#allocation8 + $0x338] sm:$0xff]
    %v1159 = vld [vmem:[#allocation8 + $0x340] sm:$0xff]
    %v1160 = vld [vmem:[#allocation8 + $0x348] sm:$0xff]
    %v1161 = vld [vmem:[#allocation8 + $0x350] sm:$0xff]
    %v1162 = vld [vmem:[#allocation8 + $0x358] sm:$0xff]
    %v1163 = vld [vmem:[#allocation8 + $0x360] sm:$0xff]
    %v1164 = vld [vmem:[#allocation8 + $0x368] sm:$0xff]
    %v1165 = vld [vmem:[#allocation8 + $0x370] sm:$0xff]
    %v1166 = vld [vmem:[#allocation8 + $0x378] sm:$0xff]
    %v1167 = vld [vmem:[#allocation8 + $0x380] sm:$0xff]
    %v1168 = vld [vmem:[#allocation8 + $0x388] sm:$0xff]
    %v1169 = vld [vmem:[#allocation8 + $0x390] sm:$0xff]
    %v1170 = vld [vmem:[#allocation8 + $0x398] sm:$0xff]
    %v1171 = vld [vmem:[#allocation8 + $0x3a0] sm:$0xff]
    %v1172 = vld [vmem:[#allocation8 + $0x3a8] sm:$0xff]
    %v1173 = vld [vmem:[#allocation8 + $0x3b0] sm:$0xff]
    %v1174 = vld [vmem:[#allocation8 + $0x3b8] sm:$0xff]
    %v1175 = vld [vmem:[#allocation8 + $0x3c0] sm:$0xff]
    %v1176 = vld [vmem:[#allocation8 + $0x3c8] sm:$0xff]
    %v1177 = vld [vmem:[#allocation8 + $0x3d0] sm:$0xff]
    %v1178 = vld [vmem:[#allocation8 + $0x3d8] sm:$0xff]
    %v1179 = vld [vmem:[#allocation8 + $0x3e0] sm:$0xff]
    %v1180 = vld [vmem:[#allocation8 + $0x3e8] sm:$0xff]
    %v1181 = vld [vmem:[#allocation8 + $0x3f0] sm:$0xff]
    %v1182 = vld [vmem:[#allocation8 + $0x3f8] sm:$0xff]
    %v1183 = vld [vmem:[#allocation8 + $0x400] sm:$0xff]
    %v1184 = vld [vmem:[#allocation8 + $0x408] sm:$0xff]
    %v1185 = vld [vmem:[#allocation8 + $0x410] sm:$0xff]
    %v1186 = vld [vmem:[#allocation8 + $0x418] sm:$0xff]
    %v1187 = vld [vmem:[#allocation8 + $0x420] sm:$0xff]
    %v1188 = vld [vmem:[#allocation8 + $0x428] sm:$0xff]
    %v1189 = vld [vmem:[#allocation8 + $0x430] sm:$0xff]
    %v1190 = vld [vmem:[#allocation8 + $0x438] sm:$0xff]
    %v1191 = vld [vmem:[#allocation8 + $0x440] sm:$0xff]
    %v1192 = vld [vmem:[#allocation8 + $0x448] sm:$0xff]
    %v1193 = vld [vmem:[#allocation8 + $0x450] sm:$0xff]
    %v1194 = vld [vmem:[#allocation8 + $0x458] sm:$0xff]
    %v1195 = vld [vmem:[#allocation8 + $0x460] sm:$0xff]
    %v1196 = vld [vmem:[#allocation8 + $0x468] sm:$0xff]
    %v1197 = vld [vmem:[#allocation8 + $0x470] sm:$0xff]
    %v1198 = vld [vmem:[#allocation8 + $0x478] sm:$0xff]
    %v1199 = vld [vmem:[#allocation8 + $0x480] sm:$0xff]
    %v1200 = vld [vmem:[#allocation8 + $0x488] sm:$0xff]
    %v1201 = vld [vmem:[#allocation8 + $0x490] sm:$0xff]
    %v1202 = vld [vmem:[#allocation8 + $0x498] sm:$0xff]
    %v1203 = vld [vmem:[#allocation8 + $0x4a0] sm:$0xff]
    %v1204 = vld [vmem:[#allocation8 + $0x4a8] sm:$0xff]
    %v1205 = vld [vmem:[#allocation8 + $0x4b0] sm:$0xff]
    %v1206 = vld [vmem:[#allocation8 + $0x4b8] sm:$0xff]
    %v1207 = vld [vmem:[#allocation8 + $0x4c0] sm:$0xff]
    %v1208 = vld [vmem:[#allocation8 + $0x4c8] sm:$0xff]
    %v1209 = vld [vmem:[#allocation8 + $0x4d0] sm:$0xff]
    %v1210 = vld [vmem:[#allocation8 + $0x4d8] sm:$0xff]
    %v1211 = vld [vmem:[#allocation8 + $0x4e0] sm:$0xff]
    %v1212 = vld [vmem:[#allocation8 + $0x4e8] sm:$0xff]
    %v1213 = vld [vmem:[#allocation8 + $0x4f0] sm:$0xff]
    %v1214 = vld [vmem:[#allocation8 + $0x4f8] sm:$0xff]
    %v1215 = vld [vmem:[#allocation8 + $0x500] sm:$0xff]
    %v1216 = vld [vmem:[#allocation8 + $0x508] sm:$0xff]
    %v1217 = vld [vmem:[#allocation8 + $0x510] sm:$0xff]
    %v1218 = vld [vmem:[#allocation8 + $0x518] sm:$0xff]
    %v1219 = vld [vmem:[#allocation8 + $0x520] sm:$0xff]
    %v1220 = vld [vmem:[#allocation8 + $0x528] sm:$0xff]
    %v1221 = vld [vmem:[#allocation8 + $0x530] sm:$0xff]
    %v1222 = vld [vmem:[#allocation8 + $0x538] sm:$0xff]
    %v1223 = vld [vmem:[#allocation8 + $0x540] sm:$0xff]
    %v1224 = vld [vmem:[#allocation8 + $0x548] sm:$0xff]
    %v1225 = vld [vmem:[#allocation8 + $0x550] sm:$0xff]
    %v1226 = vld [vmem:[#allocation8 + $0x558] sm:$0xff]
    %v1227 = vld [vmem:[#allocation8 + $0x560] sm:$0xff]
    %v1228 = vld [vmem:[#allocation8 + $0x568] sm:$0xff]
    %v1229 = vld [vmem:[#allocation8 + $0x570] sm:$0xff]
    %v1230 = vld [vmem:[#allocation8 + $0x578] sm:$0xff]
    %v1231 = vld [vmem:[#allocation8 + $0x580] sm:$0xff]
    %v1232 = vld [vmem:[#allocation8 + $0x588] sm:$0xff]
    %v1233 = vld [vmem:[#allocation8 + $0x590] sm:$0xff]
    %v1234 = vld [vmem:[#allocation8 + $0x598] sm:$0xff]
    %v1235 = vld [vmem:[#allocation8 + $0x5a0] sm:$0xff]
    %v1236 = vld [vmem:[#allocation8 + $0x5a8] sm:$0xff]
    %v1237 = vld [vmem:[#allocation8 + $0x5b0] sm:$0xff]
    %v1238 = vld [vmem:[#allocation8 + $0x5b8] sm:$0xff]
    %v1239 = vld [vmem:[#allocation8 + $0x5c0] sm:$0xff]
    %v1240 = vld [vmem:[#allocation8 + $0x5c8] sm:$0xff]
    %v1241 = vld [vmem:[#allocation8 + $0x5d0] sm:$0xff]
    %v1242 = vld [vmem:[#allocation8 + $0x5d8] sm:$0xff]
    %v1243 = vld [vmem:[#allocation8 + $0x5e0] sm:$0xff]
    %v1244 = vld [vmem:[#allocation8 + $0x5e8] sm:$0xff]
    %v1245 = vld [vmem:[#allocation8 + $0x5f0] sm:$0xff]
    %v1246 = vld [vmem:[#allocation8 + $0x5f8] sm:$0xff]
    %1247 = vmatprep.subr.mxu0 %v1056
    %1248 = vmatpush1.msra.mxu0 %v1055
    %1249 = vmatprep.subr.mxu0 %v1062
    %1250 = vmatpush1.msra.mxu0 %v1061
    %1251 = vmatprep.subr.mxu0 %v1068
    %1252 = vmatpush1.msra.mxu0 %v1067
    %1253 = vmatprep.subr.mxu0 %v1074
    %1254 = vmatpush1.msra.mxu0 %v1073
    %1255 = vmatprep.subr.mxu0 %v1080
    %1256 = vmatpush1.msra.mxu0 %v1079
    %1257 = vmatprep.subr.mxu0 %v1086
    %1258 = vmatpush1.msra.mxu0 %v1085
    %1259 = vmatprep.subr.mxu0 %v1092
    %1260 = vmatpush1.msra.mxu0 %v1091
    %1261 = vmatprep.subr.mxu0 %v1098
    %1262 = vmatpush1.msra.mxu0 %v1097
    %1263 = vmatprep.subr.mxu0 %v1104
    %1264 = vmatpush1.msra.mxu0 %v1103
    %1265 = vmatprep.subr.mxu0 %v1110
    %1266 = vmatpush1.msra.mxu0 %v1109
    %1267 = vmatprep.subr.mxu0 %v1116
    %1268 = vmatpush1.msra.mxu0 %v1115
    %1269 = vmatprep.subr.mxu0 %v1122
    %1270 = vmatpush1.msra.mxu0 %v1121
    %1271 = vmatprep.subr.mxu0 %v1128
    %1272 = vmatpush1.msra.mxu0 %v1127
    %1273 = vmatprep.subr.mxu0 %v1134
    %1274 = vmatpush1.msra.mxu0 %v1133
    %1275 = vmatprep.subr.mxu0 %v1140
    %1276 = vmatpush1.msra.mxu0 %v1139
    %1277 = vmatprep.subr.mxu0 %v1146
    %1278 = vmatpush1.msra.mxu0 %v1145
    %1279 = vmatprep.subr.mxu0 %v1152
    %1280 = vmatpush1.msra.mxu0 %v1151
    %1281 = vmatprep.subr.mxu0 %v1158
    %1282 = vmatpush1.msra.mxu0 %v1157
    %1283 = vmatprep.subr.mxu0 %v1164
    %1284 = vmatpush1.msra.mxu0 %v1163
    %1285 = vmatprep.subr.mxu0 %v1170
    %1286 = vmatpush1.msra.mxu0 %v1169
    %1287 = vmatprep.subr.mxu0 %v1176
    %1288 = vmatpush1.msra.mxu0 %v1175
    %1289 = vmatprep.subr.mxu0 %v1182
    %1290 = vmatpush1.msra.mxu0 %v1181
    %1291 = vmatprep.subr.mxu0 %v1188
    %1292 = vmatpush1.msra.mxu0 %v1187
    %1293 = vmatprep.subr.mxu0 %v1194
    %1294 = vmatpush1.msra.mxu0 %v1193
    %1295 = vmatprep.subr.mxu0 %v1200
    %1296 = vmatpush1.msra.mxu0 %v1199
    %1297 = vmatprep.subr.mxu0 %v1206
    %1298 = vmatpush1.msra.mxu0 %v1205
    %1299 = vmatprep.subr.mxu0 %v1212
    %1300 = vmatpush1.msra.mxu0 %v1211
    %1301 = vmatprep.subr.mxu0 %v1218
    %1302 = vmatpush1.msra.mxu0 %v1217
    %1303 = vmatprep.subr.mxu0 %v1224
    %1304 = vmatpush1.msra.mxu0 %v1223
    %1305 = vmatprep.subr.mxu0 %v1230
    %1306 = vmatpush1.msra.mxu0 %v1229
    %1307 = vmatprep.subr.mxu0 %v1236
    %1308 = vmatpush1.msra.mxu0 %v1235
    %1309 = vmatprep.subr.mxu0 %v1242
    %1310 = vmatpush1.msra.mxu0 %v1241
    %1311 = vmatprep.mubr.f32.mxu0 %v1046
    %1312 = vmatmul.mubr.f32.gmra.mrb[0].mxu0 %v1045
    %v1313 = vpop.f32.mrb[0].mxu0
    %v1314 = vadd.f32 %v765, %v1313
    %v1315 = vpop.f32.mrb[0].mxu0
    %v1316 = vadd.f32 %v769, %v1315
    %1317 = vdwg.mxu0
    %1318 = vmatprep.subr.mxu0 %v1058
    %1319 = vmatpush1.msra.mxu0 %v1057
    %1320 = vmatprep.subr.mxu0 %v1064
    %1321 = vmatpush1.msra.mxu0 %v1063
    %1322 = vmatprep.subr.mxu0 %v1070
    %1323 = vmatpush1.msra.mxu0 %v1069
    %1324 = vmatprep.subr.mxu0 %v1076
    %1325 = vmatpush1.msra.mxu0 %v1075
    %1326 = vmatprep.subr.mxu0 %v1082
    %1327 = vmatpush1.msra.mxu0 %v1081
    %1328 = vmatprep.subr.mxu0 %v1088
    %1329 = vmatpush1.msra.mxu0 %v1087
    %1330 = vmatprep.subr.mxu0 %v1094
    %1331 = vmatpush1.msra.mxu0 %v1093
    %1332 = vmatprep.subr.mxu0 %v1100
    %1333 = vmatpush1.msra.mxu0 %v1099
    %1334 = vmatprep.subr.mxu0 %v1106
    %1335 = vmatpush1.msra.mxu0 %v1105
    %1336 = vmatprep.subr.mxu0 %v1112
    %1337 = vmatpush1.msra.mxu0 %v1111
    %1338 = vmatprep.subr.mxu0 %v1118
    %1339 = vmatpush1.msra.mxu0 %v1117
    %1340 = vmatprep.subr.mxu0 %v1124
    %1341 = vmatpush1.msra.mxu0 %v1123
    %1342 = vmatprep.subr.mxu0 %v1130
    %1343 = vmatpush1.msra.mxu0 %v1129
    %1344 = vmatprep.subr.mxu0 %v1136
    %1345 = vmatpush1.msra.mxu0 %v1135
    %1346 = vmatprep.subr.mxu0 %v1142
    %1347 = vmatpush1.msra.mxu0 %v1141
    %1348 = vmatprep.subr.mxu0 %v1148
    %1349 = vmatpush1.msra.mxu0 %v1147
    %1350 = vmatprep.subr.mxu0 %v1154
    %1351 = vmatpush1.msra.mxu0 %v1153
    %1352 = vmatprep.subr.mxu0 %v1160
    %1353 = vmatpush1.msra.mxu0 %v1159
    %1354 = vmatprep.subr.mxu0 %v1166
    %1355 = vmatpush1.msra.mxu0 %v1165
    %1356 = vmatprep.subr.mxu0 %v1172
    %1357 = vmatpush1.msra.mxu0 %v1171
    %1358 = vmatprep.subr.mxu0 %v1178
    %1359 = vmatpush1.msra.mxu0 %v1177
    %1360 = vmatprep.subr.mxu0 %v1184
    %1361 = vmatpush1.msra.mxu0 %v1183
    %1362 = vmatprep.subr.mxu0 %v1190
    %1363 = vmatpush1.msra.mxu0 %v1189
    %1364 = vmatprep.subr.mxu0 %v1196
    %1365 = vmatpush1.msra.mxu0 %v1195
    %1366 = vmatprep.subr.mxu0 %v1202
    %1367 = vmatpush1.msra.mxu0 %v1201
    %1368 = vmatprep.subr.mxu0 %v1208
    %1369 = vmatpush1.msra.mxu0 %v1207
    %1370 = vmatprep.subr.mxu0 %v1214
    %1371 = vmatpush1.msra.mxu0 %v1213
    %1372 = vmatprep.subr.mxu0 %v1220
    %1373 = vmatpush1.msra.mxu0 %v1219
    %1374 = vmatprep.subr.mxu0 %v1226
    %1375 = vmatpush1.msra.mxu0 %v1225
    %1376 = vmatprep.subr.mxu0 %v1232
    %1377 = vmatpush1.msra.mxu0 %v1231
    %1378 = vmatprep.subr.mxu0 %v1238
    %1379 = vmatpush1.msra.mxu0 %v1237
    %1380 = vmatprep.subr.mxu0 %v1244
    %1381 = vmatpush1.msra.mxu0 %v1243
    %1382 = vmatprep.mubr.f32.mxu0 %v1046
    %1383 = vmatmul.mubr.f32.gmra.mrb[0].mxu0 %v1045
    %v1384 = vpop.f32.mrb[0].mxu0
    %v1385 = vadd.f32 %v773, %v1384
    %v1386 = vpop.f32.mrb[0].mxu0
    %v1387 = vadd.f32 %v777, %v1386
    %1388 = vdwg.mxu0
    %1389 = vmatprep.subr.mxu0 %v1060
    %1390 = vmatpush1.msra.mxu0 %v1059
    %1391 = vmatprep.subr.mxu0 %v1066
    %1392 = vmatpush1.msra.mxu0 %v1065
    %1393 = vmatprep.subr.mxu0 %v1072
    %1394 = vmatpush1.msra.mxu0 %v1071
    %1395 = vmatprep.subr.mxu0 %v1078
    %1396 = vmatpush1.msra.mxu0 %v1077
    %1397 = vmatprep.subr.mxu0 %v1084
    %1398 = vmatpush1.msra.mxu0 %v1083
    %1399 = vmatprep.subr.mxu0 %v1090
    %1400 = vmatpush1.msra.mxu0 %v1089
    %1401 = vmatprep.subr.mxu0 %v1096
    %1402 = vmatpush1.msra.mxu0 %v1095
    %1403 = vmatprep.subr.mxu0 %v1102
    %1404 = vmatpush1.msra.mxu0 %v1101
    %1405 = vmatprep.subr.mxu0 %v1108
    %1406 = vmatpush1.msra.mxu0 %v1107
    %1407 = vmatprep.subr.mxu0 %v1114
    %1408 = vmatpush1.msra.mxu0 %v1113
    %1409 = vmatprep.subr.mxu0 %v1120
    %1410 = vmatpush1.msra.mxu0 %v1119
    %1411 = vmatprep.subr.mxu0 %v1126
    %1412 = vmatpush1.msra.mxu0 %v1125
    %1413 = vmatprep.subr.mxu0 %v1132
    %1414 = vmatpush1.msra.mxu0 %v1131
    %1415 = vmatprep.subr.mxu0 %v1138
    %1416 = vmatpush1.msra.mxu0 %v1137
    %1417 = vmatprep.subr.mxu0 %v1144
    %1418 = vmatpush1.msra.mxu0 %v1143
    %1419 = vmatprep.subr.mxu0 %v1150
    %1420 = vmatpush1.msra.mxu0 %v1149
    %1421 = vmatprep.subr.mxu0 %v1156
    %1422 = vmatpush1.msra.mxu0 %v1155
    %1423 = vmatprep.subr.mxu0 %v1162
    %1424 = vmatpush1.msra.mxu0 %v1161
    %1425 = vmatprep.subr.mxu0 %v1168
    %1426 = vmatpush1.msra.mxu0 %v1167
    %1427 = vmatprep.subr.mxu0 %v1174
    %1428 = vmatpush1.msra.mxu0 %v1173
    %1429 = vmatprep.subr.mxu0 %v1180
    %1430 = vmatpush1.msra.mxu0 %v1179
    %1431 = vmatprep.subr.mxu0 %v1186
    %1432 = vmatpush1.msra.mxu0 %v1185
    %1433 = vmatprep.subr.mxu0 %v1192
    %1434 = vmatpush1.msra.mxu0 %v1191
    %1435 = vmatprep.subr.mxu0 %v1198
    %1436 = vmatpush1.msra.mxu0 %v1197
    %1437 = vmatprep.subr.mxu0 %v1204
    %1438 = vmatpush1.msra.mxu0 %v1203
    %1439 = vmatprep.subr.mxu0 %v1210
    %1440 = vmatpush1.msra.mxu0 %v1209
    %1441 = vmatprep.subr.mxu0 %v1216
    %1442 = vmatpush1.msra.mxu0 %v1215
    %1443 = vmatprep.subr.mxu0 %v1222
    %1444 = vmatpush1.msra.mxu0 %v1221
    %1445 = vmatprep.subr.mxu0 %v1228
    %1446 = vmatpush1.msra.mxu0 %v1227
    %1447 = vmatprep.subr.mxu0 %v1234
    %1448 = vmatpush1.msra.mxu0 %v1233
    %1449 = vmatprep.subr.mxu0 %v1240
    %1450 = vmatpush1.msra.mxu0 %v1239
    %1451 = vmatprep.subr.mxu0 %v1246
    %1452 = vmatpush1.msra.mxu0 %v1245
    %1453 = vmatprep.mubr.f32.mxu0 %v1046
    %1454 = vmatmul.mubr.f32.gmra.mrb[0].mxu0 %v1045
    %v1455 = vpop.f32.mrb[0].mxu0
    %v1456 = vadd.f32 %v781, %v1455
    %v1457 = vpop.f32.mrb[0].mxu0
    %v1458 = vadd.f32 %v785, %v1457
    %1459 = vdwg.mxu0
    %v1460 = vadd.f32 %v1049, %v1314
    %v1461 = vadd.f32 %v1050, %v1316
    %v1462 = vxor.u32 %v1460, 2147483648
    %v1463 = vxor.u32 %v1461, 2147483648
    %v1464 = vmul.f32 %v1462, 1.442695
    %v1465 = vpow.pop %v1464
    %v1466 = vmul.f32 %v1463, 1.442695
    %v1467 = vpow.pop %v1466
    %v1468 = vadd.f32 %v1465, 1.0
    %v1469 = vadd.f32 %v1467, 1.0
    %v1470 = vrcp.pop %v1468
    %v1471 = vmul.f32 1.0, %v1470
    %v1472 = vrcp.pop %v1469
    %v1473 = vmul.f32 1.0, %v1472
    %v1474 = vadd.f32 %v1051, %v1385
    %v1475 = vadd.f32 %v1052, %v1387
    %v1476 = vxor.u32 %v1474, 2147483648
    %v1477 = vxor.u32 %v1475, 2147483648
    %v1478 = vmul.f32 %v1476, 1.442695
    %v1479 = vpow.pop %v1478
    %v1480 = vmul.f32 %v1477, 1.442695
    %v1481 = vpow.pop %v1480
    %v1482 = vadd.f32 %v1479, 1.0
    %v1483 = vadd.f32 %v1481, 1.0
    %v1484 = vrcp.pop %v1482
    %v1485 = vmul.f32 1.0, %v1484
    %v1486 = vrcp.pop %v1483
    %v1487 = vmul.f32 1.0, %v1486
    %v1488 = vmul.f32 %v1471, %v1456
    %v1489 = vmul.f32 %v1473, %v1458
    %v1490 = vadd.f32 %v1053, %v1488
    %v1491 = vadd.f32 %v1054, %v1489
    %v1492 = vtanh.pop %v1490
    %v1493 = vtanh.pop %v1491
    %v1494 = vsub.f32 1.0, %v1485
    %v1495 = vsub.f32 1.0, %v1487
    %v1496 = vmul.f32 %v1494, %v1492
    %v1497 = vmul.f32 %v1495, %v1493
    %v1498 = vmul.f32 %v1485, %v1045
    %v1499 = vmul.f32 %v1487, %v1046
    %v1500 = vadd.f32 %v1496, %v1498
    %v1501 = vadd.f32 %v1497, %v1499
    %1502 = vst [vmem:[#allocation9 + $0x10] sm:$0xff] %v1500
    %1503 = vst [vmem:[#allocation9 + $0x18] sm:$0xff] %v1501
    %v1504 = vld [vmem:[#allocation2 + $0x60] sm:$0xff]
    %v1505 = vld [vmem:[#allocation2 + $0x68] sm:$0xff]
    %v1506 = vld [vmem:[#allocation2 + $0x70] sm:$0xff]
    %v1507 = vld [vmem:[#allocation2 + $0x78] sm:$0xff]
    %v1508 = vld [vmem:[#allocation2 + $0x80] sm:$0xff]
    %v1509 = vld [vmem:[#allocation2 + $0x88] sm:$0xff]
    %v1510 = vld [vmem:[#allocation8] sm:$0xff]
    %v1511 = vld [vmem:[#allocation8 + $0x8] sm:$0xff]
    %v1512 = vld [vmem:[#allocation8 + $0x10] sm:$0xff]
    %v1513 = vld [vmem:[#allocation8 + $0x18] sm:$0xff]
    %v1514 = vld [vmem:[#allocation8 + $0x20] sm:$0xff]
    %v1515 = vld [vmem:[#allocation8 + $0x28] sm:$0xff]
    %v1516 = vld [vmem:[#allocation8 + $0x30] sm:$0xff]
    %v1517 = vld [vmem:[#allocation8 + $0x38] sm:$0xff]
    %v1518 = vld [vmem:[#allocation8 + $0x40] sm:$0xff]
    %v1519 = vld [vmem:[#allocation8 + $0x48] sm:$0xff]
    %v1520 = vld [vmem:[#allocation8 + $0x50] sm:$0xff]
    %v1521 = vld [vmem:[#allocation8 + $0x58] sm:$0xff]
    %v1522 = vld [vmem:[#allocation8 + $0x60] sm:$0xff]
    %v1523 = vld [vmem:[#allocation8 + $0x68] sm:$0xff]
    %v1524 = vld [vmem:[#allocation8 + $0x70] sm:$0xff]
    %v1525 = vld [vmem:[#allocation8 + $0x78] sm:$0xff]
    %v1526 = vld [vmem:[#allocation8 + $0x80] sm:$0xff]
    %v1527 = vld [vmem:[#allocation8 + $0x88] sm:$0xff]
    %v1528 = vld [vmem:[#allocation8 + $0x90] sm:$0xff]
    %v1529 = vld [vmem:[#allocation8 + $0x98] sm:$0xff]
    %v1530 = vld [vmem:[#allocation8 + $0xa0] sm:$0xff]
    %v1531 = vld [vmem:[#allocation8 + $0xa8] sm:$0xff]
    %v1532 = vld [vmem:[#allocation8 + $0xb0] sm:$0xff]
    %v1533 = vld [vmem:[#allocation8 + $0xb8] sm:$0xff]
    %v1534 = vld [vmem:[#allocation8 + $0xc0] sm:$0xff]
    %v1535 = vld [vmem:[#allocation8 + $0xc8] sm:$0xff]
    %v1536 = vld [vmem:[#allocation8 + $0xd0] sm:$0xff]
    %v1537 = vld [vmem:[#allocation8 + $0xd8] sm:$0xff]
    %v1538 = vld [vmem:[#allocation8 + $0xe0] sm:$0xff]
    %v1539 = vld [vmem:[#allocation8 + $0xe8] sm:$0xff]
    %v1540 = vld [vmem:[#allocation8 + $0xf0] sm:$0xff]
    %v1541 = vld [vmem:[#allocation8 + $0xf8] sm:$0xff]
    %v1542 = vld [vmem:[#allocation8 + $0x100] sm:$0xff]
    %v1543 = vld [vmem:[#allocation8 + $0x108] sm:$0xff]
    %v1544 = vld [vmem:[#allocation8 + $0x110] sm:$0xff]
    %v1545 = vld [vmem:[#allocation8 + $0x118] sm:$0xff]
    %v1546 = vld [vmem:[#allocation8 + $0x120] sm:$0xff]
    %v1547 = vld [vmem:[#allocation8 + $0x128] sm:$0xff]
    %v1548 = vld [vmem:[#allocation8 + $0x130] sm:$0xff]
    %v1549 = vld [vmem:[#allocation8 + $0x138] sm:$0xff]
    %v1550 = vld [vmem:[#allocation8 + $0x140] sm:$0xff]
    %v1551 = vld [vmem:[#allocation8 + $0x148] sm:$0xff]
    %v1552 = vld [vmem:[#allocation8 + $0x150] sm:$0xff]
    %v1553 = vld [vmem:[#allocation8 + $0x158] sm:$0xff]
    %v1554 = vld [vmem:[#allocation8 + $0x160] sm:$0xff]
    %v1555 = vld [vmem:[#allocation8 + $0x168] sm:$0xff]
    %v1556 = vld [vmem:[#allocation8 + $0x170] sm:$0xff]
    %v1557 = vld [vmem:[#allocation8 + $0x178] sm:$0xff]
    %v1558 = vld [vmem:[#allocation8 + $0x180] sm:$0xff]
    %v1559 = vld [vmem:[#allocation8 + $0x188] sm:$0xff]
    %v1560 = vld [vmem:[#allocation8 + $0x190] sm:$0xff]
    %v1561 = vld [vmem:[#allocation8 + $0x198] sm:$0xff]
    %v1562 = vld [vmem:[#allocation8 + $0x1a0] sm:$0xff]
    %v1563 = vld [vmem:[#allocation8 + $0x1a8] sm:$0xff]
    %v1564 = vld [vmem:[#allocation8 + $0x1b0] sm:$0xff]
    %v1565 = vld [vmem:[#allocation8 + $0x1b8] sm:$0xff]
    %v1566 = vld [vmem:[#allocation8 + $0x1c0] sm:$0xff]
    %v1567 = vld [vmem:[#allocation8 + $0x1c8] sm:$0xff]
    %v1568 = vld [vmem:[#allocation8 + $0x1d0] sm:$0xff]
    %v1569 = vld [vmem:[#allocation8 + $0x1d8] sm:$0xff]
    %v1570 = vld [vmem:[#allocation8 + $0x1e0] sm:$0xff]
    %v1571 = vld [vmem:[#allocation8 + $0x1e8] sm:$0xff]
    %v1572 = vld [vmem:[#allocation8 + $0x1f0] sm:$0xff]
    %v1573 = vld [vmem:[#allocation8 + $0x1f8] sm:$0xff]
    %v1574 = vld [vmem:[#allocation8 + $0x200] sm:$0xff]
    %v1575 = vld [vmem:[#allocation8 + $0x208] sm:$0xff]
    %v1576 = vld [vmem:[#allocation8 + $0x210] sm:$0xff]
    %v1577 = vld [vmem:[#allocation8 + $0x218] sm:$0xff]
    %v1578 = vld [vmem:[#allocation8 + $0x220] sm:$0xff]
    %v1579 = vld [vmem:[#allocation8 + $0x228] sm:$0xff]
    %v1580 = vld [vmem:[#allocation8 + $0x230] sm:$0xff]
    %v1581 = vld [vmem:[#allocation8 + $0x238] sm:$0xff]
    %v1582 = vld [vmem:[#allocation8 + $0x240] sm:$0xff]
    %v1583 = vld [vmem:[#allocation8 + $0x248] sm:$0xff]
    %v1584 = vld [vmem:[#allocation8 + $0x250] sm:$0xff]
    %v1585 = vld [vmem:[#allocation8 + $0x258] sm:$0xff]
    %v1586 = vld [vmem:[#allocation8 + $0x260] sm:$0xff]
    %v1587 = vld [vmem:[#allocation8 + $0x268] sm:$0xff]
    %v1588 = vld [vmem:[#allocation8 + $0x270] sm:$0xff]
    %v1589 = vld [vmem:[#allocation8 + $0x278] sm:$0xff]
    %v1590 = vld [vmem:[#allocation8 + $0x280] sm:$0xff]
    %v1591 = vld [vmem:[#allocation8 + $0x288] sm:$0xff]
    %v1592 = vld [vmem:[#allocation8 + $0x290] sm:$0xff]
    %v1593 = vld [vmem:[#allocation8 + $0x298] sm:$0xff]
    %v1594 = vld [vmem:[#allocation8 + $0x2a0] sm:$0xff]
    %v1595 = vld [vmem:[#allocation8 + $0x2a8] sm:$0xff]
    %v1596 = vld [vmem:[#allocation8 + $0x2b0] sm:$0xff]
    %v1597 = vld [vmem:[#allocation8 + $0x2b8] sm:$0xff]
    %v1598 = vld [vmem:[#allocation8 + $0x2c0] sm:$0xff]
    %v1599 = vld [vmem:[#allocation8 + $0x2c8] sm:$0xff]
    %v1600 = vld [vmem:[#allocation8 + $0x2d0] sm:$0xff]
    %v1601 = vld [vmem:[#allocation8 + $0x2d8] sm:$0xff]
    %v1602 = vld [vmem:[#allocation8 + $0x2e0] sm:$0xff]
    %v1603 = vld [vmem:[#allocation8 + $0x2e8] sm:$0xff]
    %v1604 = vld [vmem:[#allocation8 + $0x2f0] sm:$0xff]
    %v1605 = vld [vmem:[#allocation8 + $0x2f8] sm:$0xff]
    %v1606 = vld [vmem:[#allocation8 + $0x300] sm:$0xff]
    %v1607 = vld [vmem:[#allocation8 + $0x308] sm:$0xff]
    %v1608 = vld [vmem:[#allocation8 + $0x310] sm:$0xff]
    %v1609 = vld [vmem:[#allocation8 + $0x318] sm:$0xff]
    %v1610 = vld [vmem:[#allocation8 + $0x320] sm:$0xff]
    %v1611 = vld [vmem:[#allocation8 + $0x328] sm:$0xff]
    %v1612 = vld [vmem:[#allocation8 + $0x330] sm:$0xff]
    %v1613 = vld [vmem:[#allocation8 + $0x338] sm:$0xff]
    %v1614 = vld [vmem:[#allocation8 + $0x340] sm:$0xff]
    %v1615 = vld [vmem:[#allocation8 + $0x348] sm:$0xff]
    %v1616 = vld [vmem:[#allocation8 + $0x350] sm:$0xff]
    %v1617 = vld [vmem:[#allocation8 + $0x358] sm:$0xff]
    %v1618 = vld [vmem:[#allocation8 + $0x360] sm:$0xff]
    %v1619 = vld [vmem:[#allocation8 + $0x368] sm:$0xff]
    %v1620 = vld [vmem:[#allocation8 + $0x370] sm:$0xff]
    %v1621 = vld [vmem:[#allocation8 + $0x378] sm:$0xff]
    %v1622 = vld [vmem:[#allocation8 + $0x380] sm:$0xff]
    %v1623 = vld [vmem:[#allocation8 + $0x388] sm:$0xff]
    %v1624 = vld [vmem:[#allocation8 + $0x390] sm:$0xff]
    %v1625 = vld [vmem:[#allocation8 + $0x398] sm:$0xff]
    %v1626 = vld [vmem:[#allocation8 + $0x3a0] sm:$0xff]
    %v1627 = vld [vmem:[#allocation8 + $0x3a8] sm:$0xff]
    %v1628 = vld [vmem:[#allocation8 + $0x3b0] sm:$0xff]
    %v1629 = vld [vmem:[#allocation8 + $0x3b8] sm:$0xff]
    %v1630 = vld [vmem:[#allocation8 + $0x3c0] sm:$0xff]
    %v1631 = vld [vmem:[#allocation8 + $0x3c8] sm:$0xff]
    %v1632 = vld [vmem:[#allocation8 + $0x3d0] sm:$0xff]
    %v1633 = vld [vmem:[#allocation8 + $0x3d8] sm:$0xff]
    %v1634 = vld [vmem:[#allocation8 + $0x3e0] sm:$0xff]
    %v1635 = vld [vmem:[#allocation8 + $0x3e8] sm:$0xff]
    %v1636 = vld [vmem:[#allocation8 + $0x3f0] sm:$0xff]
    %v1637 = vld [vmem:[#allocation8 + $0x3f8] sm:$0xff]
    %v1638 = vld [vmem:[#allocation8 + $0x400] sm:$0xff]
    %v1639 = vld [vmem:[#allocation8 + $0x408] sm:$0xff]
    %v1640 = vld [vmem:[#allocation8 + $0x410] sm:$0xff]
    %v1641 = vld [vmem:[#allocation8 + $0x418] sm:$0xff]
    %v1642 = vld [vmem:[#allocation8 + $0x420] sm:$0xff]
    %v1643 = vld [vmem:[#allocation8 + $0x428] sm:$0xff]
    %v1644 = vld [vmem:[#allocation8 + $0x430] sm:$0xff]
    %v1645 = vld [vmem:[#allocation8 + $0x438] sm:$0xff]
    %v1646 = vld [vmem:[#allocation8 + $0x440] sm:$0xff]
    %v1647 = vld [vmem:[#allocation8 + $0x448] sm:$0xff]
    %v1648 = vld [vmem:[#allocation8 + $0x450] sm:$0xff]
    %v1649 = vld [vmem:[#allocation8 + $0x458] sm:$0xff]
    %v1650 = vld [vmem:[#allocation8 + $0x460] sm:$0xff]
    %v1651 = vld [vmem:[#allocation8 + $0x468] sm:$0xff]
    %v1652 = vld [vmem:[#allocation8 + $0x470] sm:$0xff]
    %v1653 = vld [vmem:[#allocation8 + $0x478] sm:$0xff]
    %v1654 = vld [vmem:[#allocation8 + $0x480] sm:$0xff]
    %v1655 = vld [vmem:[#allocation8 + $0x488] sm:$0xff]
    %v1656 = vld [vmem:[#allocation8 + $0x490] sm:$0xff]
    %v1657 = vld [vmem:[#allocation8 + $0x498] sm:$0xff]
    %v1658 = vld [vmem:[#allocation8 + $0x4a0] sm:$0xff]
    %v1659 = vld [vmem:[#allocation8 + $0x4a8] sm:$0xff]
    %v1660 = vld [vmem:[#allocation8 + $0x4b0] sm:$0xff]
    %v1661 = vld [vmem:[#allocation8 + $0x4b8] sm:$0xff]
    %v1662 = vld [vmem:[#allocation8 + $0x4c0] sm:$0xff]
    %v1663 = vld [vmem:[#allocation8 + $0x4c8] sm:$0xff]
    %v1664 = vld [vmem:[#allocation8 + $0x4d0] sm:$0xff]
    %v1665 = vld [vmem:[#allocation8 + $0x4d8] sm:$0xff]
    %v1666 = vld [vmem:[#allocation8 + $0x4e0] sm:$0xff]
    %v1667 = vld [vmem:[#allocation8 + $0x4e8] sm:$0xff]
    %v1668 = vld [vmem:[#allocation8 + $0x4f0] sm:$0xff]
    %v1669 = vld [vmem:[#allocation8 + $0x4f8] sm:$0xff]
    %v1670 = vld [vmem:[#allocation8 + $0x500] sm:$0xff]
    %v1671 = vld [vmem:[#allocation8 + $0x508] sm:$0xff]
    %v1672 = vld [vmem:[#allocation8 + $0x510] sm:$0xff]
    %v1673 = vld [vmem:[#allocation8 + $0x518] sm:$0xff]
    %v1674 = vld [vmem:[#allocation8 + $0x520] sm:$0xff]
    %v1675 = vld [vmem:[#allocation8 + $0x528] sm:$0xff]
    %v1676 = vld [vmem:[#allocation8 + $0x530] sm:$0xff]
    %v1677 = vld [vmem:[#allocation8 + $0x538] sm:$0xff]
    %v1678 = vld [vmem:[#allocation8 + $0x540] sm:$0xff]
    %v1679 = vld [vmem:[#allocation8 + $0x548] sm:$0xff]
    %v1680 = vld [vmem:[#allocation8 + $0x550] sm:$0xff]
    %v1681 = vld [vmem:[#allocation8 + $0x558] sm:$0xff]
    %v1682 = vld [vmem:[#allocation8 + $0x560] sm:$0xff]
    %v1683 = vld [vmem:[#allocation8 + $0x568] sm:$0xff]
    %v1684 = vld [vmem:[#allocation8 + $0x570] sm:$0xff]
    %v1685 = vld [vmem:[#allocation8 + $0x578] sm:$0xff]
    %v1686 = vld [vmem:[#allocation8 + $0x580] sm:$0xff]
    %v1687 = vld [vmem:[#allocation8 + $0x588] sm:$0xff]
    %v1688 = vld [vmem:[#allocation8 + $0x590] sm:$0xff]
    %v1689 = vld [vmem:[#allocation8 + $0x598] sm:$0xff]
    %v1690 = vld [vmem:[#allocation8 + $0x5a0] sm:$0xff]
    %v1691 = vld [vmem:[#allocation8 + $0x5a8] sm:$0xff]
    %v1692 = vld [vmem:[#allocation8 + $0x5b0] sm:$0xff]
    %v1693 = vld [vmem:[#allocation8 + $0x5b8] sm:$0xff]
    %v1694 = vld [vmem:[#allocation8 + $0x5c0] sm:$0xff]
    %v1695 = vld [vmem:[#allocation8 + $0x5c8] sm:$0xff]
    %v1696 = vld [vmem:[#allocation8 + $0x5d0] sm:$0xff]
    %v1697 = vld [vmem:[#allocation8 + $0x5d8] sm:$0xff]
    %v1698 = vld [vmem:[#allocation8 + $0x5e0] sm:$0xff]
    %v1699 = vld [vmem:[#allocation8 + $0x5e8] sm:$0xff]
    %v1700 = vld [vmem:[#allocation8 + $0x5f0] sm:$0xff]
    %v1701 = vld [vmem:[#allocation8 + $0x5f8] sm:$0xff]
    %1702 = vmatprep.subr.mxu0 %v1511
    %1703 = vmatpush1.msra.mxu0 %v1510
    %1704 = vmatprep.subr.mxu0 %v1517
    %1705 = vmatpush1.msra.mxu0 %v1516
    %1706 = vmatprep.subr.mxu0 %v1523
    %1707 = vmatpush1.msra.mxu0 %v1522
    %1708 = vmatprep.subr.mxu0 %v1529
    %1709 = vmatpush1.msra.mxu0 %v1528
    %1710 = vmatprep.subr.mxu0 %v1535
    %1711 = vmatpush1.msra.mxu0 %v1534
    %1712 = vmatprep.subr.mxu0 %v1541
    %1713 = vmatpush1.msra.mxu0 %v1540
    %1714 = vmatprep.subr.mxu0 %v1547
    %1715 = vmatpush1.msra.mxu0 %v1546
    %1716 = vmatprep.subr.mxu0 %v1553
    %1717 = vmatpush1.msra.mxu0 %v1552
    %1718 = vmatprep.subr.mxu0 %v1559
    %1719 = vmatpush1.msra.mxu0 %v1558
    %1720 = vmatprep.subr.mxu0 %v1565
    %1721 = vmatpush1.msra.mxu0 %v1564
    %1722 = vmatprep.subr.mxu0 %v1571
    %1723 = vmatpush1.msra.mxu0 %v1570
    %1724 = vmatprep.subr.mxu0 %v1577
    %1725 = vmatpush1.msra.mxu0 %v1576
    %1726 = vmatprep.subr.mxu0 %v1583
    %1727 = vmatpush1.msra.mxu0 %v1582
    %1728 = vmatprep.subr.mxu0 %v1589
    %1729 = vmatpush1.msra.mxu0 %v1588
    %1730 = vmatprep.subr.mxu0 %v1595
    %1731 = vmatpush1.msra.mxu0 %v1594
    %1732 = vmatprep.subr.mxu0 %v1601
    %1733 = vmatpush1.msra.mxu0 %v1600
    %1734 = vmatprep.subr.mxu0 %v1607
    %1735 = vmatpush1.msra.mxu0 %v1606
    %1736 = vmatprep.subr.mxu0 %v1613
    %1737 = vmatpush1.msra.mxu0 %v1612
    %1738 = vmatprep.subr.mxu0 %v1619
    %1739 = vmatpush1.msra.mxu0 %v1618
    %1740 = vmatprep.subr.mxu0 %v1625
    %1741 = vmatpush1.msra.mxu0 %v1624
    %1742 = vmatprep.subr.mxu0 %v1631
    %1743 = vmatpush1.msra.mxu0 %v1630
    %1744 = vmatprep.subr.mxu0 %v1637
    %1745 = vmatpush1.msra.mxu0 %v1636
    %1746 = vmatprep.subr.mxu0 %v1643
    %1747 = vmatpush1.msra.mxu0 %v1642
    %1748 = vmatprep.subr.mxu0 %v1649
    %1749 = vmatpush1.msra.mxu0 %v1648
    %1750 = vmatprep.subr.mxu0 %v1655
    %1751 = vmatpush1.msra.mxu0 %v1654
    %1752 = vmatprep.subr.mxu0 %v1661
    %1753 = vmatpush1.msra.mxu0 %v1660
    %1754 = vmatprep.subr.mxu0 %v1667
    %1755 = vmatpush1.msra.mxu0 %v1666
    %1756 = vmatprep.subr.mxu0 %v1673
    %1757 = vmatpush1.msra.mxu0 %v1672
    %1758 = vmatprep.subr.mxu0 %v1679
    %1759 = vmatpush1.msra.mxu0 %v1678
    %1760 = vmatprep.subr.mxu0 %v1685
    %1761 = vmatpush1.msra.mxu0 %v1684
    %1762 = vmatprep.subr.mxu0 %v1691
    %1763 = vmatpush1.msra.mxu0 %v1690
    %1764 = vmatprep.subr.mxu0 %v1697
    %1765 = vmatpush1.msra.mxu0 %v1696
    %1766 = vmatprep.mubr.f32.mxu0 %v1501
    %1767 = vmatmul.mubr.f32.gmra.mrb[0].mxu0 %v1500
    %v1768 = vpop.f32.mrb[0].mxu0
    %v1769 = vadd.f32 %v765, %v1768
    %v1770 = vpop.f32.mrb[0].mxu0
    %v1771 = vadd.f32 %v769, %v1770
    %1772 = vdwg.mxu0
    %1773 = vmatprep.subr.mxu0 %v1513
    %1774 = vmatpush1.msra.mxu0 %v1512
    %1775 = vmatprep.subr.mxu0 %v1519
    %1776 = vmatpush1.msra.mxu0 %v1518
    %1777 = vmatprep.subr.mxu0 %v1525
    %1778 = vmatpush1.msra.mxu0 %v1524
    %1779 = vmatprep.subr.mxu0 %v1531
    %1780 = vmatpush1.msra.mxu0 %v1530
    %1781 = vmatprep.subr.mxu0 %v1537
    %1782 = vmatpush1.msra.mxu0 %v1536
    %1783 = vmatprep.subr.mxu0 %v1543
    %1784 = vmatpush1.msra.mxu0 %v1542
    %1785 = vmatprep.subr.mxu0 %v1549
    %1786 = vmatpush1.msra.mxu0 %v1548
    %1787 = vmatprep.subr.mxu0 %v1555
    %1788 = vmatpush1.msra.mxu0 %v1554
    %1789 = vmatprep.subr.mxu0 %v1561
    %1790 = vmatpush1.msra.mxu0 %v1560
    %1791 = vmatprep.subr.mxu0 %v1567
    %1792 = vmatpush1.msra.mxu0 %v1566
    %1793 = vmatprep.subr.mxu0 %v1573
    %1794 = vmatpush1.msra.mxu0 %v1572
    %1795 = vmatprep.subr.mxu0 %v1579
    %1796 = vmatpush1.msra.mxu0 %v1578
    %1797 = vmatprep.subr.mxu0 %v1585
    %1798 = vmatpush1.msra.mxu0 %v1584
    %1799 = vmatprep.subr.mxu0 %v1591
    %1800 = vmatpush1.msra.mxu0 %v1590
    %1801 = vmatprep.subr.mxu0 %v1597
    %1802 = vmatpush1.msra.mxu0 %v1596
    %1803 = vmatprep.subr.mxu0 %v1603
    %1804 = vmatpush1.msra.mxu0 %v1602
    %1805 = vmatprep.subr.mxu0 %v1609
    %1806 = vmatpush1.msra.mxu0 %v1608
    %1807 = vmatprep.subr.mxu0 %v1615
    %1808 = vmatpush1.msra.mxu0 %v1614
    %1809 = vmatprep.subr.mxu0 %v1621
    %1810 = vmatpush1.msra.mxu0 %v1620
    %1811 = vmatprep.subr.mxu0 %v1627
    %1812 = vmatpush1.msra.mxu0 %v1626
    %1813 = vmatprep.subr.mxu0 %v1633
    %1814 = vmatpush1.msra.mxu0 %v1632
    %1815 = vmatprep.subr.mxu0 %v1639
    %1816 = vmatpush1.msra.mxu0 %v1638
    %1817 = vmatprep.subr.mxu0 %v1645
    %1818 = vmatpush1.msra.mxu0 %v1644
    %1819 = vmatprep.subr.mxu0 %v1651
    %1820 = vmatpush1.msra.mxu0 %v1650
    %1821 = vmatprep.subr.mxu0 %v1657
    %1822 = vmatpush1.msra.mxu0 %v1656
    %1823 = vmatprep.subr.mxu0 %v1663
    %1824 = vmatpush1.msra.mxu0 %v1662
    %1825 = vmatprep.subr.mxu0 %v1669
    %1826 = vmatpush1.msra.mxu0 %v1668
    %1827 = vmatprep.subr.mxu0 %v1675
    %1828 = vmatpush1.msra.mxu0 %v1674
    %1829 = vmatprep.subr.mxu0 %v1681
    %1830 = vmatpush1.msra.mxu0 %v1680
    %1831 = vmatprep.subr.mxu0 %v1687
    %1832 = vmatpush1.msra.mxu0 %v1686
    %1833 = vmatprep.subr.mxu0 %v1693
    %1834 = vmatpush1.msra.mxu0 %v1692
    %1835 = vmatprep.subr.mxu0 %v1699
    %1836 = vmatpush1.msra.mxu0 %v1698
    %1837 = vmatprep.mubr.f32.mxu0 %v1501
    %1838 = vmatmul.mubr.f32.gmra.mrb[0].mxu0 %v1500
    %v1839 = vpop.f32.mrb[0].mxu0
    %v1840 = vadd.f32 %v773, %v1839
    %v1841 = vpop.f32.mrb[0].mxu0
    %v1842 = vadd.f32 %v777, %v1841
    %1843 = vdwg.mxu0
    %1844 = vmatprep.subr.mxu0 %v1515
    %1845 = vmatpush1.msra.mxu0 %v1514
    %1846 = vmatprep.subr.mxu0 %v1521
    %1847 = vmatpush1.msra.mxu0 %v1520
    %1848 = vmatprep.subr.mxu0 %v1527
    %1849 = vmatpush1.msra.mxu0 %v1526
    %1850 = vmatprep.subr.mxu0 %v1533
    %1851 = vmatpush1.msra.mxu0 %v1532
    %1852 = vmatprep.subr.mxu0 %v1539
    %1853 = vmatpush1.msra.mxu0 %v1538
    %1854 = vmatprep.subr.mxu0 %v1545
    %1855 = vmatpush1.msra.mxu0 %v1544
    %1856 = vmatprep.subr.mxu0 %v1551
    %1857 = vmatpush1.msra.mxu0 %v1550
    %1858 = vmatprep.subr.mxu0 %v1557
    %1859 = vmatpush1.msra.mxu0 %v1556
    %1860 = vmatprep.subr.mxu0 %v1563
    %1861 = vmatpush1.msra.mxu0 %v1562
    %1862 = vmatprep.subr.mxu0 %v1569
    %1863 = vmatpush1.msra.mxu0 %v1568
    %1864 = vmatprep.subr.mxu0 %v1575
    %1865 = vmatpush1.msra.mxu0 %v1574
    %1866 = vmatprep.subr.mxu0 %v1581
    %1867 = vmatpush1.msra.mxu0 %v1580
    %1868 = vmatprep.subr.mxu0 %v1587
    %1869 = vmatpush1.msra.mxu0 %v1586
    %1870 = vmatprep.subr.mxu0 %v1593
    %1871 = vmatpush1.msra.mxu0 %v1592
    %1872 = vmatprep.subr.mxu0 %v1599
    %1873 = vmatpush1.msra.mxu0 %v1598
    %1874 = vmatprep.subr.mxu0 %v1605
    %1875 = vmatpush1.msra.mxu0 %v1604
    %1876 = vmatprep.subr.mxu0 %v1611
    %1877 = vmatpush1.msra.mxu0 %v1610
    %1878 = vmatprep.subr.mxu0 %v1617
    %1879 = vmatpush1.msra.mxu0 %v1616
    %1880 = vmatprep.subr.mxu0 %v1623
    %1881 = vmatpush1.msra.mxu0 %v1622
    %1882 = vmatprep.subr.mxu0 %v1629
    %1883 = vmatpush1.msra.mxu0 %v1628
    %1884 = vmatprep.subr.mxu0 %v1635
    %1885 = vmatpush1.msra.mxu0 %v1634
    %1886 = vmatprep.subr.mxu0 %v1641
    %1887 = vmatpush1.msra.mxu0 %v1640
    %1888 = vmatprep.subr.mxu0 %v1647
    %1889 = vmatpush1.msra.mxu0 %v1646
    %1890 = vmatprep.subr.mxu0 %v1653
    %1891 = vmatpush1.msra.mxu0 %v1652
    %1892 = vmatprep.subr.mxu0 %v1659
    %1893 = vmatpush1.msra.mxu0 %v1658
    %1894 = vmatprep.subr.mxu0 %v1665
    %1895 = vmatpush1.msra.mxu0 %v1664
    %1896 = vmatprep.subr.mxu0 %v1671
    %1897 = vmatpush1.msra.mxu0 %v1670
    %1898 = vmatprep.subr.mxu0 %v1677
    %1899 = vmatpush1.msra.mxu0 %v1676
    %1900 = vmatprep.subr.mxu0 %v1683
    %1901 = vmatpush1.msra.mxu0 %v1682
    %1902 = vmatprep.subr.mxu0 %v1689
    %1903 = vmatpush1.msra.mxu0 %v1688
    %1904 = vmatprep.subr.mxu0 %v1695
    %1905 = vmatpush1.msra.mxu0 %v1694
    %1906 = vmatprep.subr.mxu0 %v1701
    %1907 = vmatpush1.msra.mxu0 %v1700
    %1908 = vmatprep.mubr.f32.mxu0 %v1501
    %1909 = vmatmul.mubr.f32.gmra.mrb[0].mxu0 %v1500
    %v1910 = vpop.f32.mrb[0].mxu0
    %v1911 = vadd.f32 %v781, %v1910
    %v1912 = vpop.f32.mrb[0].mxu0
    %v1913 = vadd.f32 %v785, %v1912
    %1914 = vdwg.mxu0
    %v1915 = vadd.f32 %v1504, %v1769
    %v1916 = vadd.f32 %v1505, %v1771
    %v1917 = vxor.u32 %v1915, 2147483648
    %v1918 = vxor.u32 %v1916, 2147483648
    %v1919 = vmul.f32 %v1917, 1.442695
    %v1920 = vpow.pop %v1919
    %v1921 = vmul.f32 %v1918, 1.442695
    %v1922 = vpow.pop %v1921
    %v1923 = vadd.f32 %v1920, 1.0
    %v1924 = vadd.f32 %v1922, 1.0
    %v1925 = vrcp.pop %v1923
    %v1926 = vmul.f32 1.0, %v1925
    %v1927 = vrcp.pop %v1924
    %v1928 = vmul.f32 1.0, %v1927
    %v1929 = vadd.f32 %v1506, %v1840
    %v1930 = vadd.f32 %v1507, %v1842
    %v1931 = vxor.u32 %v1929, 2147483648
    %v1932 = vxor.u32 %v1930, 2147483648
    %v1933 = vmul.f32 %v1931, 1.442695
    %v1934 = vpow.pop %v1933
    %v1935 = vmul.f32 %v1932, 1.442695
    %v1936 = vpow.pop %v1935
    %v1937 = vadd.f32 %v1934, 1.0
    %v1938 = vadd.f32 %v1936, 1.0
    %v1939 = vrcp.pop %v1937
    %v1940 = vmul.f32 1.0, %v1939
    %v1941 = vrcp.pop %v1938
    %v1942 = vmul.f32 1.0, %v1941
    %v1943 = vmul.f32 %v1926, %v1911
    %v1944 = vmul.f32 %v1928, %v1913
    %v1945 = vadd.f32 %v1508, %v1943
    %v1946 = vadd.f32 %v1509, %v1944
    %v1947 = vtanh.pop %v1945
    %v1948 = vtanh.pop %v1946
    %v1949 = vsub.f32 1.0, %v1940
    %v1950 = vsub.f32 1.0, %v1942
    %v1951 = vmul.f32 %v1949, %v1947
    %v1952 = vmul.f32 %v1950, %v1948
    %v1953 = vmul.f32 %v1940, %v1500
    %v1954 = vmul.f32 %v1942, %v1501
    %v1955 = vadd.f32 %v1951, %v1953
    %v1956 = vadd.f32 %v1952, %v1954
    %1957 = vst [vmem:[#allocation9 + $0x20] sm:$0xff] %v1955
    %1958 = vst [vmem:[#allocation9 + $0x28] sm:$0xff] %v1956
    %v1959 = vld [vmem:[#allocation2 + $0x90] sm:$0xff]
    %v1960 = vld [vmem:[#allocation2 + $0x98] sm:$0xff]
    %v1961 = vld [vmem:[#allocation2 + $0xa0] sm:$0xff]
    %v1962 = vld [vmem:[#allocation2 + $0xa8] sm:$0xff]
    %v1963 = vld [vmem:[#allocation2 + $0xb0] sm:$0xff]
    %v1964 = vld [vmem:[#allocation2 + $0xb8] sm:$0xff]
    %v1965 = vld [vmem:[#allocation8] sm:$0xff]
    %v1966 = vld [vmem:[#allocation8 + $0x8] sm:$0xff]
    %v1967 = vld [vmem:[#allocation8 + $0x10] sm:$0xff]
    %v1968 = vld [vmem:[#allocation8 + $0x18] sm:$0xff]
    %v1969 = vld [vmem:[#allocation8 + $0x20] sm:$0xff]
    %v1970 = vld [vmem:[#allocation8 + $0x28] sm:$0xff]
    %v1971 = vld [vmem:[#allocation8 + $0x30] sm:$0xff]
    %v1972 = vld [vmem:[#allocation8 + $0x38] sm:$0xff]
    %v1973 = vld [vmem:[#allocation8 + $0x40] sm:$0xff]
    %v1974 = vld [vmem:[#allocation8 + $0x48] sm:$0xff]
    %v1975 = vld [vmem:[#allocation8 + $0x50] sm:$0xff]
    %v1976 = vld [vmem:[#allocation8 + $0x58] sm:$0xff]
    %v1977 = vld [vmem:[#allocation8 + $0x60] sm:$0xff]
    %v1978 = vld [vmem:[#allocation8 + $0x68] sm:$0xff]
    %v1979 = vld [vmem:[#allocation8 + $0x70] sm:$0xff]
    %v1980 = vld [vmem:[#allocation8 + $0x78] sm:$0xff]
    %v1981 = vld [vmem:[#allocation8 + $0x80] sm:$0xff]
    %v1982 = vld [vmem:[#allocation8 + $0x88] sm:$0xff]
    %v1983 = vld [vmem:[#allocation8 + $0x90] sm:$0xff]
    %v1984 = vld [vmem:[#allocation8 + $0x98] sm:$0xff]
    %v1985 = vld [vmem:[#allocation8 + $0xa0] sm:$0xff]
    %v1986 = vld [vmem:[#allocation8 + $0xa8] sm:$0xff]
    %v1987 = vld [vmem:[#allocation8 + $0xb0] sm:$0xff]
    %v1988 = vld [vmem:[#allocation8 + $0xb8] sm:$0xff]
    %v1989 = vld [vmem:[#allocation8 + $0xc0] sm:$0xff]
    %v1990 = vld [vmem:[#allocation8 + $0xc8] sm:$0xff]
    %v1991 = vld [vmem:[#allocation8 + $0xd0] sm:$0xff]
    %v1992 = vld [vmem:[#allocation8 + $0xd8] sm:$0xff]
    %v1993 = vld [vmem:[#allocation8 + $0xe0] sm:$0xff]
    %v1994 = vld [vmem:[#allocation8 + $0xe8] sm:$0xff]
    %v1995 = vld [vmem:[#allocation8 + $0xf0] sm:$0xff]
    %v1996 = vld [vmem:[#allocation8 + $0xf8] sm:$0xff]
    %v1997 = vld [vmem:[#allocation8 + $0x100] sm:$0xff]
    %v1998 = vld [vmem:[#allocation8 + $0x108] sm:$0xff]
    %v1999 = vld [vmem:[#allocation8 + $0x110] sm:$0xff]
    %v2000 = vld [vmem:[#allocation8 + $0x118] sm:$0xff]
    %v2001 = vld [vmem:[#allocation8 + $0x120] sm:$0xff]
    %v2002 = vld [vmem:[#allocation8 + $0x128] sm:$0xff]
    %v2003 = vld [vmem:[#allocation8 + $0x130] sm:$0xff]
    %v2004 = vld [vmem:[#allocation8 + $0x138] sm:$0xff]
    %v2005 = vld [vmem:[#allocation8 + $0x140] sm:$0xff]
    %v2006 = vld [vmem:[#allocation8 + $0x148] sm:$0xff]
    %v2007 = vld [vmem:[#allocation8 + $0x150] sm:$0xff]
    %v2008 = vld [vmem:[#allocation8 + $0x158] sm:$0xff]
    %v2009 = vld [vmem:[#allocation8 + $0x160] sm:$0xff]
    %v2010 = vld [vmem:[#allocation8 + $0x168] sm:$0xff]
    %v2011 = vld [vmem:[#allocation8 + $0x170] sm:$0xff]
    %v2012 = vld [vmem:[#allocation8 + $0x178] sm:$0xff]
    %v2013 = vld [vmem:[#allocation8 + $0x180] sm:$0xff]
    %v2014 = vld [vmem:[#allocation8 + $0x188] sm:$0xff]
    %v2015 = vld [vmem:[#allocation8 + $0x190] sm:$0xff]
    %v2016 = vld [vmem:[#allocation8 + $0x198] sm:$0xff]
    %v2017 = vld [vmem:[#allocation8 + $0x1a0] sm:$0xff]
    %v2018 = vld [vmem:[#allocation8 + $0x1a8] sm:$0xff]
    %v2019 = vld [vmem:[#allocation8 + $0x1b0] sm:$0xff]
    %v2020 = vld [vmem:[#allocation8 + $0x1b8] sm:$0xff]
    %v2021 = vld [vmem:[#allocation8 + $0x1c0] sm:$0xff]
    %v2022 = vld [vmem:[#allocation8 + $0x1c8] sm:$0xff]
    %v2023 = vld [vmem:[#allocation8 + $0x1d0] sm:$0xff]
    %v2024 = vld [vmem:[#allocation8 + $0x1d8] sm:$0xff]
    %v2025 = vld [vmem:[#allocation8 + $0x1e0] sm:$0xff]
    %v2026 = vld [vmem:[#allocation8 + $0x1e8] sm:$0xff]
    %v2027 = vld [vmem:[#allocation8 + $0x1f0] sm:$0xff]
    %v2028 = vld [vmem:[#allocation8 + $0x1f8] sm:$0xff]
    %v2029 = vld [vmem:[#allocation8 + $0x200] sm:$0xff]
    %v2030 = vld [vmem:[#allocation8 + $0x208] sm:$0xff]
    %v2031 = vld [vmem:[#allocation8 + $0x210] sm:$0xff]
    %v2032 = vld [vmem:[#allocation8 + $0x218] sm:$0xff]
    %v2033 = vld [vmem:[#allocation8 + $0x220] sm:$0xff]
    %v2034 = vld [vmem:[#allocation8 + $0x228] sm:$0xff]
    %v2035 = vld [vmem:[#allocation8 + $0x230] sm:$0xff]
    %v2036 = vld [vmem:[#allocation8 + $0x238] sm:$0xff]
    %v2037 = vld [vmem:[#allocation8 + $0x240] sm:$0xff]
    %v2038 = vld [vmem:[#allocation8 + $0x248] sm:$0xff]
    %v2039 = vld [vmem:[#allocation8 + $0x250] sm:$0xff]
    %v2040 = vld [vmem:[#allocation8 + $0x258] sm:$0xff]
    %v2041 = vld [vmem:[#allocation8 + $0x260] sm:$0xff]
    %v2042 = vld [vmem:[#allocation8 + $0x268] sm:$0xff]
    %v2043 = vld [vmem:[#allocation8 + $0x270] sm:$0xff]
    %v2044 = vld [vmem:[#allocation8 + $0x278] sm:$0xff]
    %v2045 = vld [vmem:[#allocation8 + $0x280] sm:$0xff]
    %v2046 = vld [vmem:[#allocation8 + $0x288] sm:$0xff]
    %v2047 = vld [vmem:[#allocation8 + $0x290] sm:$0xff]
    %v2048 = vld [vmem:[#allocation8 + $0x298] sm:$0xff]
    %v2049 = vld [vmem:[#allocation8 + $0x2a0] sm:$0xff]
    %v2050 = vld [vmem:[#allocation8 + $0x2a8] sm:$0xff]
    %v2051 = vld [vmem:[#allocation8 + $0x2b0] sm:$0xff]
    %v2052 = vld [vmem:[#allocation8 + $0x2b8] sm:$0xff]
    %v2053 = vld [vmem:[#allocation8 + $0x2c0] sm:$0xff]
    %v2054 = vld [vmem:[#allocation8 + $0x2c8] sm:$0xff]
    %v2055 = vld [vmem:[#allocation8 + $0x2d0] sm:$0xff]
    %v2056 = vld [vmem:[#allocation8 + $0x2d8] sm:$0xff]
    %v2057 = vld [vmem:[#allocation8 + $0x2e0] sm:$0xff]
    %v2058 = vld [vmem:[#allocation8 + $0x2e8] sm:$0xff]
    %v2059 = vld [vmem:[#allocation8 + $0x2f0] sm:$0xff]
    %v2060 = vld [vmem:[#allocation8 + $0x2f8] sm:$0xff]
    %v2061 = vld [vmem:[#allocation8 + $0x300] sm:$0xff]
    %v2062 = vld [vmem:[#allocation8 + $0x308] sm:$0xff]
    %v2063 = vld [vmem:[#allocation8 + $0x310] sm:$0xff]
    %v2064 = vld [vmem:[#allocation8 + $0x318] sm:$0xff]
    %v2065 = vld [vmem:[#allocation8 + $0x320] sm:$0xff]
    %v2066 = vld [vmem:[#allocation8 + $0x328] sm:$0xff]
    %v2067 = vld [vmem:[#allocation8 + $0x330] sm:$0xff]
    %v2068 = vld [vmem:[#allocation8 + $0x338] sm:$0xff]
    %v2069 = vld [vmem:[#allocation8 + $0x340] sm:$0xff]
    %v2070 = vld [vmem:[#allocation8 + $0x348] sm:$0xff]
    %v2071 = vld [vmem:[#allocation8 + $0x350] sm:$0xff]
    %v2072 = vld [vmem:[#allocation8 + $0x358] sm:$0xff]
    %v2073 = vld [vmem:[#allocation8 + $0x360] sm:$0xff]
    %v2074 = vld [vmem:[#allocation8 + $0x368] sm:$0xff]
    %v2075 = vld [vmem:[#allocation8 + $0x370] sm:$0xff]
    %v2076 = vld [vmem:[#allocation8 + $0x378] sm:$0xff]
    %v2077 = vld [vmem:[#allocation8 + $0x380] sm:$0xff]
    %v2078 = vld [vmem:[#allocation8 + $0x388] sm:$0xff]
    %v2079 = vld [vmem:[#allocation8 + $0x390] sm:$0xff]
    %v2080 = vld [vmem:[#allocation8 + $0x398] sm:$0xff]
    %v2081 = vld [vmem:[#allocation8 + $0x3a0] sm:$0xff]
    %v2082 = vld [vmem:[#allocation8 + $0x3a8] sm:$0xff]
    %v2083 = vld [vmem:[#allocation8 + $0x3b0] sm:$0xff]
    %v2084 = vld [vmem:[#allocation8 + $0x3b8] sm:$0xff]
    %v2085 = vld [vmem:[#allocation8 + $0x3c0] sm:$0xff]
    %v2086 = vld [vmem:[#allocation8 + $0x3c8] sm:$0xff]
    %v2087 = vld [vmem:[#allocation8 + $0x3d0] sm:$0xff]
    %v2088 = vld [vmem:[#allocation8 + $0x3d8] sm:$0xff]
    %v2089 = vld [vmem:[#allocation8 + $0x3e0] sm:$0xff]
    %v2090 = vld [vmem:[#allocation8 + $0x3e8] sm:$0xff]
    %v2091 = vld [vmem:[#allocation8 + $0x3f0] sm:$0xff]
    %v2092 = vld [vmem:[#allocation8 + $0x3f8] sm:$0xff]
    %v2093 = vld [vmem:[#allocation8 + $0x400] sm:$0xff]
    %v2094 = vld [vmem:[#allocation8 + $0x408] sm:$0xff]
    %v2095 = vld [vmem:[#allocation8 + $0x410] sm:$0xff]
    %v2096 = vld [vmem:[#allocation8 + $0x418] sm:$0xff]
    %v2097 = vld [vmem:[#allocation8 + $0x420] sm:$0xff]
    %v2098 = vld [vmem:[#allocation8 + $0x428] sm:$0xff]
    %v2099 = vld [vmem:[#allocation8 + $0x430] sm:$0xff]
    %v2100 = vld [vmem:[#allocation8 + $0x438] sm:$0xff]
    %v2101 = vld [vmem:[#allocation8 + $0x440] sm:$0xff]
    %v2102 = vld [vmem:[#allocation8 + $0x448] sm:$0xff]
    %v2103 = vld [vmem:[#allocation8 + $0x450] sm:$0xff]
    %v2104 = vld [vmem:[#allocation8 + $0x458] sm:$0xff]
    %v2105 = vld [vmem:[#allocation8 + $0x460] sm:$0xff]
    %v2106 = vld [vmem:[#allocation8 + $0x468] sm:$0xff]
    %v2107 = vld [vmem:[#allocation8 + $0x470] sm:$0xff]
    %v2108 = vld [vmem:[#allocation8 + $0x478] sm:$0xff]
    %v2109 = vld [vmem:[#allocation8 + $0x480] sm:$0xff]
    %v2110 = vld [vmem:[#allocation8 + $0x488] sm:$0xff]
    %v2111 = vld [vmem:[#allocation8 + $0x490] sm:$0xff]
    %v2112 = vld [vmem:[#allocation8 + $0x498] sm:$0xff]
    %v2113 = vld [vmem:[#allocation8 + $0x4a0] sm:$0xff]
    %v2114 = vld [vmem:[#allocation8 + $0x4a8] sm:$0xff]
    %v2115 = vld [vmem:[#allocation8 + $0x4b0] sm:$0xff]
    %v2116 = vld [vmem:[#allocation8 + $0x4b8] sm:$0xff]
    %v2117 = vld [vmem:[#allocation8 + $0x4c0] sm:$0xff]
    %v2118 = vld [vmem:[#allocation8 + $0x4c8] sm:$0xff]
    %v2119 = vld [vmem:[#allocation8 + $0x4d0] sm:$0xff]
    %v2120 = vld [vmem:[#allocation8 + $0x4d8] sm:$0xff]
    %v2121 = vld [vmem:[#allocation8 + $0x4e0] sm:$0xff]
    %v2122 = vld [vmem:[#allocation8 + $0x4e8] sm:$0xff]
    %v2123 = vld [vmem:[#allocation8 + $0x4f0] sm:$0xff]
    %v2124 = vld [vmem:[#allocation8 + $0x4f8] sm:$0xff]
    %v2125 = vld [vmem:[#allocation8 + $0x500] sm:$0xff]
    %v2126 = vld [vmem:[#allocation8 + $0x508] sm:$0xff]
    %v2127 = vld [vmem:[#allocation8 + $0x510] sm:$0xff]
    %v2128 = vld [vmem:[#allocation8 + $0x518] sm:$0xff]
    %v2129 = vld [vmem:[#allocation8 + $0x520] sm:$0xff]
    %v2130 = vld [vmem:[#allocation8 + $0x528] sm:$0xff]
    %v2131 = vld [vmem:[#allocation8 + $0x530] sm:$0xff]
    %v2132 = vld [vmem:[#allocation8 + $0x538] sm:$0xff]
    %v2133 = vld [vmem:[#allocation8 + $0x540] sm:$0xff]
    %v2134 = vld [vmem:[#allocation8 + $0x548] sm:$0xff]
    %v2135 = vld [vmem:[#allocation8 + $0x550] sm:$0xff]
    %v2136 = vld [vmem:[#allocation8 + $0x558] sm:$0xff]
    %v2137 = vld [vmem:[#allocation8 + $0x560] sm:$0xff]
    %v2138 = vld [vmem:[#allocation8 + $0x568] sm:$0xff]
    %v2139 = vld [vmem:[#allocation8 + $0x570] sm:$0xff]
    %v2140 = vld [vmem:[#allocation8 + $0x578] sm:$0xff]
    %v2141 = vld [vmem:[#allocation8 + $0x580] sm:$0xff]
    %v2142 = vld [vmem:[#allocation8 + $0x588] sm:$0xff]
    %v2143 = vld [vmem:[#allocation8 + $0x590] sm:$0xff]
    %v2144 = vld [vmem:[#allocation8 + $0x598] sm:$0xff]
    %v2145 = vld [vmem:[#allocation8 + $0x5a0] sm:$0xff]
    %v2146 = vld [vmem:[#allocation8 + $0x5a8] sm:$0xff]
    %v2147 = vld [vmem:[#allocation8 + $0x5b0] sm:$0xff]
    %v2148 = vld [vmem:[#allocation8 + $0x5b8] sm:$0xff]
    %v2149 = vld [vmem:[#allocation8 + $0x5c0] sm:$0xff]
    %v2150 = vld [vmem:[#allocation8 + $0x5c8] sm:$0xff]
    %v2151 = vld [vmem:[#allocation8 + $0x5d0] sm:$0xff]
    %v2152 = vld [vmem:[#allocation8 + $0x5d8] sm:$0xff]
    %v2153 = vld [vmem:[#allocation8 + $0x5e0] sm:$0xff]
    %v2154 = vld [vmem:[#allocation8 + $0x5e8] sm:$0xff]
    %v2155 = vld [vmem:[#allocation8 + $0x5f0] sm:$0xff]
    %v2156 = vld [vmem:[#allocation8 + $0x5f8] sm:$0xff]
    %2157 = vmatprep.subr.mxu0 %v1966
    %2158 = vmatpush1.msra.mxu0 %v1965
    %2159 = vmatprep.subr.mxu0 %v1972
    %2160 = vmatpush1.msra.mxu0 %v1971
    %2161 = vmatprep.subr.mxu0 %v1978
    %2162 = vmatpush1.msra.mxu0 %v1977
    %2163 = vmatprep.subr.mxu0 %v1984
    %2164 = vmatpush1.msra.mxu0 %v1983
    %2165 = vmatprep.subr.mxu0 %v1990
    %2166 = vmatpush1.msra.mxu0 %v1989
    %2167 = vmatprep.subr.mxu0 %v1996
    %2168 = vmatpush1.msra.mxu0 %v1995
    %2169 = vmatprep.subr.mxu0 %v2002
    %2170 = vmatpush1.msra.mxu0 %v2001
    %2171 = vmatprep.subr.mxu0 %v2008
    %2172 = vmatpush1.msra.mxu0 %v2007
    %2173 = vmatprep.subr.mxu0 %v2014
    %2174 = vmatpush1.msra.mxu0 %v2013
    %2175 = vmatprep.subr.mxu0 %v2020
    %2176 = vmatpush1.msra.mxu0 %v2019
    %2177 = vmatprep.subr.mxu0 %v2026
    %2178 = vmatpush1.msra.mxu0 %v2025
    %2179 = vmatprep.subr.mxu0 %v2032
    %2180 = vmatpush1.msra.mxu0 %v2031
    %2181 = vmatprep.subr.mxu0 %v2038
    %2182 = vmatpush1.msra.mxu0 %v2037
    %2183 = vmatprep.subr.mxu0 %v2044
    %2184 = vmatpush1.msra.mxu0 %v2043
    %2185 = vmatprep.subr.mxu0 %v2050
    %2186 = vmatpush1.msra.mxu0 %v2049
    %2187 = vmatprep.subr.mxu0 %v2056
    %2188 = vmatpush1.msra.mxu0 %v2055
    %2189 = vmatprep.subr.mxu0 %v2062
    %2190 = vmatpush1.msra.mxu0 %v2061
    %2191 = vmatprep.subr.mxu0 %v2068
    %2192 = vmatpush1.msra.mxu0 %v2067
    %2193 = vmatprep.subr.mxu0 %v2074
    %2194 = vmatpush1.msra.mxu0 %v2073
    %2195 = vmatprep.subr.mxu0 %v2080
    %2196 = vmatpush1.msra.mxu0 %v2079
    %2197 = vmatprep.subr.mxu0 %v2086
    %2198 = vmatpush1.msra.mxu0 %v2085
    %2199 = vmatprep.subr.mxu0 %v2092
    %2200 = vmatpush1.msra.mxu0 %v2091
    %2201 = vmatprep.subr.mxu0 %v2098
    %2202 = vmatpush1.msra.mxu0 %v2097
    %2203 = vmatprep.subr.mxu0 %v2104
    %2204 = vmatpush1.msra.mxu0 %v2103
    %2205 = vmatprep.subr.mxu0 %v2110
    %2206 = vmatpush1.msra.mxu0 %v2109
    %2207 = vmatprep.subr.mxu0 %v2116
    %2208 = vmatpush1.msra.mxu0 %v2115
    %2209 = vmatprep.subr.mxu0 %v2122
    %2210 = vmatpush1.msra.mxu0 %v2121
    %2211 = vmatprep.subr.mxu0 %v2128
    %2212 = vmatpush1.msra.mxu0 %v2127
    %2213 = vmatprep.subr.mxu0 %v2134
    %2214 = vmatpush1.msra.mxu0 %v2133
    %2215 = vmatprep.subr.mxu0 %v2140
    %2216 = vmatpush1.msra.mxu0 %v2139
    %2217 = vmatprep.subr.mxu0 %v2146
    %2218 = vmatpush1.msra.mxu0 %v2145
    %2219 = vmatprep.subr.mxu0 %v2152
    %2220 = vmatpush1.msra.mxu0 %v2151
    %2221 = vmatprep.mubr.f32.mxu0 %v1956
    %2222 = vmatmul.mubr.f32.gmra.mrb[0].mxu0 %v1955
    %v2223 = vpop.f32.mrb[0].mxu0
    %v2224 = vadd.f32 %v765, %v2223
    %v2225 = vpop.f32.mrb[0].mxu0
    %v2226 = vadd.f32 %v769, %v2225
    %2227 = vdwg.mxu0
    %2228 = vmatprep.subr.mxu0 %v1968
    %2229 = vmatpush1.msra.mxu0 %v1967
    %2230 = vmatprep.subr.mxu0 %v1974
    %2231 = vmatpush1.msra.mxu0 %v1973
    %2232 = vmatprep.subr.mxu0 %v1980
    %2233 = vmatpush1.msra.mxu0 %v1979
    %2234 = vmatprep.subr.mxu0 %v1986
    %2235 = vmatpush1.msra.mxu0 %v1985
    %2236 = vmatprep.subr.mxu0 %v1992
    %2237 = vmatpush1.msra.mxu0 %v1991
    %2238 = vmatprep.subr.mxu0 %v1998
    %2239 = vmatpush1.msra.mxu0 %v1997
    %2240 = vmatprep.subr.mxu0 %v2004
    %2241 = vmatpush1.msra.mxu0 %v2003
    %2242 = vmatprep.subr.mxu0 %v2010
    %2243 = vmatpush1.msra.mxu0 %v2009
    %2244 = vmatprep.subr.mxu0 %v2016
    %2245 = vmatpush1.msra.mxu0 %v2015
    %2246 = vmatprep.subr.mxu0 %v2022
    %2247 = vmatpush1.msra.mxu0 %v2021
    %2248 = vmatprep.subr.mxu0 %v2028
    %2249 = vmatpush1.msra.mxu0 %v2027
    %2250 = vmatprep.subr.mxu0 %v2034
    %2251 = vmatpush1.msra.mxu0 %v2033
    %2252 = vmatprep.subr.mxu0 %v2040
    %2253 = vmatpush1.msra.mxu0 %v2039
    %2254 = vmatprep.subr.mxu0 %v2046
    %2255 = vmatpush1.msra.mxu0 %v2045
    %2256 = vmatprep.subr.mxu0 %v2052
    %2257 = vmatpush1.msra.mxu0 %v2051
    %2258 = vmatprep.subr.mxu0 %v2058
    %2259 = vmatpush1.msra.mxu0 %v2057
    %2260 = vmatprep.subr.mxu0 %v2064
    %2261 = vmatpush1.msra.mxu0 %v2063
    %2262 = vmatprep.subr.mxu0 %v2070
    %2263 = vmatpush1.msra.mxu0 %v2069
    %2264 = vmatprep.subr.mxu0 %v2076
    %2265 = vmatpush1.msra.mxu0 %v2075
    %2266 = vmatprep.subr.mxu0 %v2082
    %2267 = vmatpush1.msra.mxu0 %v2081
    %2268 = vmatprep.subr.mxu0 %v2088
    %2269 = vmatpush1.msra.mxu0 %v2087
    %2270 = vmatprep.subr.mxu0 %v2094
    %2271 = vmatpush1.msra.mxu0 %v2093
    %2272 = vmatprep.subr.mxu0 %v2100
    %2273 = vmatpush1.msra.mxu0 %v2099
    %2274 = vmatprep.subr.mxu0 %v2106
    %2275 = vmatpush1.msra.mxu0 %v2105
    %2276 = vmatprep.subr.mxu0 %v2112
    %2277 = vmatpush1.msra.mxu0 %v2111
    %2278 = vmatprep.subr.mxu0 %v2118
    %2279 = vmatpush1.msra.mxu0 %v2117
    %2280 = vmatprep.subr.mxu0 %v2124
    %2281 = vmatpush1.msra.mxu0 %v2123
    %2282 = vmatprep.subr.mxu0 %v2130
    %2283 = vmatpush1.msra.mxu0 %v2129
    %2284 = vmatprep.subr.mxu0 %v2136
    %2285 = vmatpush1.msra.mxu0 %v2135
    %2286 = vmatprep.subr.mxu0 %v2142
    %2287 = vmatpush1.msra.mxu0 %v2141
    %2288 = vmatprep.subr.mxu0 %v2148
    %2289 = vmatpush1.msra.mxu0 %v2147
    %2290 = vmatprep.subr.mxu0 %v2154
    %2291 = vmatpush1.msra.mxu0 %v2153
    %2292 = vmatprep.mubr.f32.mxu0 %v1956
    %2293 = vmatmul.mubr.f32.gmra.mrb[0].mxu0 %v1955
    %v2294 = vpop.f32.mrb[0].mxu0
    %v2295 = vadd.f32 %v773, %v2294
    %v2296 = vpop.f32.mrb[0].mxu0
    %v2297 = vadd.f32 %v777, %v2296
    %2298 = vdwg.mxu0
    %2299 = vmatprep.subr.mxu0 %v1970
    %2300 = vmatpush1.msra.mxu0 %v1969
    %2301 = vmatprep.subr.mxu0 %v1976
    %2302 = vmatpush1.msra.mxu0 %v1975
    %2303 = vmatprep.subr.mxu0 %v1982
    %2304 = vmatpush1.msra.mxu0 %v1981
    %2305 = vmatprep.subr.mxu0 %v1988
    %2306 = vmatpush1.msra.mxu0 %v1987
    %2307 = vmatprep.subr.mxu0 %v1994
    %2308 = vmatpush1.msra.mxu0 %v1993
    %2309 = vmatprep.subr.mxu0 %v2000
    %2310 = vmatpush1.msra.mxu0 %v1999
    %2311 = vmatprep.subr.mxu0 %v2006
    %2312 = vmatpush1.msra.mxu0 %v2005
    %2313 = vmatprep.subr.mxu0 %v2012
    %2314 = vmatpush1.msra.mxu0 %v2011
    %2315 = vmatprep.subr.mxu0 %v2018
    %2316 = vmatpush1.msra.mxu0 %v2017
    %2317 = vmatprep.subr.mxu0 %v2024
    %2318 = vmatpush1.msra.mxu0 %v2023
    %2319 = vmatprep.subr.mxu0 %v2030
    %2320 = vmatpush1.msra.mxu0 %v2029
    %2321 = vmatprep.subr.mxu0 %v2036
    %2322 = vmatpush1.msra.mxu0 %v2035
    %2323 = vmatprep.subr.mxu0 %v2042
    %2324 = vmatpush1.msra.mxu0 %v2041
    %2325 = vmatprep.subr.mxu0 %v2048
    %2326 = vmatpush1.msra.mxu0 %v2047
    %2327 = vmatprep.subr.mxu0 %v2054
    %2328 = vmatpush1.msra.mxu0 %v2053
    %2329 = vmatprep.subr.mxu0 %v2060
    %2330 = vmatpush1.msra.mxu0 %v2059
    %2331 = vmatprep.subr.mxu0 %v2066
    %2332 = vmatpush1.msra.mxu0 %v2065
    %2333 = vmatprep.subr.mxu0 %v2072
    %2334 = vmatpush1.msra.mxu0 %v2071
    %2335 = vmatprep.subr.mxu0 %v2078
    %2336 = vmatpush1.msra.mxu0 %v2077
    %2337 = vmatprep.subr.mxu0 %v2084
    %2338 = vmatpush1.msra.mxu0 %v2083
    %2339 = vmatprep.subr.mxu0 %v2090
    %2340 = vmatpush1.msra.mxu0 %v2089
    %2341 = vmatprep.subr.mxu0 %v2096
    %2342 = vmatpush1.msra.mxu0 %v2095
    %2343 = vmatprep.subr.mxu0 %v2102
    %2344 = vmatpush1.msra.mxu0 %v2101
    %2345 = vmatprep.subr.mxu0 %v2108
    %2346 = vmatpush1.msra.mxu0 %v2107
    %2347 = vmatprep.subr.mxu0 %v2114
    %2348 = vmatpush1.msra.mxu0 %v2113
    %2349 = vmatprep.subr.mxu0 %v2120
    %2350 = vmatpush1.msra.mxu0 %v2119
    %2351 = vmatprep.subr.mxu0 %v2126
    %2352 = vmatpush1.msra.mxu0 %v2125
    %2353 = vmatprep.subr.mxu0 %v2132
    %2354 = vmatpush1.msra.mxu0 %v2131
    %2355 = vmatprep.subr.mxu0 %v2138
    %2356 = vmatpush1.msra.mxu0 %v2137
    %2357 = vmatprep.subr.mxu0 %v2144
    %2358 = vmatpush1.msra.mxu0 %v2143
    %2359 = vmatprep.subr.mxu0 %v2150
    %2360 = vmatpush1.msra.mxu0 %v2149
    %2361 = vmatprep.subr.mxu0 %v2156
    %2362 = vmatpush1.msra.mxu0 %v2155
    %2363 = vmatprep.mubr.f32.mxu0 %v1956
    %2364 = vmatmul.mubr.f32.gmra.mrb[0].mxu0 %v1955
    %v2365 = vpop.f32.mrb[0].mxu0
    %v2366 = vadd.f32 %v781, %v2365
    %v2367 = vpop.f32.mrb[0].mxu0
    %v2368 = vadd.f32 %v785, %v2367
    %2369 = vdwg.mxu0
    %v2370 = vadd.f32 %v1959, %v2224
    %v2371 = vadd.f32 %v1960, %v2226
    %v2372 = vxor.u32 %v2370, 2147483648
    %v2373 = vxor.u32 %v2371, 2147483648
    %v2374 = vmul.f32 %v2372, 1.442695
    %v2375 = vpow.pop %v2374
    %v2376 = vmul.f32 %v2373, 1.442695
    %v2377 = vpow.pop %v2376
    %v2378 = vadd.f32 %v2375, 1.0
    %v2379 = vadd.f32 %v2377, 1.0
    %v2380 = vrcp.pop %v2378
    %v2381 = vmul.f32 1.0, %v2380
    %v2382 = vrcp.pop %v2379
    %v2383 = vmul.f32 1.0, %v2382
    %v2384 = vadd.f32 %v1961, %v2295
    %v2385 = vadd.f32 %v1962, %v2297
    %v2386 = vxor.u32 %v2384, 2147483648
    %v2387 = vxor.u32 %v2385, 2147483648
    %v2388 = vmul.f32 %v2386, 1.442695
    %v2389 = vpow.pop %v2388
    %v2390 = vmul.f32 %v2387, 1.442695
    %v2391 = vpow.pop %v2390
    %v2392 = vadd.f32 %v2389, 1.0
    %v2393 = vadd.f32 %v2391, 1.0
    %v2394 = vrcp.pop %v2392
    %v2395 = vmul.f32 1.0, %v2394
    %v2396 = vrcp.pop %v2393
    %v2397 = vmul.f32 1.0, %v2396
    %v2398 = vmul.f32 %v2381, %v2366
    %v2399 = vmul.f32 %v2383, %v2368
    %v2400 = vadd.f32 %v1963, %v2398
    %v2401 = vadd.f32 %v1964, %v2399
    %v2402 = vtanh.pop %v2400
    %v2403 = vtanh.pop %v2401
    %v2404 = vsub.f32 1.0, %v2395
    %v2405 = vsub.f32 1.0, %v2397
    %v2406 = vmul.f32 %v2404, %v2402
    %v2407 = vmul.f32 %v2405, %v2403
    %v2408 = vmul.f32 %v2395, %v1955
    %v2409 = vmul.f32 %v2397, %v1956
    %v2410 = vadd.f32 %v2406, %v2408
    %v2411 = vadd.f32 %v2407, %v2409
    %2412 = vst [vmem:[#allocation9 + $0x30] sm:$0xff] %v2410
    %2413 = vst [vmem:[#allocation9 + $0x38] sm:$0xff] %v2411
    %v2414 = vld [vmem:[#allocation2 + $0xc0] sm:$0xff]
    %v2415 = vld [vmem:[#allocation2 + $0xc8] sm:$0xff]
    %v2416 = vld [vmem:[#allocation2 + $0xd0] sm:$0xff]
    %v2417 = vld [vmem:[#allocation2 + $0xd8] sm:$0xff]
    %v2418 = vld [vmem:[#allocation2 + $0xe0] sm:$0xff]
    %v2419 = vld [vmem:[#allocation2 + $0xe8] sm:$0xff]
    %v2420 = vld [vmem:[#allocation8] sm:$0xff]
    %v2421 = vld [vmem:[#allocation8 + $0x8] sm:$0xff]
    %v2422 = vld [vmem:[#allocation8 + $0x10] sm:$0xff]
    %v2423 = vld [vmem:[#allocation8 + $0x18] sm:$0xff]
    %v2424 = vld [vmem:[#allocation8 + $0x20] sm:$0xff]
    %v2425 = vld [vmem:[#allocation8 + $0x28] sm:$0xff]
    %v2426 = vld [vmem:[#allocation8 + $0x30] sm:$0xff]
    %v2427 = vld [vmem:[#allocation8 + $0x38] sm:$0xff]
    %v2428 = vld [vmem:[#allocation8 + $0x40] sm:$0xff]
    %v2429 = vld [vmem:[#allocation8 + $0x48] sm:$0xff]
    %v2430 = vld [vmem:[#allocation8 + $0x50] sm:$0xff]
    %v2431 = vld [vmem:[#allocation8 + $0x58] sm:$0xff]
    %v2432 = vld [vmem:[#allocation8 + $0x60] sm:$0xff]
    %v2433 = vld [vmem:[#allocation8 + $0x68] sm:$0xff]
    %v2434 = vld [vmem:[#allocation8 + $0x70] sm:$0xff]
    %v2435 = vld [vmem:[#allocation8 + $0x78] sm:$0xff]
    %v2436 = vld [vmem:[#allocation8 + $0x80] sm:$0xff]
    %v2437 = vld [vmem:[#allocation8 + $0x88] sm:$0xff]
    %v2438 = vld [vmem:[#allocation8 + $0x90] sm:$0xff]
    %v2439 = vld [vmem:[#allocation8 + $0x98] sm:$0xff]
    %v2440 = vld [vmem:[#allocation8 + $0xa0] sm:$0xff]
    %v2441 = vld [vmem:[#allocation8 + $0xa8] sm:$0xff]
    %v2442 = vld [vmem:[#allocation8 + $0xb0] sm:$0xff]
    %v2443 = vld [vmem:[#allocation8 + $0xb8] sm:$0xff]
    %v2444 = vld [vmem:[#allocation8 + $0xc0] sm:$0xff]
    %v2445 = vld [vmem:[#allocation8 + $0xc8] sm:$0xff]
    %v2446 = vld [vmem:[#allocation8 + $0xd0] sm:$0xff]
    %v2447 = vld [vmem:[#allocation8 + $0xd8] sm:$0xff]
    %v2448 = vld [vmem:[#allocation8 + $0xe0] sm:$0xff]
    %v2449 = vld [vmem:[#allocation8 + $0xe8] sm:$0xff]
    %v2450 = vld [vmem:[#allocation8 + $0xf0] sm:$0xff]
    %v2451 = vld [vmem:[#allocation8 + $0xf8] sm:$0xff]
    %v2452 = vld [vmem:[#allocation8 + $0x100] sm:$0xff]
    %v2453 = vld [vmem:[#allocation8 + $0x108] sm:$0xff]
    %v2454 = vld [vmem:[#allocation8 + $0x110] sm:$0xff]
    %v2455 = vld [vmem:[#allocation8 + $0x118] sm:$0xff]
    %v2456 = vld [vmem:[#allocation8 + $0x120] sm:$0xff]
    %v2457 = vld [vmem:[#allocation8 + $0x128] sm:$0xff]
    %v2458 = vld [vmem:[#allocation8 + $0x130] sm:$0xff]
    %v2459 = vld [vmem:[#allocation8 + $0x138] sm:$0xff]
    %v2460 = vld [vmem:[#allocation8 + $0x140] sm:$0xff]
    %v2461 = vld [vmem:[#allocation8 + $0x148] sm:$0xff]
    %v2462 = vld [vmem:[#allocation8 + $0x150] sm:$0xff]
    %v2463 = vld [vmem:[#allocation8 + $0x158] sm:$0xff]
    %v2464 = vld [vmem:[#allocation8 + $0x160] sm:$0xff]
    %v2465 = vld [vmem:[#allocation8 + $0x168] sm:$0xff]
    %v2466 = vld [vmem:[#allocation8 + $0x170] sm:$0xff]
    %v2467 = vld [vmem:[#allocation8 + $0x178] sm:$0xff]
    %v2468 = vld [vmem:[#allocation8 + $0x180] sm:$0xff]
    %v2469 = vld [vmem:[#allocation8 + $0x188] sm:$0xff]
    %v2470 = vld [vmem:[#allocation8 + $0x190] sm:$0xff]
    %v2471 = vld [vmem:[#allocation8 + $0x198] sm:$0xff]
    %v2472 = vld [vmem:[#allocation8 + $0x1a0] sm:$0xff]
    %v2473 = vld [vmem:[#allocation8 + $0x1a8] sm:$0xff]
    %v2474 = vld [vmem:[#allocation8 + $0x1b0] sm:$0xff]
    %v2475 = vld [vmem:[#allocation8 + $0x1b8] sm:$0xff]
    %v2476 = vld [vmem:[#allocation8 + $0x1c0] sm:$0xff]
    %v2477 = vld [vmem:[#allocation8 + $0x1c8] sm:$0xff]
    %v2478 = vld [vmem:[#allocation8 + $0x1d0] sm:$0xff]
    %v2479 = vld [vmem:[#allocation8 + $0x1d8] sm:$0xff]
    %v2480 = vld [vmem:[#allocation8 + $0x1e0] sm:$0xff]
    %v2481 = vld [vmem:[#allocation8 + $0x1e8] sm:$0xff]
    %v2482 = vld [vmem:[#allocation8 + $0x1f0] sm:$0xff]
    %v2483 = vld [vmem:[#allocation8 + $0x1f8] sm:$0xff]
    %v2484 = vld [vmem:[#allocation8 + $0x200] sm:$0xff]
    %v2485 = vld [vmem:[#allocation8 + $0x208] sm:$0xff]
    %v2486 = vld [vmem:[#allocation8 + $0x210] sm:$0xff]
    %v2487 = vld [vmem:[#allocation8 + $0x218] sm:$0xff]
    %v2488 = vld [vmem:[#allocation8 + $0x220] sm:$0xff]
    %v2489 = vld [vmem:[#allocation8 + $0x228] sm:$0xff]
    %v2490 = vld [vmem:[#allocation8 + $0x230] sm:$0xff]
    %v2491 = vld [vmem:[#allocation8 + $0x238] sm:$0xff]
    %v2492 = vld [vmem:[#allocation8 + $0x240] sm:$0xff]
    %v2493 = vld [vmem:[#allocation8 + $0x248] sm:$0xff]
    %v2494 = vld [vmem:[#allocation8 + $0x250] sm:$0xff]
    %v2495 = vld [vmem:[#allocation8 + $0x258] sm:$0xff]
    %v2496 = vld [vmem:[#allocation8 + $0x260] sm:$0xff]
    %v2497 = vld [vmem:[#allocation8 + $0x268] sm:$0xff]
    %v2498 = vld [vmem:[#allocation8 + $0x270] sm:$0xff]
    %v2499 = vld [vmem:[#allocation8 + $0x278] sm:$0xff]
    %v2500 = vld [vmem:[#allocation8 + $0x280] sm:$0xff]
    %v2501 = vld [vmem:[#allocation8 + $0x288] sm:$0xff]
    %v2502 = vld [vmem:[#allocation8 + $0x290] sm:$0xff]
    %v2503 = vld [vmem:[#allocation8 + $0x298] sm:$0xff]
    %v2504 = vld [vmem:[#allocation8 + $0x2a0] sm:$0xff]
    %v2505 = vld [vmem:[#allocation8 + $0x2a8] sm:$0xff]
    %v2506 = vld [vmem:[#allocation8 + $0x2b0] sm:$0xff]
    %v2507 = vld [vmem:[#allocation8 + $0x2b8] sm:$0xff]
    %v2508 = vld [vmem:[#allocation8 + $0x2c0] sm:$0xff]
    %v2509 = vld [vmem:[#allocation8 + $0x2c8] sm:$0xff]
    %v2510 = vld [vmem:[#allocation8 + $0x2d0] sm:$0xff]
    %v2511 = vld [vmem:[#allocation8 + $0x2d8] sm:$0xff]
    %v2512 = vld [vmem:[#allocation8 + $0x2e0] sm:$0xff]
    %v2513 = vld [vmem:[#allocation8 + $0x2e8] sm:$0xff]
    %v2514 = vld [vmem:[#allocation8 + $0x2f0] sm:$0xff]
    %v2515 = vld [vmem:[#allocation8 + $0x2f8] sm:$0xff]
    %v2516 = vld [vmem:[#allocation8 + $0x300] sm:$0xff]
    %v2517 = vld [vmem:[#allocation8 + $0x308] sm:$0xff]
    %v2518 = vld [vmem:[#allocation8 + $0x310] sm:$0xff]
    %v2519 = vld [vmem:[#allocation8 + $0x318] sm:$0xff]
    %v2520 = vld [vmem:[#allocation8 + $0x320] sm:$0xff]
    %v2521 = vld [vmem:[#allocation8 + $0x328] sm:$0xff]
    %v2522 = vld [vmem:[#allocation8 + $0x330] sm:$0xff]
    %v2523 = vld [vmem:[#allocation8 + $0x338] sm:$0xff]
    %v2524 = vld [vmem:[#allocation8 + $0x340] sm:$0xff]
    %v2525 = vld [vmem:[#allocation8 + $0x348] sm:$0xff]
    %v2526 = vld [vmem:[#allocation8 + $0x350] sm:$0xff]
    %v2527 = vld [vmem:[#allocation8 + $0x358] sm:$0xff]
    %v2528 = vld [vmem:[#allocation8 + $0x360] sm:$0xff]
    %v2529 = vld [vmem:[#allocation8 + $0x368] sm:$0xff]
    %v2530 = vld [vmem:[#allocation8 + $0x370] sm:$0xff]
    %v2531 = vld [vmem:[#allocation8 + $0x378] sm:$0xff]
    %v2532 = vld [vmem:[#allocation8 + $0x380] sm:$0xff]
    %v2533 = vld [vmem:[#allocation8 + $0x388] sm:$0xff]
    %v2534 = vld [vmem:[#allocation8 + $0x390] sm:$0xff]
    %v2535 = vld [vmem:[#allocation8 + $0x398] sm:$0xff]
    %v2536 = vld [vmem:[#allocation8 + $0x3a0] sm:$0xff]
    %v2537 = vld [vmem:[#allocation8 + $0x3a8] sm:$0xff]
    %v2538 = vld [vmem:[#allocation8 + $0x3b0] sm:$0xff]
    %v2539 = vld [vmem:[#allocation8 + $0x3b8] sm:$0xff]
    %v2540 = vld [vmem:[#allocation8 + $0x3c0] sm:$0xff]
    %v2541 = vld [vmem:[#allocation8 + $0x3c8] sm:$0xff]
    %v2542 = vld [vmem:[#allocation8 + $0x3d0] sm:$0xff]
    %v2543 = vld [vmem:[#allocation8 + $0x3d8] sm:$0xff]
    %v2544 = vld [vmem:[#allocation8 + $0x3e0] sm:$0xff]
    %v2545 = vld [vmem:[#allocation8 + $0x3e8] sm:$0xff]
    %v2546 = vld [vmem:[#allocation8 + $0x3f0] sm:$0xff]
    %v2547 = vld [vmem:[#allocation8 + $0x3f8] sm:$0xff]
    %v2548 = vld [vmem:[#allocation8 + $0x400] sm:$0xff]
    %v2549 = vld [vmem:[#allocation8 + $0x408] sm:$0xff]
    %v2550 = vld [vmem:[#allocation8 + $0x410] sm:$0xff]
    %v2551 = vld [vmem:[#allocation8 + $0x418] sm:$0xff]
    %v2552 = vld [vmem:[#allocation8 + $0x420] sm:$0xff]
    %v2553 = vld [vmem:[#allocation8 + $0x428] sm:$0xff]
    %v2554 = vld [vmem:[#allocation8 + $0x430] sm:$0xff]
    %v2555 = vld [vmem:[#allocation8 + $0x438] sm:$0xff]
    %v2556 = vld [vmem:[#allocation8 + $0x440] sm:$0xff]
    %v2557 = vld [vmem:[#allocation8 + $0x448] sm:$0xff]
    %v2558 = vld [vmem:[#allocation8 + $0x450] sm:$0xff]
    %v2559 = vld [vmem:[#allocation8 + $0x458] sm:$0xff]
    %v2560 = vld [vmem:[#allocation8 + $0x460] sm:$0xff]
    %v2561 = vld [vmem:[#allocation8 + $0x468] sm:$0xff]
    %v2562 = vld [vmem:[#allocation8 + $0x470] sm:$0xff]
    %v2563 = vld [vmem:[#allocation8 + $0x478] sm:$0xff]
    %v2564 = vld [vmem:[#allocation8 + $0x480] sm:$0xff]
    %v2565 = vld [vmem:[#allocation8 + $0x488] sm:$0xff]
    %v2566 = vld [vmem:[#allocation8 + $0x490] sm:$0xff]
    %v2567 = vld [vmem:[#allocation8 + $0x498] sm:$0xff]
    %v2568 = vld [vmem:[#allocation8 + $0x4a0] sm:$0xff]
    %v2569 = vld [vmem:[#allocation8 + $0x4a8] sm:$0xff]
    %v2570 = vld [vmem:[#allocation8 + $0x4b0] sm:$0xff]
    %v2571 = vld [vmem:[#allocation8 + $0x4b8] sm:$0xff]
    %v2572 = vld [vmem:[#allocation8 + $0x4c0] sm:$0xff]
    %v2573 = vld [vmem:[#allocation8 + $0x4c8] sm:$0xff]
    %v2574 = vld [vmem:[#allocation8 + $0x4d0] sm:$0xff]
    %v2575 = vld [vmem:[#allocation8 + $0x4d8] sm:$0xff]
    %v2576 = vld [vmem:[#allocation8 + $0x4e0] sm:$0xff]
    %v2577 = vld [vmem:[#allocation8 + $0x4e8] sm:$0xff]
    %v2578 = vld [vmem:[#allocation8 + $0x4f0] sm:$0xff]
    %v2579 = vld [vmem:[#allocation8 + $0x4f8] sm:$0xff]
    %v2580 = vld [vmem:[#allocation8 + $0x500] sm:$0xff]
    %v2581 = vld [vmem:[#allocation8 + $0x508] sm:$0xff]
    %v2582 = vld [vmem:[#allocation8 + $0x510] sm:$0xff]
    %v2583 = vld [vmem:[#allocation8 + $0x518] sm:$0xff]
    %v2584 = vld [vmem:[#allocation8 + $0x520] sm:$0xff]
    %v2585 = vld [vmem:[#allocation8 + $0x528] sm:$0xff]
    %v2586 = vld [vmem:[#allocation8 + $0x530] sm:$0xff]
    %v2587 = vld [vmem:[#allocation8 + $0x538] sm:$0xff]
    %v2588 = vld [vmem:[#allocation8 + $0x540] sm:$0xff]
    %v2589 = vld [vmem:[#allocation8 + $0x548] sm:$0xff]
    %v2590 = vld [vmem:[#allocation8 + $0x550] sm:$0xff]
    %v2591 = vld [vmem:[#allocation8 + $0x558] sm:$0xff]
    %v2592 = vld [vmem:[#allocation8 + $0x560] sm:$0xff]
    %v2593 = vld [vmem:[#allocation8 + $0x568] sm:$0xff]
    %v2594 = vld [vmem:[#allocation8 + $0x570] sm:$0xff]
    %v2595 = vld [vmem:[#allocation8 + $0x578] sm:$0xff]
    %v2596 = vld [vmem:[#allocation8 + $0x580] sm:$0xff]
    %v2597 = vld [vmem:[#allocation8 + $0x588] sm:$0xff]
    %v2598 = vld [vmem:[#allocation8 + $0x590] sm:$0xff]
    %v2599 = vld [vmem:[#allocation8 + $0x598] sm:$0xff]
    %v2600 = vld [vmem:[#allocation8 + $0x5a0] sm:$0xff]
    %v2601 = vld [vmem:[#allocation8 + $0x5a8] sm:$0xff]
    %v2602 = vld [vmem:[#allocation8 + $0x5b0] sm:$0xff]
    %v2603 = vld [vmem:[#allocation8 + $0x5b8] sm:$0xff]
    %v2604 = vld [vmem:[#allocation8 + $0x5c0] sm:$0xff]
    %v2605 = vld [vmem:[#allocation8 + $0x5c8] sm:$0xff]
    %v2606 = vld [vmem:[#allocation8 + $0x5d0] sm:$0xff]
    %v2607 = vld [vmem:[#allocation8 + $0x5d8] sm:$0xff]
    %v2608 = vld [vmem:[#allocation8 + $0x5e0] sm:$0xff]
    %v2609 = vld [vmem:[#allocation8 + $0x5e8] sm:$0xff]
    %v2610 = vld [vmem:[#allocation8 + $0x5f0] sm:$0xff]
    %v2611 = vld [vmem:[#allocation8 + $0x5f8] sm:$0xff]
    %2612 = vmatprep.subr.mxu0 %v2421
    %2613 = vmatpush1.msra.mxu0 %v2420
    %2614 = vmatprep.subr.mxu0 %v2427
    %2615 = vmatpush1.msra.mxu0 %v2426
    %2616 = vmatprep.subr.mxu0 %v2433
    %2617 = vmatpush1.msra.mxu0 %v2432
    %2618 = vmatprep.subr.mxu0 %v2439
    %2619 = vmatpush1.msra.mxu0 %v2438
    %2620 = vmatprep.subr.mxu0 %v2445
    %2621 = vmatpush1.msra.mxu0 %v2444
    %2622 = vmatprep.subr.mxu0 %v2451
    %2623 = vmatpush1.msra.mxu0 %v2450
    %2624 = vmatprep.subr.mxu0 %v2457
    %2625 = vmatpush1.msra.mxu0 %v2456
    %2626 = vmatprep.subr.mxu0 %v2463
    %2627 = vmatpush1.msra.mxu0 %v2462
    %2628 = vmatprep.subr.mxu0 %v2469
    %2629 = vmatpush1.msra.mxu0 %v2468
    %2630 = vmatprep.subr.mxu0 %v2475
    %2631 = vmatpush1.msra.mxu0 %v2474
    %2632 = vmatprep.subr.mxu0 %v2481
    %2633 = vmatpush1.msra.mxu0 %v2480
    %2634 = vmatprep.subr.mxu0 %v2487
    %2635 = vmatpush1.msra.mxu0 %v2486
    %2636 = vmatprep.subr.mxu0 %v2493
    %2637 = vmatpush1.msra.mxu0 %v2492
    %2638 = vmatprep.subr.mxu0 %v2499
    %2639 = vmatpush1.msra.mxu0 %v2498
    %2640 = vmatprep.subr.mxu0 %v2505
    %2641 = vmatpush1.msra.mxu0 %v2504
    %2642 = vmatprep.subr.mxu0 %v2511
    %2643 = vmatpush1.msra.mxu0 %v2510
    %2644 = vmatprep.subr.mxu0 %v2517
    %2645 = vmatpush1.msra.mxu0 %v2516
    %2646 = vmatprep.subr.mxu0 %v2523
    %2647 = vmatpush1.msra.mxu0 %v2522
    %2648 = vmatprep.subr.mxu0 %v2529
    %2649 = vmatpush1.msra.mxu0 %v2528
    %2650 = vmatprep.subr.mxu0 %v2535
    %2651 = vmatpush1.msra.mxu0 %v2534
    %2652 = vmatprep.subr.mxu0 %v2541
    %2653 = vmatpush1.msra.mxu0 %v2540
    %2654 = vmatprep.subr.mxu0 %v2547
    %2655 = vmatpush1.msra.mxu0 %v2546
    %2656 = vmatprep.subr.mxu0 %v2553
    %2657 = vmatpush1.msra.mxu0 %v2552
    %2658 = vmatprep.subr.mxu0 %v2559
    %2659 = vmatpush1.msra.mxu0 %v2558
    %2660 = vmatprep.subr.mxu0 %v2565
    %2661 = vmatpush1.msra.mxu0 %v2564
    %2662 = vmatprep.subr.mxu0 %v2571
    %2663 = vmatpush1.msra.mxu0 %v2570
    %2664 = vmatprep.subr.mxu0 %v2577
    %2665 = vmatpush1.msra.mxu0 %v2576
    %2666 = vmatprep.subr.mxu0 %v2583
    %2667 = vmatpush1.msra.mxu0 %v2582
    %2668 = vmatprep.subr.mxu0 %v2589
    %2669 = vmatpush1.msra.mxu0 %v2588
    %2670 = vmatprep.subr.mxu0 %v2595
    %2671 = vmatpush1.msra.mxu0 %v2594
    %2672 = vmatprep.subr.mxu0 %v2601
    %2673 = vmatpush1.msra.mxu0 %v2600
    %2674 = vmatprep.subr.mxu0 %v2607
    %2675 = vmatpush1.msra.mxu0 %v2606
    %2676 = vmatprep.mubr.f32.mxu0 %v2411
    %2677 = vmatmul.mubr.f32.gmra.mrb[0].mxu0 %v2410
    %v2678 = vpop.f32.mrb[0].mxu0
    %v2679 = vadd.f32 %v765, %v2678
    %v2680 = vpop.f32.mrb[0].mxu0
    %v2681 = vadd.f32 %v769, %v2680
    %2682 = vdwg.mxu0
    %2683 = vmatprep.subr.mxu0 %v2423
    %2684 = vmatpush1.msra.mxu0 %v2422
    %2685 = vmatprep.subr.mxu0 %v2429
    %2686 = vmatpush1.msra.mxu0 %v2428
    %2687 = vmatprep.subr.mxu0 %v2435
    %2688 = vmatpush1.msra.mxu0 %v2434
    %2689 = vmatprep.subr.mxu0 %v2441
    %2690 = vmatpush1.msra.mxu0 %v2440
    %2691 = vmatprep.subr.mxu0 %v2447
    %2692 = vmatpush1.msra.mxu0 %v2446
    %2693 = vmatprep.subr.mxu0 %v2453
    %2694 = vmatpush1.msra.mxu0 %v2452
    %2695 = vmatprep.subr.mxu0 %v2459
    %2696 = vmatpush1.msra.mxu0 %v2458
    %2697 = vmatprep.subr.mxu0 %v2465
    %2698 = vmatpush1.msra.mxu0 %v2464
    %2699 = vmatprep.subr.mxu0 %v2471
    %2700 = vmatpush1.msra.mxu0 %v2470
    %2701 = vmatprep.subr.mxu0 %v2477
    %2702 = vmatpush1.msra.mxu0 %v2476
    %2703 = vmatprep.subr.mxu0 %v2483
    %2704 = vmatpush1.msra.mxu0 %v2482
    %2705 = vmatprep.subr.mxu0 %v2489
    %2706 = vmatpush1.msra.mxu0 %v2488
    %2707 = vmatprep.subr.mxu0 %v2495
    %2708 = vmatpush1.msra.mxu0 %v2494
    %2709 = vmatprep.subr.mxu0 %v2501
    %2710 = vmatpush1.msra.mxu0 %v2500
    %2711 = vmatprep.subr.mxu0 %v2507
    %2712 = vmatpush1.msra.mxu0 %v2506
    %2713 = vmatprep.subr.mxu0 %v2513
    %2714 = vmatpush1.msra.mxu0 %v2512
    %2715 = vmatprep.subr.mxu0 %v2519
    %2716 = vmatpush1.msra.mxu0 %v2518
    %2717 = vmatprep.subr.mxu0 %v2525
    %2718 = vmatpush1.msra.mxu0 %v2524
    %2719 = vmatprep.subr.mxu0 %v2531
    %2720 = vmatpush1.msra.mxu0 %v2530
    %2721 = vmatprep.subr.mxu0 %v2537
    %2722 = vmatpush1.msra.mxu0 %v2536
    %2723 = vmatprep.subr.mxu0 %v2543
    %2724 = vmatpush1.msra.mxu0 %v2542
    %2725 = vmatprep.subr.mxu0 %v2549
    %2726 = vmatpush1.msra.mxu0 %v2548
    %2727 = vmatprep.subr.mxu0 %v2555
    %2728 = vmatpush1.msra.mxu0 %v2554
    %2729 = vmatprep.subr.mxu0 %v2561
    %2730 = vmatpush1.msra.mxu0 %v2560
    %2731 = vmatprep.subr.mxu0 %v2567
    %2732 = vmatpush1.msra.mxu0 %v2566
    %2733 = vmatprep.subr.mxu0 %v2573
    %2734 = vmatpush1.msra.mxu0 %v2572
    %2735 = vmatprep.subr.mxu0 %v2579
    %2736 = vmatpush1.msra.mxu0 %v2578
    %2737 = vmatprep.subr.mxu0 %v2585
    %2738 = vmatpush1.msra.mxu0 %v2584
    %2739 = vmatprep.subr.mxu0 %v2591
    %2740 = vmatpush1.msra.mxu0 %v2590
    %2741 = vmatprep.subr.mxu0 %v2597
    %2742 = vmatpush1.msra.mxu0 %v2596
    %2743 = vmatprep.subr.mxu0 %v2603
    %2744 = vmatpush1.msra.mxu0 %v2602
    %2745 = vmatprep.subr.mxu0 %v2609
    %2746 = vmatpush1.msra.mxu0 %v2608
    %2747 = vmatprep.mubr.f32.mxu0 %v2411
    %2748 = vmatmul.mubr.f32.gmra.mrb[0].mxu0 %v2410
    %v2749 = vpop.f32.mrb[0].mxu0
    %v2750 = vadd.f32 %v773, %v2749
    %v2751 = vpop.f32.mrb[0].mxu0
    %v2752 = vadd.f32 %v777, %v2751
    %2753 = vdwg.mxu0
    %2754 = vmatprep.subr.mxu0 %v2425
    %2755 = vmatpush1.msra.mxu0 %v2424
    %2756 = vmatprep.subr.mxu0 %v2431
    %2757 = vmatpush1.msra.mxu0 %v2430
    %2758 = vmatprep.subr.mxu0 %v2437
    %2759 = vmatpush1.msra.mxu0 %v2436
    %2760 = vmatprep.subr.mxu0 %v2443
    %2761 = vmatpush1.msra.mxu0 %v2442
    %2762 = vmatprep.subr.mxu0 %v2449
    %2763 = vmatpush1.msra.mxu0 %v2448
    %2764 = vmatprep.subr.mxu0 %v2455
    %2765 = vmatpush1.msra.mxu0 %v2454
    %2766 = vmatprep.subr.mxu0 %v2461
    %2767 = vmatpush1.msra.mxu0 %v2460
    %2768 = vmatprep.subr.mxu0 %v2467
    %2769 = vmatpush1.msra.mxu0 %v2466
    %2770 = vmatprep.subr.mxu0 %v2473
    %2771 = vmatpush1.msra.mxu0 %v2472
    %2772 = vmatprep.subr.mxu0 %v2479
    %2773 = vmatpush1.msra.mxu0 %v2478
    %2774 = vmatprep.subr.mxu0 %v2485
    %2775 = vmatpush1.msra.mxu0 %v2484
    %2776 = vmatprep.subr.mxu0 %v2491
    %2777 = vmatpush1.msra.mxu0 %v2490
    %2778 = vmatprep.subr.mxu0 %v2497
    %2779 = vmatpush1.msra.mxu0 %v2496
    %2780 = vmatprep.subr.mxu0 %v2503
    %2781 = vmatpush1.msra.mxu0 %v2502
    %2782 = vmatprep.subr.mxu0 %v2509
    %2783 = vmatpush1.msra.mxu0 %v2508
    %2784 = vmatprep.subr.mxu0 %v2515
    %2785 = vmatpush1.msra.mxu0 %v2514
    %2786 = vmatprep.subr.mxu0 %v2521
    %2787 = vmatpush1.msra.mxu0 %v2520
    %2788 = vmatprep.subr.mxu0 %v2527
    %2789 = vmatpush1.msra.mxu0 %v2526
    %2790 = vmatprep.subr.mxu0 %v2533
    %2791 = vmatpush1.msra.mxu0 %v2532
    %2792 = vmatprep.subr.mxu0 %v2539
    %2793 = vmatpush1.msra.mxu0 %v2538
    %2794 = vmatprep.subr.mxu0 %v2545
    %2795 = vmatpush1.msra.mxu0 %v2544
    %2796 = vmatprep.subr.mxu0 %v2551
    %2797 = vmatpush1.msra.mxu0 %v2550
    %2798 = vmatprep.subr.mxu0 %v2557
    %2799 = vmatpush1.msra.mxu0 %v2556
    %2800 = vmatprep.subr.mxu0 %v2563
    %2801 = vmatpush1.msra.mxu0 %v2562
    %2802 = vmatprep.subr.mxu0 %v2569
    %2803 = vmatpush1.msra.mxu0 %v2568
    %2804 = vmatprep.subr.mxu0 %v2575
    %2805 = vmatpush1.msra.mxu0 %v2574
    %2806 = vmatprep.subr.mxu0 %v2581
    %2807 = vmatpush1.msra.mxu0 %v2580
    %2808 = vmatprep.subr.mxu0 %v2587
    %2809 = vmatpush1.msra.mxu0 %v2586
    %2810 = vmatprep.subr.mxu0 %v2593
    %2811 = vmatpush1.msra.mxu0 %v2592
    %2812 = vmatprep.subr.mxu0 %v2599
    %2813 = vmatpush1.msra.mxu0 %v2598
    %2814 = vmatprep.subr.mxu0 %v2605
    %2815 = vmatpush1.msra.mxu0 %v2604
    %2816 = vmatprep.subr.mxu0 %v2611
    %2817 = vmatpush1.msra.mxu0 %v2610
    %2818 = vmatprep.mubr.f32.mxu0 %v2411
    %2819 = vmatmul.mubr.f32.gmra.mrb[0].mxu0 %v2410
    %v2820 = vpop.f32.mrb[0].mxu0
    %v2821 = vadd.f32 %v781, %v2820
    %v2822 = vpop.f32.mrb[0].mxu0
    %v2823 = vadd.f32 %v785, %v2822
    %2824 = vdwg.mxu0
    %v2825 = vadd.f32 %v2414, %v2679
    %v2826 = vadd.f32 %v2415, %v2681
    %v2827 = vxor.u32 %v2825, 2147483648
    %v2828 = vxor.u32 %v2826, 2147483648
    %v2829 = vmul.f32 %v2827, 1.442695
    %v2830 = vpow.pop %v2829
    %v2831 = vmul.f32 %v2828, 1.442695
    %v2832 = vpow.pop %v2831
    %v2833 = vadd.f32 %v2830, 1.0
    %v2834 = vadd.f32 %v2832, 1.0
    %v2835 = vrcp.pop %v2833
    %v2836 = vmul.f32 1.0, %v2835
    %v2837 = vrcp.pop %v2834
    %v2838 = vmul.f32 1.0, %v2837
    %v2839 = vadd.f32 %v2416, %v2750
    %v2840 = vadd.f32 %v2417, %v2752
    %v2841 = vxor.u32 %v2839, 2147483648
    %v2842 = vxor.u32 %v2840, 2147483648
    %v2843 = vmul.f32 %v2841, 1.442695
    %v2844 = vpow.pop %v2843
    %v2845 = vmul.f32 %v2842, 1.442695
    %v2846 = vpow.pop %v2845
    %v2847 = vadd.f32 %v2844, 1.0
    %v2848 = vadd.f32 %v2846, 1.0
    %v2849 = vrcp.pop %v2847
    %v2850 = vmul.f32 1.0, %v2849
    %v2851 = vrcp.pop %v2848
    %v2852 = vmul.f32 1.0, %v2851
    %v2853 = vmul.f32 %v2836, %v2821
    %v2854 = vmul.f32 %v2838, %v2823
    %v2855 = vadd.f32 %v2418, %v2853
    %v2856 = vadd.f32 %v2419, %v2854
    %v2857 = vtanh.pop %v2855
    %v2858 = vtanh.pop %v2856
    %v2859 = vsub.f32 1.0, %v2850
    %v2860 = vsub.f32 1.0, %v2852
    %v2861 = vmul.f32 %v2859, %v2857
    %v2862 = vmul.f32 %v2860, %v2858
    %v2863 = vmul.f32 %v2850, %v2410
    %v2864 = vmul.f32 %v2852, %v2411
    %v2865 = vadd.f32 %v2861, %v2863
    %v2866 = vadd.f32 %v2862, %v2864
    %2867 = vst [vmem:[#allocation9 + $0x40] sm:$0xff] %v2865
    %2868 = vst [vmem:[#allocation9 + $0x48] sm:$0xff] %v2866
    %v2869 = vld [vmem:[#allocation2 + $0xf0] sm:$0xff]
    %v2870 = vld [vmem:[#allocation2 + $0xf8] sm:$0xff]
    %v2871 = vld [vmem:[#allocation2 + $0x100] sm:$0xff]
    %v2872 = vld [vmem:[#allocation2 + $0x108] sm:$0xff]
    %v2873 = vld [vmem:[#allocation2 + $0x110] sm:$0xff]
    %v2874 = vld [vmem:[#allocation2 + $0x118] sm:$0xff]
    %v2875 = vld [vmem:[#allocation8] sm:$0xff]
    %v2876 = vld [vmem:[#allocation8 + $0x8] sm:$0xff]
    %v2877 = vld [vmem:[#allocation8 + $0x10] sm:$0xff]
    %v2878 = vld [vmem:[#allocation8 + $0x18] sm:$0xff]
    %v2879 = vld [vmem:[#allocation8 + $0x20] sm:$0xff]
    %v2880 = vld [vmem:[#allocation8 + $0x28] sm:$0xff]
    %v2881 = vld [vmem:[#allocation8 + $0x30] sm:$0xff]
    %v2882 = vld [vmem:[#allocation8 + $0x38] sm:$0xff]
    %v2883 = vld [vmem:[#allocation8 + $0x40] sm:$0xff]
    %v2884 = vld [vmem:[#allocation8 + $0x48] sm:$0xff]
    %v2885 = vld [vmem:[#allocation8 + $0x50] sm:$0xff]
    %v2886 = vld [vmem:[#allocation8 + $0x58] sm:$0xff]
    %v2887 = vld [vmem:[#allocation8 + $0x60] sm:$0xff]
    %v2888 = vld [vmem:[#allocation8 + $0x68] sm:$0xff]
    %v2889 = vld [vmem:[#allocation8 + $0x70] sm:$0xff]
    %v2890 = vld [vmem:[#allocation8 + $0x78] sm:$0xff]
    %v2891 = vld [vmem:[#allocation8 + $0x80] sm:$0xff]
    %v2892 = vld [vmem:[#allocation8 + $0x88] sm:$0xff]
    %v2893 = vld [vmem:[#allocation8 + $0x90] sm:$0xff]
    %v2894 = vld [vmem:[#allocation8 + $0x98] sm:$0xff]
    %v2895 = vld [vmem:[#allocation8 + $0xa0] sm:$0xff]
    %v2896 = vld [vmem:[#allocation8 + $0xa8] sm:$0xff]
    %v2897 = vld [vmem:[#allocation8 + $0xb0] sm:$0xff]
    %v2898 = vld [vmem:[#allocation8 + $0xb8] sm:$0xff]
    %v2899 = vld [vmem:[#allocation8 + $0xc0] sm:$0xff]
    %v2900 = vld [vmem:[#allocation8 + $0xc8] sm:$0xff]
    %v2901 = vld [vmem:[#allocation8 + $0xd0] sm:$0xff]
    %v2902 = vld [vmem:[#allocation8 + $0xd8] sm:$0xff]
    %v2903 = vld [vmem:[#allocation8 + $0xe0] sm:$0xff]
    %v2904 = vld [vmem:[#allocation8 + $0xe8] sm:$0xff]
    %v2905 = vld [vmem:[#allocation8 + $0xf0] sm:$0xff]
    %v2906 = vld [vmem:[#allocation8 + $0xf8] sm:$0xff]
    %v2907 = vld [vmem:[#allocation8 + $0x100] sm:$0xff]
    %v2908 = vld [vmem:[#allocation8 + $0x108] sm:$0xff]
    %v2909 = vld [vmem:[#allocation8 + $0x110] sm:$0xff]
    %v2910 = vld [vmem:[#allocation8 + $0x118] sm:$0xff]
    %v2911 = vld [vmem:[#allocation8 + $0x120] sm:$0xff]
    %v2912 = vld [vmem:[#allocation8 + $0x128] sm:$0xff]
    %v2913 = vld [vmem:[#allocation8 + $0x130] sm:$0xff]
    %v2914 = vld [vmem:[#allocation8 + $0x138] sm:$0xff]
    %v2915 = vld [vmem:[#allocation8 + $0x140] sm:$0xff]
    %v2916 = vld [vmem:[#allocation8 + $0x148] sm:$0xff]
    %v2917 = vld [vmem:[#allocation8 + $0x150] sm:$0xff]
    %v2918 = vld [vmem:[#allocation8 + $0x158] sm:$0xff]
    %v2919 = vld [vmem:[#allocation8 + $0x160] sm:$0xff]
    %v2920 = vld [vmem:[#allocation8 + $0x168] sm:$0xff]
    %v2921 = vld [vmem:[#allocation8 + $0x170] sm:$0xff]
    %v2922 = vld [vmem:[#allocation8 + $0x178] sm:$0xff]
    %v2923 = vld [vmem:[#allocation8 + $0x180] sm:$0xff]
    %v2924 = vld [vmem:[#allocation8 + $0x188] sm:$0xff]
    %v2925 = vld [vmem:[#allocation8 + $0x190] sm:$0xff]
    %v2926 = vld [vmem:[#allocation8 + $0x198] sm:$0xff]
    %v2927 = vld [vmem:[#allocation8 + $0x1a0] sm:$0xff]
    %v2928 = vld [vmem:[#allocation8 + $0x1a8] sm:$0xff]
    %v2929 = vld [vmem:[#allocation8 + $0x1b0] sm:$0xff]
    %v2930 = vld [vmem:[#allocation8 + $0x1b8] sm:$0xff]
    %v2931 = vld [vmem:[#allocation8 + $0x1c0] sm:$0xff]
    %v2932 = vld [vmem:[#allocation8 + $0x1c8] sm:$0xff]
    %v2933 = vld [vmem:[#allocation8 + $0x1d0] sm:$0xff]
    %v2934 = vld [vmem:[#allocation8 + $0x1d8] sm:$0xff]
    %v2935 = vld [vmem:[#allocation8 + $0x1e0] sm:$0xff]
    %v2936 = vld [vmem:[#allocation8 + $0x1e8] sm:$0xff]
    %v2937 = vld [vmem:[#allocation8 + $0x1f0] sm:$0xff]
    %v2938 = vld [vmem:[#allocation8 + $0x1f8] sm:$0xff]
    %v2939 = vld [vmem:[#allocation8 + $0x200] sm:$0xff]
    %v2940 = vld [vmem:[#allocation8 + $0x208] sm:$0xff]
    %v2941 = vld [vmem:[#allocation8 + $0x210] sm:$0xff]
    %v2942 = vld [vmem:[#allocation8 + $0x218] sm:$0xff]
    %v2943 = vld [vmem:[#allocation8 + $0x220] sm:$0xff]
    %v2944 = vld [vmem:[#allocation8 + $0x228] sm:$0xff]
    %v2945 = vld [vmem:[#allocation8 + $0x230] sm:$0xff]
    %v2946 = vld [vmem:[#allocation8 + $0x238] sm:$0xff]
    %v2947 = vld [vmem:[#allocation8 + $0x240] sm:$0xff]
    %v2948 = vld [vmem:[#allocation8 + $0x248] sm:$0xff]
    %v2949 = vld [vmem:[#allocation8 + $0x250] sm:$0xff]
    %v2950 = vld [vmem:[#allocation8 + $0x258] sm:$0xff]
    %v2951 = vld [vmem:[#allocation8 + $0x260] sm:$0xff]
    %v2952 = vld [vmem:[#allocation8 + $0x268] sm:$0xff]
    %v2953 = vld [vmem:[#allocation8 + $0x270] sm:$0xff]
    %v2954 = vld [vmem:[#allocation8 + $0x278] sm:$0xff]
    %v2955 = vld [vmem:[#allocation8 + $0x280] sm:$0xff]
    %v2956 = vld [vmem:[#allocation8 + $0x288] sm:$0xff]
    %v2957 = vld [vmem:[#allocation8 + $0x290] sm:$0xff]
    %v2958 = vld [vmem:[#allocation8 + $0x298] sm:$0xff]
    %v2959 = vld [vmem:[#allocation8 + $0x2a0] sm:$0xff]
    %v2960 = vld [vmem:[#allocation8 + $0x2a8] sm:$0xff]
    %v2961 = vld [vmem:[#allocation8 + $0x2b0] sm:$0xff]
    %v2962 = vld [vmem:[#allocation8 + $0x2b8] sm:$0xff]
    %v2963 = vld [vmem:[#allocation8 + $0x2c0] sm:$0xff]
    %v2964 = vld [vmem:[#allocation8 + $0x2c8] sm:$0xff]
    %v2965 = vld [vmem:[#allocation8 + $0x2d0] sm:$0xff]
    %v2966 = vld [vmem:[#allocation8 + $0x2d8] sm:$0xff]
    %v2967 = vld [vmem:[#allocation8 + $0x2e0] sm:$0xff]
    %v2968 = vld [vmem:[#allocation8 + $0x2e8] sm:$0xff]
    %v2969 = vld [vmem:[#allocation8 + $0x2f0] sm:$0xff]
    %v2970 = vld [vmem:[#allocation8 + $0x2f8] sm:$0xff]
    %v2971 = vld [vmem:[#allocation8 + $0x300] sm:$0xff]
    %v2972 = vld [vmem:[#allocation8 + $0x308] sm:$0xff]
    %v2973 = vld [vmem:[#allocation8 + $0x310] sm:$0xff]
    %v2974 = vld [vmem:[#allocation8 + $0x318] sm:$0xff]
    %v2975 = vld [vmem:[#allocation8 + $0x320] sm:$0xff]
    %v2976 = vld [vmem:[#allocation8 + $0x328] sm:$0xff]
    %v2977 = vld [vmem:[#allocation8 + $0x330] sm:$0xff]
    %v2978 = vld [vmem:[#allocation8 + $0x338] sm:$0xff]
    %v2979 = vld [vmem:[#allocation8 + $0x340] sm:$0xff]
    %v2980 = vld [vmem:[#allocation8 + $0x348] sm:$0xff]
    %v2981 = vld [vmem:[#allocation8 + $0x350] sm:$0xff]
    %v2982 = vld [vmem:[#allocation8 + $0x358] sm:$0xff]
    %v2983 = vld [vmem:[#allocation8 + $0x360] sm:$0xff]
    %v2984 = vld [vmem:[#allocation8 + $0x368] sm:$0xff]
    %v2985 = vld [vmem:[#allocation8 + $0x370] sm:$0xff]
    %v2986 = vld [vmem:[#allocation8 + $0x378] sm:$0xff]
    %v2987 = vld [vmem:[#allocation8 + $0x380] sm:$0xff]
    %v2988 = vld [vmem:[#allocation8 + $0x388] sm:$0xff]
    %v2989 = vld [vmem:[#allocation8 + $0x390] sm:$0xff]
    %v2990 = vld [vmem:[#allocation8 + $0x398] sm:$0xff]
    %v2991 = vld [vmem:[#allocation8 + $0x3a0] sm:$0xff]
    %v2992 = vld [vmem:[#allocation8 + $0x3a8] sm:$0xff]
    %v2993 = vld [vmem:[#allocation8 + $0x3b0] sm:$0xff]
    %v2994 = vld [vmem:[#allocation8 + $0x3b8] sm:$0xff]
    %v2995 = vld [vmem:[#allocation8 + $0x3c0] sm:$0xff]
    %v2996 = vld [vmem:[#allocation8 + $0x3c8] sm:$0xff]
    %v2997 = vld [vmem:[#allocation8 + $0x3d0] sm:$0xff]
    %v2998 = vld [vmem:[#allocation8 + $0x3d8] sm:$0xff]
    %v2999 = vld [vmem:[#allocation8 + $0x3e0] sm:$0xff]
    %v3000 = vld [vmem:[#allocation8 + $0x3e8] sm:$0xff]
    %v3001 = vld [vmem:[#allocation8 + $0x3f0] sm:$0xff]
    %v3002 = vld [vmem:[#allocation8 + $0x3f8] sm:$0xff]
    %v3003 = vld [vmem:[#allocation8 + $0x400] sm:$0xff]
    %v3004 = vld [vmem:[#allocation8 + $0x408] sm:$0xff]
    %v3005 = vld [vmem:[#allocation8 + $0x410] sm:$0xff]
    %v3006 = vld [vmem:[#allocation8 + $0x418] sm:$0xff]
    %v3007 = vld [vmem:[#allocation8 + $0x420] sm:$0xff]
    %v3008 = vld [vmem:[#allocation8 + $0x428] sm:$0xff]
    %v3009 = vld [vmem:[#allocation8 + $0x430] sm:$0xff]
    %v3010 = vld [vmem:[#allocation8 + $0x438] sm:$0xff]
    %v3011 = vld [vmem:[#allocation8 + $0x440] sm:$0xff]
    %v3012 = vld [vmem:[#allocation8 + $0x448] sm:$0xff]
    %v3013 = vld [vmem:[#allocation8 + $0x450] sm:$0xff]
    %v3014 = vld [vmem:[#allocation8 + $0x458] sm:$0xff]
    %v3015 = vld [vmem:[#allocation8 + $0x460] sm:$0xff]
    %v3016 = vld [vmem:[#allocation8 + $0x468] sm:$0xff]
    %v3017 = vld [vmem:[#allocation8 + $0x470] sm:$0xff]
    %v3018 = vld [vmem:[#allocation8 + $0x478] sm:$0xff]
    %v3019 = vld [vmem:[#allocation8 + $0x480] sm:$0xff]
    %v3020 = vld [vmem:[#allocation8 + $0x488] sm:$0xff]
    %v3021 = vld [vmem:[#allocation8 + $0x490] sm:$0xff]
    %v3022 = vld [vmem:[#allocation8 + $0x498] sm:$0xff]
    %v3023 = vld [vmem:[#allocation8 + $0x4a0] sm:$0xff]
    %v3024 = vld [vmem:[#allocation8 + $0x4a8] sm:$0xff]
    %v3025 = vld [vmem:[#allocation8 + $0x4b0] sm:$0xff]
    %v3026 = vld [vmem:[#allocation8 + $0x4b8] sm:$0xff]
    %v3027 = vld [vmem:[#allocation8 + $0x4c0] sm:$0xff]
    %v3028 = vld [vmem:[#allocation8 + $0x4c8] sm:$0xff]
    %v3029 = vld [vmem:[#allocation8 + $0x4d0] sm:$0xff]
    %v3030 = vld [vmem:[#allocation8 + $0x4d8] sm:$0xff]
    %v3031 = vld [vmem:[#allocation8 + $0x4e0] sm:$0xff]
    %v3032 = vld [vmem:[#allocation8 + $0x4e8] sm:$0xff]
    %v3033 = vld [vmem:[#allocation8 + $0x4f0] sm:$0xff]
    %v3034 = vld [vmem:[#allocation8 + $0x4f8] sm:$0xff]
    %v3035 = vld [vmem:[#allocation8 + $0x500] sm:$0xff]
    %v3036 = vld [vmem:[#allocation8 + $0x508] sm:$0xff]
    %v3037 = vld [vmem:[#allocation8 + $0x510] sm:$0xff]
    %v3038 = vld [vmem:[#allocation8 + $0x518] sm:$0xff]
    %v3039 = vld [vmem:[#allocation8 + $0x520] sm:$0xff]
    %v3040 = vld [vmem:[#allocation8 + $0x528] sm:$0xff]
    %v3041 = vld [vmem:[#allocation8 + $0x530] sm:$0xff]
    %v3042 = vld [vmem:[#allocation8 + $0x538] sm:$0xff]
    %v3043 = vld [vmem:[#allocation8 + $0x540] sm:$0xff]
    %v3044 = vld [vmem:[#allocation8 + $0x548] sm:$0xff]
    %v3045 = vld [vmem:[#allocation8 + $0x550] sm:$0xff]
    %v3046 = vld [vmem:[#allocation8 + $0x558] sm:$0xff]
    %v3047 = vld [vmem:[#allocation8 + $0x560] sm:$0xff]
    %v3048 = vld [vmem:[#allocation8 + $0x568] sm:$0xff]
    %v3049 = vld [vmem:[#allocation8 + $0x570] sm:$0xff]
    %v3050 = vld [vmem:[#allocation8 + $0x578] sm:$0xff]
    %v3051 = vld [vmem:[#allocation8 + $0x580] sm:$0xff]
    %v3052 = vld [vmem:[#allocation8 + $0x588] sm:$0xff]
    %v3053 = vld [vmem:[#allocation8 + $0x590] sm:$0xff]
    %v3054 = vld [vmem:[#allocation8 + $0x598] sm:$0xff]
    %v3055 = vld [vmem:[#allocation8 + $0x5a0] sm:$0xff]
    %v3056 = vld [vmem:[#allocation8 + $0x5a8] sm:$0xff]
    %v3057 = vld [vmem:[#allocation8 + $0x5b0] sm:$0xff]
    %v3058 = vld [vmem:[#allocation8 + $0x5b8] sm:$0xff]
    %v3059 = vld [vmem:[#allocation8 + $0x5c0] sm:$0xff]
    %v3060 = vld [vmem:[#allocation8 + $0x5c8] sm:$0xff]
    %v3061 = vld [vmem:[#allocation8 + $0x5d0] sm:$0xff]
    %v3062 = vld [vmem:[#allocation8 + $0x5d8] sm:$0xff]
    %v3063 = vld [vmem:[#allocation8 + $0x5e0] sm:$0xff]
    %v3064 = vld [vmem:[#allocation8 + $0x5e8] sm:$0xff]
    %v3065 = vld [vmem:[#allocation8 + $0x5f0] sm:$0xff]
    %v3066 = vld [vmem:[#allocation8 + $0x5f8] sm:$0xff]
    %3067 = vmatprep.subr.mxu0 %v2876
    %3068 = vmatpush1.msra.mxu0 %v2875
    %3069 = vmatprep.subr.mxu0 %v2882
    %3070 = vmatpush1.msra.mxu0 %v2881
    %3071 = vmatprep.subr.mxu0 %v2888
    %3072 = vmatpush1.msra.mxu0 %v2887
    %3073 = vmatprep.subr.mxu0 %v2894
    %3074 = vmatpush1.msra.mxu0 %v2893
    %3075 = vmatprep.subr.mxu0 %v2900
    %3076 = vmatpush1.msra.mxu0 %v2899
    %3077 = vmatprep.subr.mxu0 %v2906
    %3078 = vmatpush1.msra.mxu0 %v2905
    %3079 = vmatprep.subr.mxu0 %v2912
    %3080 = vmatpush1.msra.mxu0 %v2911
    %3081 = vmatprep.subr.mxu0 %v2918
    %3082 = vmatpush1.msra.mxu0 %v2917
    %3083 = vmatprep.subr.mxu0 %v2924
    %3084 = vmatpush1.msra.mxu0 %v2923
    %3085 = vmatprep.subr.mxu0 %v2930
    %3086 = vmatpush1.msra.mxu0 %v2929
    %3087 = vmatprep.subr.mxu0 %v2936
    %3088 = vmatpush1.msra.mxu0 %v2935
    %3089 = vmatprep.subr.mxu0 %v2942
    %3090 = vmatpush1.msra.mxu0 %v2941
    %3091 = vmatprep.subr.mxu0 %v2948
    %3092 = vmatpush1.msra.mxu0 %v2947
    %3093 = vmatprep.subr.mxu0 %v2954
    %3094 = vmatpush1.msra.mxu0 %v2953
    %3095 = vmatprep.subr.mxu0 %v2960
    %3096 = vmatpush1.msra.mxu0 %v2959
    %3097 = vmatprep.subr.mxu0 %v2966
    %3098 = vmatpush1.msra.mxu0 %v2965
    %3099 = vmatprep.subr.mxu0 %v2972
    %3100 = vmatpush1.msra.mxu0 %v2971
    %3101 = vmatprep.subr.mxu0 %v2978
    %3102 = vmatpush1.msra.mxu0 %v2977
    %3103 = vmatprep.subr.mxu0 %v2984
    %3104 = vmatpush1.msra.mxu0 %v2983
    %3105 = vmatprep.subr.mxu0 %v2990
    %3106 = vmatpush1.msra.mxu0 %v2989
    %3107 = vmatprep.subr.mxu0 %v2996
    %3108 = vmatpush1.msra.mxu0 %v2995
    %3109 = vmatprep.subr.mxu0 %v3002
    %3110 = vmatpush1.msra.mxu0 %v3001
    %3111 = vmatprep.subr.mxu0 %v3008
    %3112 = vmatpush1.msra.mxu0 %v3007
    %3113 = vmatprep.subr.mxu0 %v3014
    %3114 = vmatpush1.msra.mxu0 %v3013
    %3115 = vmatprep.subr.mxu0 %v3020
    %3116 = vmatpush1.msra.mxu0 %v3019
    %3117 = vmatprep.subr.mxu0 %v3026
    %3118 = vmatpush1.msra.mxu0 %v3025
    %3119 = vmatprep.subr.mxu0 %v3032
    %3120 = vmatpush1.msra.mxu0 %v3031
    %3121 = vmatprep.subr.mxu0 %v3038
    %3122 = vmatpush1.msra.mxu0 %v3037
    %3123 = vmatprep.subr.mxu0 %v3044
    %3124 = vmatpush1.msra.mxu0 %v3043
    %3125 = vmatprep.subr.mxu0 %v3050
    %3126 = vmatpush1.msra.mxu0 %v3049
    %3127 = vmatprep.subr.mxu0 %v3056
    %3128 = vmatpush1.msra.mxu0 %v3055
    %3129 = vmatprep.subr.mxu0 %v3062
    %3130 = vmatpush1.msra.mxu0 %v3061
    %3131 = vmatprep.mubr.f32.mxu0 %v2866
    %3132 = vmatmul.mubr.f32.gmra.mrb[0].mxu0 %v2865
    %v3133 = vpop.f32.mrb[0].mxu0
    %v3134 = vadd.f32 %v765, %v3133
    %v3135 = vpop.f32.mrb[0].mxu0
    %v3136 = vadd.f32 %v769, %v3135
    %3137 = vdwg.mxu0
    %3138 = vmatprep.subr.mxu0 %v2878
    %3139 = vmatpush1.msra.mxu0 %v2877
    %3140 = vmatprep.subr.mxu0 %v2884
    %3141 = vmatpush1.msra.mxu0 %v2883
    %3142 = vmatprep.subr.mxu0 %v2890
    %3143 = vmatpush1.msra.mxu0 %v2889
    %3144 = vmatprep.subr.mxu0 %v2896
    %3145 = vmatpush1.msra.mxu0 %v2895
    %3146 = vmatprep.subr.mxu0 %v2902
    %3147 = vmatpush1.msra.mxu0 %v2901
    %3148 = vmatprep.subr.mxu0 %v2908
    %3149 = vmatpush1.msra.mxu0 %v2907
    %3150 = vmatprep.subr.mxu0 %v2914
    %3151 = vmatpush1.msra.mxu0 %v2913
    %3152 = vmatprep.subr.mxu0 %v2920
    %3153 = vmatpush1.msra.mxu0 %v2919
    %3154 = vmatprep.subr.mxu0 %v2926
    %3155 = vmatpush1.msra.mxu0 %v2925
    %3156 = vmatprep.subr.mxu0 %v2932
    %3157 = vmatpush1.msra.mxu0 %v2931
    %3158 = vmatprep.subr.mxu0 %v2938
    %3159 = vmatpush1.msra.mxu0 %v2937
    %3160 = vmatprep.subr.mxu0 %v2944
    %3161 = vmatpush1.msra.mxu0 %v2943
    %3162 = vmatprep.subr.mxu0 %v2950
    %3163 = vmatpush1.msra.mxu0 %v2949
    %3164 = vmatprep.subr.mxu0 %v2956
    %3165 = vmatpush1.msra.mxu0 %v2955
    %3166 = vmatprep.subr.mxu0 %v2962
    %3167 = vmatpush1.msra.mxu0 %v2961
    %3168 = vmatprep.subr.mxu0 %v2968
    %3169 = vmatpush1.msra.mxu0 %v2967
    %3170 = vmatprep.subr.mxu0 %v2974
    %3171 = vmatpush1.msra.mxu0 %v2973
    %3172 = vmatprep.subr.mxu0 %v2980
    %3173 = vmatpush1.msra.mxu0 %v2979
    %3174 = vmatprep.subr.mxu0 %v2986
    %3175 = vmatpush1.msra.mxu0 %v2985
    %3176 = vmatprep.subr.mxu0 %v2992
    %3177 = vmatpush1.msra.mxu0 %v2991
    %3178 = vmatprep.subr.mxu0 %v2998
    %3179 = vmatpush1.msra.mxu0 %v2997
    %3180 = vmatprep.subr.mxu0 %v3004
    %3181 = vmatpush1.msra.mxu0 %v3003
    %3182 = vmatprep.subr.mxu0 %v3010
    %3183 = vmatpush1.msra.mxu0 %v3009
    %3184 = vmatprep.subr.mxu0 %v3016
    %3185 = vmatpush1.msra.mxu0 %v3015
    %3186 = vmatprep.subr.mxu0 %v3022
    %3187 = vmatpush1.msra.mxu0 %v3021
    %3188 = vmatprep.subr.mxu0 %v3028
    %3189 = vmatpush1.msra.mxu0 %v3027
    %3190 = vmatprep.subr.mxu0 %v3034
    %3191 = vmatpush1.msra.mxu0 %v3033
    %3192 = vmatprep.subr.mxu0 %v3040
    %3193 = vmatpush1.msra.mxu0 %v3039
    %3194 = vmatprep.subr.mxu0 %v3046
    %3195 = vmatpush1.msra.mxu0 %v3045
    %3196 = vmatprep.subr.mxu0 %v3052
    %3197 = vmatpush1.msra.mxu0 %v3051
    %3198 = vmatprep.subr.mxu0 %v3058
    %3199 = vmatpush1.msra.mxu0 %v3057
    %3200 = vmatprep.subr.mxu0 %v3064
    %3201 = vmatpush1.msra.mxu0 %v3063
    %3202 = vmatprep.mubr.f32.mxu0 %v2866
    %3203 = vmatmul.mubr.f32.gmra.mrb[0].mxu0 %v2865
    %v3204 = vpop.f32.mrb[0].mxu0
    %v3205 = vadd.f32 %v773, %v3204
    %v3206 = vpop.f32.mrb[0].mxu0
    %v3207 = vadd.f32 %v777, %v3206
    %3208 = vdwg.mxu0
    %3209 = vmatprep.subr.mxu0 %v2880
    %3210 = vmatpush1.msra.mxu0 %v2879
    %3211 = vmatprep.subr.mxu0 %v2886
    %3212 = vmatpush1.msra.mxu0 %v2885
    %3213 = vmatprep.subr.mxu0 %v2892
    %3214 = vmatpush1.msra.mxu0 %v2891
    %3215 = vmatprep.subr.mxu0 %v2898
    %3216 = vmatpush1.msra.mxu0 %v2897
    %3217 = vmatprep.subr.mxu0 %v2904
    %3218 = vmatpush1.msra.mxu0 %v2903
    %3219 = vmatprep.subr.mxu0 %v2910
    %3220 = vmatpush1.msra.mxu0 %v2909
    %3221 = vmatprep.subr.mxu0 %v2916
    %3222 = vmatpush1.msra.mxu0 %v2915
    %3223 = vmatprep.subr.mxu0 %v2922
    %3224 = vmatpush1.msra.mxu0 %v2921
    %3225 = vmatprep.subr.mxu0 %v2928
    %3226 = vmatpush1.msra.mxu0 %v2927
    %3227 = vmatprep.subr.mxu0 %v2934
    %3228 = vmatpush1.msra.mxu0 %v2933
    %3229 = vmatprep.subr.mxu0 %v2940
    %3230 = vmatpush1.msra.mxu0 %v2939
    %3231 = vmatprep.subr.mxu0 %v2946
    %3232 = vmatpush1.msra.mxu0 %v2945
    %3233 = vmatprep.subr.mxu0 %v2952
    %3234 = vmatpush1.msra.mxu0 %v2951
    %3235 = vmatprep.subr.mxu0 %v2958
    %3236 = vmatpush1.msra.mxu0 %v2957
    %3237 = vmatprep.subr.mxu0 %v2964
    %3238 = vmatpush1.msra.mxu0 %v2963
    %3239 = vmatprep.subr.mxu0 %v2970
    %3240 = vmatpush1.msra.mxu0 %v2969
    %3241 = vmatprep.subr.mxu0 %v2976
    %3242 = vmatpush1.msra.mxu0 %v2975
    %3243 = vmatprep.subr.mxu0 %v2982
    %3244 = vmatpush1.msra.mxu0 %v2981
    %3245 = vmatprep.subr.mxu0 %v2988
    %3246 = vmatpush1.msra.mxu0 %v2987
    %3247 = vmatprep.subr.mxu0 %v2994
    %3248 = vmatpush1.msra.mxu0 %v2993
    %3249 = vmatprep.subr.mxu0 %v3000
    %3250 = vmatpush1.msra.mxu0 %v2999
    %3251 = vmatprep.subr.mxu0 %v3006
    %3252 = vmatpush1.msra.mxu0 %v3005
    %3253 = vmatprep.subr.mxu0 %v3012
    %3254 = vmatpush1.msra.mxu0 %v3011
    %3255 = vmatprep.subr.mxu0 %v3018
    %3256 = vmatpush1.msra.mxu0 %v3017
    %3257 = vmatprep.subr.mxu0 %v3024
    %3258 = vmatpush1.msra.mxu0 %v3023
    %3259 = vmatprep.subr.mxu0 %v3030
    %3260 = vmatpush1.msra.mxu0 %v3029
    %3261 = vmatprep.subr.mxu0 %v3036
    %3262 = vmatpush1.msra.mxu0 %v3035
    %3263 = vmatprep.subr.mxu0 %v3042
    %3264 = vmatpush1.msra.mxu0 %v3041
    %3265 = vmatprep.subr.mxu0 %v3048
    %3266 = vmatpush1.msra.mxu0 %v3047
    %3267 = vmatprep.subr.mxu0 %v3054
    %3268 = vmatpush1.msra.mxu0 %v3053
    %3269 = vmatprep.subr.mxu0 %v3060
    %3270 = vmatpush1.msra.mxu0 %v3059
    %3271 = vmatprep.subr.mxu0 %v3066
    %3272 = vmatpush1.msra.mxu0 %v3065
    %3273 = vmatprep.mubr.f32.mxu0 %v2866
    %3274 = vmatmul.mubr.f32.gmra.mrb[0].mxu0 %v2865
    %v3275 = vpop.f32.mrb[0].mxu0
    %v3276 = vadd.f32 %v781, %v3275
    %v3277 = vpop.f32.mrb[0].mxu0
    %v3278 = vadd.f32 %v785, %v3277
    %3279 = vdwg.mxu0
    %v3280 = vadd.f32 %v2869, %v3134
    %v3281 = vadd.f32 %v2870, %v3136
    %v3282 = vxor.u32 %v3280, 2147483648
    %v3283 = vxor.u32 %v3281, 2147483648
    %v3284 = vmul.f32 %v3282, 1.442695
    %v3285 = vpow.pop %v3284
    %v3286 = vmul.f32 %v3283, 1.442695
    %v3287 = vpow.pop %v3286
    %v3288 = vadd.f32 %v3285, 1.0
    %v3289 = vadd.f32 %v3287, 1.0
    %v3290 = vrcp.pop %v3288
    %v3291 = vmul.f32 1.0, %v3290
    %v3292 = vrcp.pop %v3289
    %v3293 = vmul.f32 1.0, %v3292
    %v3294 = vadd.f32 %v2871, %v3205
    %v3295 = vadd.f32 %v2872, %v3207
    %v3296 = vxor.u32 %v3294, 2147483648
    %v3297 = vxor.u32 %v3295, 2147483648
    %v3298 = vmul.f32 %v3296, 1.442695
    %v3299 = vpow.pop %v3298
    %v3300 = vmul.f32 %v3297, 1.442695
    %v3301 = vpow.pop %v3300
    %v3302 = vadd.f32 %v3299, 1.0
    %v3303 = vadd.f32 %v3301, 1.0
    %v3304 = vrcp.pop %v3302
    %v3305 = vmul.f32 1.0, %v3304
    %v3306 = vrcp.pop %v3303
    %v3307 = vmul.f32 1.0, %v3306
    %v3308 = vmul.f32 %v3291, %v3276
    %v3309 = vmul.f32 %v3293, %v3278
    %v3310 = vadd.f32 %v2873, %v3308
    %v3311 = vadd.f32 %v2874, %v3309
    %v3312 = vtanh.pop %v3310
    %v3313 = vtanh.pop %v3311
    %v3314 = vsub.f32 1.0, %v3305
    %v3315 = vsub.f32 1.0, %v3307
    %v3316 = vmul.f32 %v3314, %v3312
    %v3317 = vmul.f32 %v3315, %v3313
    %v3318 = vmul.f32 %v3305, %v2865
    %v3319 = vmul.f32 %v3307, %v2866
    %v3320 = vadd.f32 %v3316, %v3318
    %v3321 = vadd.f32 %v3317, %v3319
    %3322 = vst [vmem:[#allocation9 + $0x50] sm:$0xff] %v3320
    %3323 = vst [vmem:[#allocation9 + $0x58] sm:$0xff] %v3321
    %v3324 = vld [vmem:[#allocation2 + $0x120] sm:$0xff]
    %v3325 = vld [vmem:[#allocation2 + $0x128] sm:$0xff]
    %v3326 = vld [vmem:[#allocation2 + $0x130] sm:$0xff]
    %v3327 = vld [vmem:[#allocation2 + $0x138] sm:$0xff]
    %v3328 = vld [vmem:[#allocation2 + $0x140] sm:$0xff]
    %v3329 = vld [vmem:[#allocation2 + $0x148] sm:$0xff]
    %v3330 = vld [vmem:[#allocation8] sm:$0xff]
    %v3331 = vld [vmem:[#allocation8 + $0x8] sm:$0xff]
    %v3332 = vld [vmem:[#allocation8 + $0x10] sm:$0xff]
    %v3333 = vld [vmem:[#allocation8 + $0x18] sm:$0xff]
    %v3334 = vld [vmem:[#allocation8 + $0x20] sm:$0xff]
    %v3335 = vld [vmem:[#allocation8 + $0x28] sm:$0xff]
    %v3336 = vld [vmem:[#allocation8 + $0x30] sm:$0xff]
    %v3337 = vld [vmem:[#allocation8 + $0x38] sm:$0xff]
    %v3338 = vld [vmem:[#allocation8 + $0x40] sm:$0xff]
    %v3339 = vld [vmem:[#allocation8 + $0x48] sm:$0xff]
    %v3340 = vld [vmem:[#allocation8 + $0x50] sm:$0xff]
    %v3341 = vld [vmem:[#allocation8 + $0x58] sm:$0xff]
    %v3342 = vld [vmem:[#allocation8 + $0x60] sm:$0xff]
    %v3343 = vld [vmem:[#allocation8 + $0x68] sm:$0xff]
    %v3344 = vld [vmem:[#allocation8 + $0x70] sm:$0xff]
    %v3345 = vld [vmem:[#allocation8 + $0x78] sm:$0xff]
    %v3346 = vld [vmem:[#allocation8 + $0x80] sm:$0xff]
    %v3347 = vld [vmem:[#allocation8 + $0x88] sm:$0xff]
    %v3348 = vld [vmem:[#allocation8 + $0x90] sm:$0xff]
    %v3349 = vld [vmem:[#allocation8 + $0x98] sm:$0xff]
    %v3350 = vld [vmem:[#allocation8 + $0xa0] sm:$0xff]
    %v3351 = vld [vmem:[#allocation8 + $0xa8] sm:$0xff]
    %v3352 = vld [vmem:[#allocation8 + $0xb0] sm:$0xff]
    %v3353 = vld [vmem:[#allocation8 + $0xb8] sm:$0xff]
    %v3354 = vld [vmem:[#allocation8 + $0xc0] sm:$0xff]
    %v3355 = vld [vmem:[#allocation8 + $0xc8] sm:$0xff]
    %v3356 = vld [vmem:[#allocation8 + $0xd0] sm:$0xff]
    %v3357 = vld [vmem:[#allocation8 + $0xd8] sm:$0xff]
    %v3358 = vld [vmem:[#allocation8 + $0xe0] sm:$0xff]
    %v3359 = vld [vmem:[#allocation8 + $0xe8] sm:$0xff]
    %v3360 = vld [vmem:[#allocation8 + $0xf0] sm:$0xff]
    %v3361 = vld [vmem:[#allocation8 + $0xf8] sm:$0xff]
    %v3362 = vld [vmem:[#allocation8 + $0x100] sm:$0xff]
    %v3363 = vld [vmem:[#allocation8 + $0x108] sm:$0xff]
    %v3364 = vld [vmem:[#allocation8 + $0x110] sm:$0xff]
    %v3365 = vld [vmem:[#allocation8 + $0x118] sm:$0xff]
    %v3366 = vld [vmem:[#allocation8 + $0x120] sm:$0xff]
    %v3367 = vld [vmem:[#allocation8 + $0x128] sm:$0xff]
    %v3368 = vld [vmem:[#allocation8 + $0x130] sm:$0xff]
    %v3369 = vld [vmem:[#allocation8 + $0x138] sm:$0xff]
    %v3370 = vld [vmem:[#allocation8 + $0x140] sm:$0xff]
    %v3371 = vld [vmem:[#allocation8 + $0x148] sm:$0xff]
    %v3372 = vld [vmem:[#allocation8 + $0x150] sm:$0xff]
    %v3373 = vld [vmem:[#allocation8 + $0x158] sm:$0xff]
    %v3374 = vld [vmem:[#allocation8 + $0x160] sm:$0xff]
    %v3375 = vld [vmem:[#allocation8 + $0x168] sm:$0xff]
    %v3376 = vld [vmem:[#allocation8 + $0x170] sm:$0xff]
    %v3377 = vld [vmem:[#allocation8 + $0x178] sm:$0xff]
    %v3378 = vld [vmem:[#allocation8 + $0x180] sm:$0xff]
    %v3379 = vld [vmem:[#allocation8 + $0x188] sm:$0xff]
    %v3380 = vld [vmem:[#allocation8 + $0x190] sm:$0xff]
    %v3381 = vld [vmem:[#allocation8 + $0x198] sm:$0xff]
    %v3382 = vld [vmem:[#allocation8 + $0x1a0] sm:$0xff]
    %v3383 = vld [vmem:[#allocation8 + $0x1a8] sm:$0xff]
    %v3384 = vld [vmem:[#allocation8 + $0x1b0] sm:$0xff]
    %v3385 = vld [vmem:[#allocation8 + $0x1b8] sm:$0xff]
    %v3386 = vld [vmem:[#allocation8 + $0x1c0] sm:$0xff]
    %v3387 = vld [vmem:[#allocation8 + $0x1c8] sm:$0xff]
    %v3388 = vld [vmem:[#allocation8 + $0x1d0] sm:$0xff]
    %v3389 = vld [vmem:[#allocation8 + $0x1d8] sm:$0xff]
    %v3390 = vld [vmem:[#allocation8 + $0x1e0] sm:$0xff]
    %v3391 = vld [vmem:[#allocation8 + $0x1e8] sm:$0xff]
    %v3392 = vld [vmem:[#allocation8 + $0x1f0] sm:$0xff]
    %v3393 = vld [vmem:[#allocation8 + $0x1f8] sm:$0xff]
    %v3394 = vld [vmem:[#allocation8 + $0x200] sm:$0xff]
    %v3395 = vld [vmem:[#allocation8 + $0x208] sm:$0xff]
    %v3396 = vld [vmem:[#allocation8 + $0x210] sm:$0xff]
    %v3397 = vld [vmem:[#allocation8 + $0x218] sm:$0xff]
    %v3398 = vld [vmem:[#allocation8 + $0x220] sm:$0xff]
    %v3399 = vld [vmem:[#allocation8 + $0x228] sm:$0xff]
    %v3400 = vld [vmem:[#allocation8 + $0x230] sm:$0xff]
    %v3401 = vld [vmem:[#allocation8 + $0x238] sm:$0xff]
    %v3402 = vld [vmem:[#allocation8 + $0x240] sm:$0xff]
    %v3403 = vld [vmem:[#allocation8 + $0x248] sm:$0xff]
    %v3404 = vld [vmem:[#allocation8 + $0x250] sm:$0xff]
    %v3405 = vld [vmem:[#allocation8 + $0x258] sm:$0xff]
    %v3406 = vld [vmem:[#allocation8 + $0x260] sm:$0xff]
    %v3407 = vld [vmem:[#allocation8 + $0x268] sm:$0xff]
    %v3408 = vld [vmem:[#allocation8 + $0x270] sm:$0xff]
    %v3409 = vld [vmem:[#allocation8 + $0x278] sm:$0xff]
    %v3410 = vld [vmem:[#allocation8 + $0x280] sm:$0xff]
    %v3411 = vld [vmem:[#allocation8 + $0x288] sm:$0xff]
    %v3412 = vld [vmem:[#allocation8 + $0x290] sm:$0xff]
    %v3413 = vld [vmem:[#allocation8 + $0x298] sm:$0xff]
    %v3414 = vld [vmem:[#allocation8 + $0x2a0] sm:$0xff]
    %v3415 = vld [vmem:[#allocation8 + $0x2a8] sm:$0xff]
    %v3416 = vld [vmem:[#allocation8 + $0x2b0] sm:$0xff]
    %v3417 = vld [vmem:[#allocation8 + $0x2b8] sm:$0xff]
    %v3418 = vld [vmem:[#allocation8 + $0x2c0] sm:$0xff]
    %v3419 = vld [vmem:[#allocation8 + $0x2c8] sm:$0xff]
    %v3420 = vld [vmem:[#allocation8 + $0x2d0] sm:$0xff]
    %v3421 = vld [vmem:[#allocation8 + $0x2d8] sm:$0xff]
    %v3422 = vld [vmem:[#allocation8 + $0x2e0] sm:$0xff]
    %v3423 = vld [vmem:[#allocation8 + $0x2e8] sm:$0xff]
    %v3424 = vld [vmem:[#allocation8 + $0x2f0] sm:$0xff]
    %v3425 = vld [vmem:[#allocation8 + $0x2f8] sm:$0xff]
    %v3426 = vld [vmem:[#allocation8 + $0x300] sm:$0xff]
    %v3427 = vld [vmem:[#allocation8 + $0x308] sm:$0xff]
    %v3428 = vld [vmem:[#allocation8 + $0x310] sm:$0xff]
    %v3429 = vld [vmem:[#allocation8 + $0x318] sm:$0xff]
    %v3430 = vld [vmem:[#allocation8 + $0x320] sm:$0xff]
    %v3431 = vld [vmem:[#allocation8 + $0x328] sm:$0xff]
    %v3432 = vld [vmem:[#allocation8 + $0x330] sm:$0xff]
    %v3433 = vld [vmem:[#allocation8 + $0x338] sm:$0xff]
    %v3434 = vld [vmem:[#allocation8 + $0x340] sm:$0xff]
    %v3435 = vld [vmem:[#allocation8 + $0x348] sm:$0xff]
    %v3436 = vld [vmem:[#allocation8 + $0x350] sm:$0xff]
    %v3437 = vld [vmem:[#allocation8 + $0x358] sm:$0xff]
    %v3438 = vld [vmem:[#allocation8 + $0x360] sm:$0xff]
    %v3439 = vld [vmem:[#allocation8 + $0x368] sm:$0xff]
    %v3440 = vld [vmem:[#allocation8 + $0x370] sm:$0xff]
    %v3441 = vld [vmem:[#allocation8 + $0x378] sm:$0xff]
    %v3442 = vld [vmem:[#allocation8 + $0x380] sm:$0xff]
    %v3443 = vld [vmem:[#allocation8 + $0x388] sm:$0xff]
    %v3444 = vld [vmem:[#allocation8 + $0x390] sm:$0xff]
    %v3445 = vld [vmem:[#allocation8 + $0x398] sm:$0xff]
    %v3446 = vld [vmem:[#allocation8 + $0x3a0] sm:$0xff]
    %v3447 = vld [vmem:[#allocation8 + $0x3a8] sm:$0xff]
    %v3448 = vld [vmem:[#allocation8 + $0x3b0] sm:$0xff]
    %v3449 = vld [vmem:[#allocation8 + $0x3b8] sm:$0xff]
    %v3450 = vld [vmem:[#allocation8 + $0x3c0] sm:$0xff]
    %v3451 = vld [vmem:[#allocation8 + $0x3c8] sm:$0xff]
    %v3452 = vld [vmem:[#allocation8 + $0x3d0] sm:$0xff]
    %v3453 = vld [vmem:[#allocation8 + $0x3d8] sm:$0xff]
    %v3454 = vld [vmem:[#allocation8 + $0x3e0] sm:$0xff]
    %v3455 = vld [vmem:[#allocation8 + $0x3e8] sm:$0xff]
    %v3456 = vld [vmem:[#allocation8 + $0x3f0] sm:$0xff]
    %v3457 = vld [vmem:[#allocation8 + $0x3f8] sm:$0xff]
    %v3458 = vld [vmem:[#allocation8 + $0x400] sm:$0xff]
    %v3459 = vld [vmem:[#allocation8 + $0x408] sm:$0xff]
    %v3460 = vld [vmem:[#allocation8 + $0x410] sm:$0xff]
    %v3461 = vld [vmem:[#allocation8 + $0x418] sm:$0xff]
    %v3462 = vld [vmem:[#allocation8 + $0x420] sm:$0xff]
    %v3463 = vld [vmem:[#allocation8 + $0x428] sm:$0xff]
    %v3464 = vld [vmem:[#allocation8 + $0x430] sm:$0xff]
    %v3465 = vld [vmem:[#allocation8 + $0x438] sm:$0xff]
    %v3466 = vld [vmem:[#allocation8 + $0x440] sm:$0xff]
    %v3467 = vld [vmem:[#allocation8 + $0x448] sm:$0xff]
    %v3468 = vld [vmem:[#allocation8 + $0x450] sm:$0xff]
    %v3469 = vld [vmem:[#allocation8 + $0x458] sm:$0xff]
    %v3470 = vld [vmem:[#allocation8 + $0x460] sm:$0xff]
    %v3471 = vld [vmem:[#allocation8 + $0x468] sm:$0xff]
    %v3472 = vld [vmem:[#allocation8 + $0x470] sm:$0xff]
    %v3473 = vld [vmem:[#allocation8 + $0x478] sm:$0xff]
    %v3474 = vld [vmem:[#allocation8 + $0x480] sm:$0xff]
    %v3475 = vld [vmem:[#allocation8 + $0x488] sm:$0xff]
    %v3476 = vld [vmem:[#allocation8 + $0x490] sm:$0xff]
    %v3477 = vld [vmem:[#allocation8 + $0x498] sm:$0xff]
    %v3478 = vld [vmem:[#allocation8 + $0x4a0] sm:$0xff]
    %v3479 = vld [vmem:[#allocation8 + $0x4a8] sm:$0xff]
    %v3480 = vld [vmem:[#allocation8 + $0x4b0] sm:$0xff]
    %v3481 = vld [vmem:[#allocation8 + $0x4b8] sm:$0xff]
    %v3482 = vld [vmem:[#allocation8 + $0x4c0] sm:$0xff]
    %v3483 = vld [vmem:[#allocation8 + $0x4c8] sm:$0xff]
    %v3484 = vld [vmem:[#allocation8 + $0x4d0] sm:$0xff]
    %v3485 = vld [vmem:[#allocation8 + $0x4d8] sm:$0xff]
    %v3486 = vld [vmem:[#allocation8 + $0x4e0] sm:$0xff]
    %v3487 = vld [vmem:[#allocation8 + $0x4e8] sm:$0xff]
    %v3488 = vld [vmem:[#allocation8 + $0x4f0] sm:$0xff]
    %v3489 = vld [vmem:[#allocation8 + $0x4f8] sm:$0xff]
    %v3490 = vld [vmem:[#allocation8 + $0x500] sm:$0xff]
    %v3491 = vld [vmem:[#allocation8 + $0x508] sm:$0xff]
    %v3492 = vld [vmem:[#allocation8 + $0x510] sm:$0xff]
    %v3493 = vld [vmem:[#allocation8 + $0x518] sm:$0xff]
    %v3494 = vld [vmem:[#allocation8 + $0x520] sm:$0xff]
    %v3495 = vld [vmem:[#allocation8 + $0x528] sm:$0xff]
    %v3496 = vld [vmem:[#allocation8 + $0x530] sm:$0xff]
    %v3497 = vld [vmem:[#allocation8 + $0x538] sm:$0xff]
    %v3498 = vld [vmem:[#allocation8 + $0x540] sm:$0xff]
    %v3499 = vld [vmem:[#allocation8 + $0x548] sm:$0xff]
    %v3500 = vld [vmem:[#allocation8 + $0x550] sm:$0xff]
    %v3501 = vld [vmem:[#allocation8 + $0x558] sm:$0xff]
    %v3502 = vld [vmem:[#allocation8 + $0x560] sm:$0xff]
    %v3503 = vld [vmem:[#allocation8 + $0x568] sm:$0xff]
    %v3504 = vld [vmem:[#allocation8 + $0x570] sm:$0xff]
    %v3505 = vld [vmem:[#allocation8 + $0x578] sm:$0xff]
    %v3506 = vld [vmem:[#allocation8 + $0x580] sm:$0xff]
    %v3507 = vld [vmem:[#allocation8 + $0x588] sm:$0xff]
    %v3508 = vld [vmem:[#allocation8 + $0x590] sm:$0xff]
    %v3509 = vld [vmem:[#allocation8 + $0x598] sm:$0xff]
    %v3510 = vld [vmem:[#allocation8 + $0x5a0] sm:$0xff]
    %v3511 = vld [vmem:[#allocation8 + $0x5a8] sm:$0xff]
    %v3512 = vld [vmem:[#allocation8 + $0x5b0] sm:$0xff]
    %v3513 = vld [vmem:[#allocation8 + $0x5b8] sm:$0xff]
    %v3514 = vld [vmem:[#allocation8 + $0x5c0] sm:$0xff]
    %v3515 = vld [vmem:[#allocation8 + $0x5c8] sm:$0xff]
    %v3516 = vld [vmem:[#allocation8 + $0x5d0] sm:$0xff]
    %v3517 = vld [vmem:[#allocation8 + $0x5d8] sm:$0xff]
    %v3518 = vld [vmem:[#allocation8 + $0x5e0] sm:$0xff]
    %v3519 = vld [vmem:[#allocation8 + $0x5e8] sm:$0xff]
    %v3520 = vld [vmem:[#allocation8 + $0x5f0] sm:$0xff]
    %v3521 = vld [vmem:[#allocation8 + $0x5f8] sm:$0xff]
    %3522 = vmatprep.subr.mxu0 %v3331
    %3523 = vmatpush1.msra.mxu0 %v3330
    %3524 = vmatprep.subr.mxu0 %v3337
    %3525 = vmatpush1.msra.mxu0 %v3336
    %3526 = vmatprep.subr.mxu0 %v3343
    %3527 = vmatpush1.msra.mxu0 %v3342
    %3528 = vmatprep.subr.mxu0 %v3349
    %3529 = vmatpush1.msra.mxu0 %v3348
    %3530 = vmatprep.subr.mxu0 %v3355
    %3531 = vmatpush1.msra.mxu0 %v3354
    %3532 = vmatprep.subr.mxu0 %v3361
    %3533 = vmatpush1.msra.mxu0 %v3360
    %3534 = vmatprep.subr.mxu0 %v3367
    %3535 = vmatpush1.msra.mxu0 %v3366
    %3536 = vmatprep.subr.mxu0 %v3373
    %3537 = vmatpush1.msra.mxu0 %v3372
    %3538 = vmatprep.subr.mxu0 %v3379
    %3539 = vmatpush1.msra.mxu0 %v3378
    %3540 = vmatprep.subr.mxu0 %v3385
    %3541 = vmatpush1.msra.mxu0 %v3384
    %3542 = vmatprep.subr.mxu0 %v3391
    %3543 = vmatpush1.msra.mxu0 %v3390
    %3544 = vmatprep.subr.mxu0 %v3397
    %3545 = vmatpush1.msra.mxu0 %v3396
    %3546 = vmatprep.subr.mxu0 %v3403
    %3547 = vmatpush1.msra.mxu0 %v3402
    %3548 = vmatprep.subr.mxu0 %v3409
    %3549 = vmatpush1.msra.mxu0 %v3408
    %3550 = vmatprep.subr.mxu0 %v3415
    %3551 = vmatpush1.msra.mxu0 %v3414
    %3552 = vmatprep.subr.mxu0 %v3421
    %3553 = vmatpush1.msra.mxu0 %v3420
    %3554 = vmatprep.subr.mxu0 %v3427
    %3555 = vmatpush1.msra.mxu0 %v3426
    %3556 = vmatprep.subr.mxu0 %v3433
    %3557 = vmatpush1.msra.mxu0 %v3432
    %3558 = vmatprep.subr.mxu0 %v3439
    %3559 = vmatpush1.msra.mxu0 %v3438
    %3560 = vmatprep.subr.mxu0 %v3445
    %3561 = vmatpush1.msra.mxu0 %v3444
    %3562 = vmatprep.subr.mxu0 %v3451
    %3563 = vmatpush1.msra.mxu0 %v3450
    %3564 = vmatprep.subr.mxu0 %v3457
    %3565 = vmatpush1.msra.mxu0 %v3456
    %3566 = vmatprep.subr.mxu0 %v3463
    %3567 = vmatpush1.msra.mxu0 %v3462
    %3568 = vmatprep.subr.mxu0 %v3469
    %3569 = vmatpush1.msra.mxu0 %v3468
    %3570 = vmatprep.subr.mxu0 %v3475
    %3571 = vmatpush1.msra.mxu0 %v3474
    %3572 = vmatprep.subr.mxu0 %v3481
    %3573 = vmatpush1.msra.mxu0 %v3480
    %3574 = vmatprep.subr.mxu0 %v3487
    %3575 = vmatpush1.msra.mxu0 %v3486
    %3576 = vmatprep.subr.mxu0 %v3493
    %3577 = vmatpush1.msra.mxu0 %v3492
    %3578 = vmatprep.subr.mxu0 %v3499
    %3579 = vmatpush1.msra.mxu0 %v3498
    %3580 = vmatprep.subr.mxu0 %v3505
    %3581 = vmatpush1.msra.mxu0 %v3504
    %3582 = vmatprep.subr.mxu0 %v3511
    %3583 = vmatpush1.msra.mxu0 %v3510
    %3584 = vmatprep.subr.mxu0 %v3517
    %3585 = vmatpush1.msra.mxu0 %v3516
    %3586 = vmatprep.mubr.f32.mxu0 %v3321
    %3587 = vmatmul.mubr.f32.gmra.mrb[0].mxu0 %v3320
    %v3588 = vpop.f32.mrb[0].mxu0
    %v3589 = vadd.f32 %v765, %v3588
    %v3590 = vpop.f32.mrb[0].mxu0
    %v3591 = vadd.f32 %v769, %v3590
    %3592 = vdwg.mxu0
    %3593 = vmatprep.subr.mxu0 %v3333
    %3594 = vmatpush1.msra.mxu0 %v3332
    %3595 = vmatprep.subr.mxu0 %v3339
    %3596 = vmatpush1.msra.mxu0 %v3338
    %3597 = vmatprep.subr.mxu0 %v3345
    %3598 = vmatpush1.msra.mxu0 %v3344
    %3599 = vmatprep.subr.mxu0 %v3351
    %3600 = vmatpush1.msra.mxu0 %v3350
    %3601 = vmatprep.subr.mxu0 %v3357
    %3602 = vmatpush1.msra.mxu0 %v3356
    %3603 = vmatprep.subr.mxu0 %v3363
    %3604 = vmatpush1.msra.mxu0 %v3362
    %3605 = vmatprep.subr.mxu0 %v3369
    %3606 = vmatpush1.msra.mxu0 %v3368
    %3607 = vmatprep.subr.mxu0 %v3375
    %3608 = vmatpush1.msra.mxu0 %v3374
    %3609 = vmatprep.subr.mxu0 %v3381
    %3610 = vmatpush1.msra.mxu0 %v3380
    %3611 = vmatprep.subr.mxu0 %v3387
    %3612 = vmatpush1.msra.mxu0 %v3386
    %3613 = vmatprep.subr.mxu0 %v3393
    %3614 = vmatpush1.msra.mxu0 %v3392
    %3615 = vmatprep.subr.mxu0 %v3399
    %3616 = vmatpush1.msra.mxu0 %v3398
    %3617 = vmatprep.subr.mxu0 %v3405
    %3618 = vmatpush1.msra.mxu0 %v3404
    %3619 = vmatprep.subr.mxu0 %v3411
    %3620 = vmatpush1.msra.mxu0 %v3410
    %3621 = vmatprep.subr.mxu0 %v3417
    %3622 = vmatpush1.msra.mxu0 %v3416
    %3623 = vmatprep.subr.mxu0 %v3423
    %3624 = vmatpush1.msra.mxu0 %v3422
    %3625 = vmatprep.subr.mxu0 %v3429
    %3626 = vmatpush1.msra.mxu0 %v3428
    %3627 = vmatprep.subr.mxu0 %v3435
    %3628 = vmatpush1.msra.mxu0 %v3434
    %3629 = vmatprep.subr.mxu0 %v3441
    %3630 = vmatpush1.msra.mxu0 %v3440
    %3631 = vmatprep.subr.mxu0 %v3447
    %3632 = vmatpush1.msra.mxu0 %v3446
    %3633 = vmatprep.subr.mxu0 %v3453
    %3634 = vmatpush1.msra.mxu0 %v3452
    %3635 = vmatprep.subr.mxu0 %v3459
    %3636 = vmatpush1.msra.mxu0 %v3458
    %3637 = vmatprep.subr.mxu0 %v3465
    %3638 = vmatpush1.msra.mxu0 %v3464
    %3639 = vmatprep.subr.mxu0 %v3471
    %3640 = vmatpush1.msra.mxu0 %v3470
    %3641 = vmatprep.subr.mxu0 %v3477
    %3642 = vmatpush1.msra.mxu0 %v3476
    %3643 = vmatprep.subr.mxu0 %v3483
    %3644 = vmatpush1.msra.mxu0 %v3482
    %3645 = vmatprep.subr.mxu0 %v3489
    %3646 = vmatpush1.msra.mxu0 %v3488
    %3647 = vmatprep.subr.mxu0 %v3495
    %3648 = vmatpush1.msra.mxu0 %v3494
    %3649 = vmatprep.subr.mxu0 %v3501
    %3650 = vmatpush1.msra.mxu0 %v3500
    %3651 = vmatprep.subr.mxu0 %v3507
    %3652 = vmatpush1.msra.mxu0 %v3506
    %3653 = vmatprep.subr.mxu0 %v3513
    %3654 = vmatpush1.msra.mxu0 %v3512
    %3655 = vmatprep.subr.mxu0 %v3519
    %3656 = vmatpush1.msra.mxu0 %v3518
    %3657 = vmatprep.mubr.f32.mxu0 %v3321
    %3658 = vmatmul.mubr.f32.gmra.mrb[0].mxu0 %v3320
    %v3659 = vpop.f32.mrb[0].mxu0
    %v3660 = vadd.f32 %v773, %v3659
    %v3661 = vpop.f32.mrb[0].mxu0
    %v3662 = vadd.f32 %v777, %v3661
    %3663 = vdwg.mxu0
    %3664 = vmatprep.subr.mxu0 %v3335
    %3665 = vmatpush1.msra.mxu0 %v3334
    %3666 = vmatprep.subr.mxu0 %v3341
    %3667 = vmatpush1.msra.mxu0 %v3340
    %3668 = vmatprep.subr.mxu0 %v3347
    %3669 = vmatpush1.msra.mxu0 %v3346
    %3670 = vmatprep.subr.mxu0 %v3353
    %3671 = vmatpush1.msra.mxu0 %v3352
    %3672 = vmatprep.subr.mxu0 %v3359
    %3673 = vmatpush1.msra.mxu0 %v3358
    %3674 = vmatprep.subr.mxu0 %v3365
    %3675 = vmatpush1.msra.mxu0 %v3364
    %3676 = vmatprep.subr.mxu0 %v3371
    %3677 = vmatpush1.msra.mxu0 %v3370
    %3678 = vmatprep.subr.mxu0 %v3377
    %3679 = vmatpush1.msra.mxu0 %v3376
    %3680 = vmatprep.subr.mxu0 %v3383
    %3681 = vmatpush1.msra.mxu0 %v3382
    %3682 = vmatprep.subr.mxu0 %v3389
    %3683 = vmatpush1.msra.mxu0 %v3388
    %3684 = vmatprep.subr.mxu0 %v3395
    %3685 = vmatpush1.msra.mxu0 %v3394
    %3686 = vmatprep.subr.mxu0 %v3401
    %3687 = vmatpush1.msra.mxu0 %v3400
    %3688 = vmatprep.subr.mxu0 %v3407
    %3689 = vmatpush1.msra.mxu0 %v3406
    %3690 = vmatprep.subr.mxu0 %v3413
    %3691 = vmatpush1.msra.mxu0 %v3412
    %3692 = vmatprep.subr.mxu0 %v3419
    %3693 = vmatpush1.msra.mxu0 %v3418
    %3694 = vmatprep.subr.mxu0 %v3425
    %3695 = vmatpush1.msra.mxu0 %v3424
    %3696 = vmatprep.subr.mxu0 %v3431
    %3697 = vmatpush1.msra.mxu0 %v3430
    %3698 = vmatprep.subr.mxu0 %v3437
    %3699 = vmatpush1.msra.mxu0 %v3436
    %3700 = vmatprep.subr.mxu0 %v3443
    %3701 = vmatpush1.msra.mxu0 %v3442
    %3702 = vmatprep.subr.mxu0 %v3449
    %3703 = vmatpush1.msra.mxu0 %v3448
    %3704 = vmatprep.subr.mxu0 %v3455
    %3705 = vmatpush1.msra.mxu0 %v3454
    %3706 = vmatprep.subr.mxu0 %v3461
    %3707 = vmatpush1.msra.mxu0 %v3460
    %3708 = vmatprep.subr.mxu0 %v3467
    %3709 = vmatpush1.msra.mxu0 %v3466
    %3710 = vmatprep.subr.mxu0 %v3473
    %3711 = vmatpush1.msra.mxu0 %v3472
    %3712 = vmatprep.subr.mxu0 %v3479
    %3713 = vmatpush1.msra.mxu0 %v3478
    %3714 = vmatprep.subr.mxu0 %v3485
    %3715 = vmatpush1.msra.mxu0 %v3484
    %3716 = vmatprep.subr.mxu0 %v3491
    %3717 = vmatpush1.msra.mxu0 %v3490
    %3718 = vmatprep.subr.mxu0 %v3497
    %3719 = vmatpush1.msra.mxu0 %v3496
    %3720 = vmatprep.subr.mxu0 %v3503
    %3721 = vmatpush1.msra.mxu0 %v3502
    %3722 = vmatprep.subr.mxu0 %v3509
    %3723 = vmatpush1.msra.mxu0 %v3508
    %3724 = vmatprep.subr.mxu0 %v3515
    %3725 = vmatpush1.msra.mxu0 %v3514
    %3726 = vmatprep.subr.mxu0 %v3521
    %3727 = vmatpush1.msra.mxu0 %v3520
    %3728 = vmatprep.mubr.f32.mxu0 %v3321
    %3729 = vmatmul.mubr.f32.gmra.mrb[0].mxu0 %v3320
    %v3730 = vpop.f32.mrb[0].mxu0
    %v3731 = vadd.f32 %v781, %v3730
    %v3732 = vpop.f32.mrb[0].mxu0
    %v3733 = vadd.f32 %v785, %v3732
    %3734 = vdwg.mxu0
    %v3735 = vadd.f32 %v3324, %v3589
    %v3736 = vadd.f32 %v3325, %v3591
    %v3737 = vxor.u32 %v3735, 2147483648
    %v3738 = vxor.u32 %v3736, 2147483648
    %v3739 = vmul.f32 %v3737, 1.442695
    %v3740 = vpow.pop %v3739
    %v3741 = vmul.f32 %v3738, 1.442695
    %v3742 = vpow.pop %v3741
    %v3743 = vadd.f32 %v3740, 1.0
    %v3744 = vadd.f32 %v3742, 1.0
    %v3745 = vrcp.pop %v3743
    %v3746 = vmul.f32 1.0, %v3745
    %v3747 = vrcp.pop %v3744
    %v3748 = vmul.f32 1.0, %v3747
    %v3749 = vadd.f32 %v3326, %v3660
    %v3750 = vadd.f32 %v3327, %v3662
    %v3751 = vxor.u32 %v3749, 2147483648
    %v3752 = vxor.u32 %v3750, 2147483648
    %v3753 = vmul.f32 %v3751, 1.442695
    %v3754 = vpow.pop %v3753
    %v3755 = vmul.f32 %v3752, 1.442695
    %v3756 = vpow.pop %v3755
    %v3757 = vadd.f32 %v3754, 1.0
    %v3758 = vadd.f32 %v3756, 1.0
    %v3759 = vrcp.pop %v3757
    %v3760 = vmul.f32 1.0, %v3759
    %v3761 = vrcp.pop %v3758
    %v3762 = vmul.f32 1.0, %v3761
    %v3763 = vmul.f32 %v3746, %v3731
    %v3764 = vmul.f32 %v3748, %v3733
    %v3765 = vadd.f32 %v3328, %v3763
    %v3766 = vadd.f32 %v3329, %v3764
    %v3767 = vtanh.pop %v3765
    %v3768 = vtanh.pop %v3766
    %v3769 = vsub.f32 1.0, %v3760
    %v3770 = vsub.f32 1.0, %v3762
    %v3771 = vmul.f32 %v3769, %v3767
    %v3772 = vmul.f32 %v3770, %v3768
    %v3773 = vmul.f32 %v3760, %v3320
    %v3774 = vmul.f32 %v3762, %v3321
    %v3775 = vadd.f32 %v3771, %v3773
    %v3776 = vadd.f32 %v3772, %v3774
    %3777 = vst [vmem:[#allocation9 + $0x60] sm:$0xff] %v3775
    %3778 = vst [vmem:[#allocation9 + $0x68] sm:$0xff] %v3776
    %v3779 = vld [vmem:[#allocation2 + $0x150] sm:$0xff]
    %v3780 = vld [vmem:[#allocation2 + $0x158] sm:$0xff]
    %v3781 = vld [vmem:[#allocation2 + $0x160] sm:$0xff]
    %v3782 = vld [vmem:[#allocation2 + $0x168] sm:$0xff]
    %v3783 = vld [vmem:[#allocation2 + $0x170] sm:$0xff]
    %v3784 = vld [vmem:[#allocation2 + $0x178] sm:$0xff]
    %v3785 = vld [vmem:[#allocation8] sm:$0xff]
    %v3786 = vld [vmem:[#allocation8 + $0x8] sm:$0xff]
    %v3787 = vld [vmem:[#allocation8 + $0x10] sm:$0xff]
    %v3788 = vld [vmem:[#allocation8 + $0x18] sm:$0xff]
    %v3789 = vld [vmem:[#allocation8 + $0x20] sm:$0xff]
    %v3790 = vld [vmem:[#allocation8 + $0x28] sm:$0xff]
    %v3791 = vld [vmem:[#allocation8 + $0x30] sm:$0xff]
    %v3792 = vld [vmem:[#allocation8 + $0x38] sm:$0xff]
    %v3793 = vld [vmem:[#allocation8 + $0x40] sm:$0xff]
    %v3794 = vld [vmem:[#allocation8 + $0x48] sm:$0xff]
    %v3795 = vld [vmem:[#allocation8 + $0x50] sm:$0xff]
    %v3796 = vld [vmem:[#allocation8 + $0x58] sm:$0xff]
    %v3797 = vld [vmem:[#allocation8 + $0x60] sm:$0xff]
    %v3798 = vld [vmem:[#allocation8 + $0x68] sm:$0xff]
    %v3799 = vld [vmem:[#allocation8 + $0x70] sm:$0xff]
    %v3800 = vld [vmem:[#allocation8 + $0x78] sm:$0xff]
    %v3801 = vld [vmem:[#allocation8 + $0x80] sm:$0xff]
    %v3802 = vld [vmem:[#allocation8 + $0x88] sm:$0xff]
    %v3803 = vld [vmem:[#allocation8 + $0x90] sm:$0xff]
    %v3804 = vld [vmem:[#allocation8 + $0x98] sm:$0xff]
    %v3805 = vld [vmem:[#allocation8 + $0xa0] sm:$0xff]
    %v3806 = vld [vmem:[#allocation8 + $0xa8] sm:$0xff]
    %v3807 = vld [vmem:[#allocation8 + $0xb0] sm:$0xff]
    %v3808 = vld [vmem:[#allocation8 + $0xb8] sm:$0xff]
    %v3809 = vld [vmem:[#allocation8 + $0xc0] sm:$0xff]
    %v3810 = vld [vmem:[#allocation8 + $0xc8] sm:$0xff]
    %v3811 = vld [vmem:[#allocation8 + $0xd0] sm:$0xff]
    %v3812 = vld [vmem:[#allocation8 + $0xd8] sm:$0xff]
    %v3813 = vld [vmem:[#allocation8 + $0xe0] sm:$0xff]
    %v3814 = vld [vmem:[#allocation8 + $0xe8] sm:$0xff]
    %v3815 = vld [vmem:[#allocation8 + $0xf0] sm:$0xff]
    %v3816 = vld [vmem:[#allocation8 + $0xf8] sm:$0xff]
    %v3817 = vld [vmem:[#allocation8 + $0x100] sm:$0xff]
    %v3818 = vld [vmem:[#allocation8 + $0x108] sm:$0xff]
    %v3819 = vld [vmem:[#allocation8 + $0x110] sm:$0xff]
    %v3820 = vld [vmem:[#allocation8 + $0x118] sm:$0xff]
    %v3821 = vld [vmem:[#allocation8 + $0x120] sm:$0xff]
    %v3822 = vld [vmem:[#allocation8 + $0x128] sm:$0xff]
    %v3823 = vld [vmem:[#allocation8 + $0x130] sm:$0xff]
    %v3824 = vld [vmem:[#allocation8 + $0x138] sm:$0xff]
    %v3825 = vld [vmem:[#allocation8 + $0x140] sm:$0xff]
    %v3826 = vld [vmem:[#allocation8 + $0x148] sm:$0xff]
    %v3827 = vld [vmem:[#allocation8 + $0x150] sm:$0xff]
    %v3828 = vld [vmem:[#allocation8 + $0x158] sm:$0xff]
    %v3829 = vld [vmem:[#allocation8 + $0x160] sm:$0xff]
    %v3830 = vld [vmem:[#allocation8 + $0x168] sm:$0xff]
    %v3831 = vld [vmem:[#allocation8 + $0x170] sm:$0xff]
    %v3832 = vld [vmem:[#allocation8 + $0x178] sm:$0xff]
    %v3833 = vld [vmem:[#allocation8 + $0x180] sm:$0xff]
    %v3834 = vld [vmem:[#allocation8 + $0x188] sm:$0xff]
    %v3835 = vld [vmem:[#allocation8 + $0x190] sm:$0xff]
    %v3836 = vld [vmem:[#allocation8 + $0x198] sm:$0xff]
    %v3837 = vld [vmem:[#allocation8 + $0x1a0] sm:$0xff]
    %v3838 = vld [vmem:[#allocation8 + $0x1a8] sm:$0xff]
    %v3839 = vld [vmem:[#allocation8 + $0x1b0] sm:$0xff]
    %v3840 = vld [vmem:[#allocation8 + $0x1b8] sm:$0xff]
    %v3841 = vld [vmem:[#allocation8 + $0x1c0] sm:$0xff]
    %v3842 = vld [vmem:[#allocation8 + $0x1c8] sm:$0xff]
    %v3843 = vld [vmem:[#allocation8 + $0x1d0] sm:$0xff]
    %v3844 = vld [vmem:[#allocation8 + $0x1d8] sm:$0xff]
    %v3845 = vld [vmem:[#allocation8 + $0x1e0] sm:$0xff]
    %v3846 = vld [vmem:[#allocation8 + $0x1e8] sm:$0xff]
    %v3847 = vld [vmem:[#allocation8 + $0x1f0] sm:$0xff]
    %v3848 = vld [vmem:[#allocation8 + $0x1f8] sm:$0xff]
    %v3849 = vld [vmem:[#allocation8 + $0x200] sm:$0xff]
    %v3850 = vld [vmem:[#allocation8 + $0x208] sm:$0xff]
    %v3851 = vld [vmem:[#allocation8 + $0x210] sm:$0xff]
    %v3852 = vld [vmem:[#allocation8 + $0x218] sm:$0xff]
    %v3853 = vld [vmem:[#allocation8 + $0x220] sm:$0xff]
    %v3854 = vld [vmem:[#allocation8 + $0x228] sm:$0xff]
    %v3855 = vld [vmem:[#allocation8 + $0x230] sm:$0xff]
    %v3856 = vld [vmem:[#allocation8 + $0x238] sm:$0xff]
    %v3857 = vld [vmem:[#allocation8 + $0x240] sm:$0xff]
    %v3858 = vld [vmem:[#allocation8 + $0x248] sm:$0xff]
    %v3859 = vld [vmem:[#allocation8 + $0x250] sm:$0xff]
    %v3860 = vld [vmem:[#allocation8 + $0x258] sm:$0xff]
    %v3861 = vld [vmem:[#allocation8 + $0x260] sm:$0xff]
    %v3862 = vld [vmem:[#allocation8 + $0x268] sm:$0xff]
    %v3863 = vld [vmem:[#allocation8 + $0x270] sm:$0xff]
    %v3864 = vld [vmem:[#allocation8 + $0x278] sm:$0xff]
    %v3865 = vld [vmem:[#allocation8 + $0x280] sm:$0xff]
    %v3866 = vld [vmem:[#allocation8 + $0x288] sm:$0xff]
    %v3867 = vld [vmem:[#allocation8 + $0x290] sm:$0xff]
    %v3868 = vld [vmem:[#allocation8 + $0x298] sm:$0xff]
    %v3869 = vld [vmem:[#allocation8 + $0x2a0] sm:$0xff]
    %v3870 = vld [vmem:[#allocation8 + $0x2a8] sm:$0xff]
    %v3871 = vld [vmem:[#allocation8 + $0x2b0] sm:$0xff]
    %v3872 = vld [vmem:[#allocation8 + $0x2b8] sm:$0xff]
    %v3873 = vld [vmem:[#allocation8 + $0x2c0] sm:$0xff]
    %v3874 = vld [vmem:[#allocation8 + $0x2c8] sm:$0xff]
    %v3875 = vld [vmem:[#allocation8 + $0x2d0] sm:$0xff]
    %v3876 = vld [vmem:[#allocation8 + $0x2d8] sm:$0xff]
    %v3877 = vld [vmem:[#allocation8 + $0x2e0] sm:$0xff]
    %v3878 = vld [vmem:[#allocation8 + $0x2e8] sm:$0xff]
    %v3879 = vld [vmem:[#allocation8 + $0x2f0] sm:$0xff]
    %v3880 = vld [vmem:[#allocation8 + $0x2f8] sm:$0xff]
    %v3881 = vld [vmem:[#allocation8 + $0x300] sm:$0xff]
    %v3882 = vld [vmem:[#allocation8 + $0x308] sm:$0xff]
    %v3883 = vld [vmem:[#allocation8 + $0x310] sm:$0xff]
    %v3884 = vld [vmem:[#allocation8 + $0x318] sm:$0xff]
    %v3885 = vld [vmem:[#allocation8 + $0x320] sm:$0xff]
    %v3886 = vld [vmem:[#allocation8 + $0x328] sm:$0xff]
    %v3887 = vld [vmem:[#allocation8 + $0x330] sm:$0xff]
    %v3888 = vld [vmem:[#allocation8 + $0x338] sm:$0xff]
    %v3889 = vld [vmem:[#allocation8 + $0x340] sm:$0xff]
    %v3890 = vld [vmem:[#allocation8 + $0x348] sm:$0xff]
    %v3891 = vld [vmem:[#allocation8 + $0x350] sm:$0xff]
    %v3892 = vld [vmem:[#allocation8 + $0x358] sm:$0xff]
    %v3893 = vld [vmem:[#allocation8 + $0x360] sm:$0xff]
    %v3894 = vld [vmem:[#allocation8 + $0x368] sm:$0xff]
    %v3895 = vld [vmem:[#allocation8 + $0x370] sm:$0xff]
    %v3896 = vld [vmem:[#allocation8 + $0x378] sm:$0xff]
    %v3897 = vld [vmem:[#allocation8 + $0x380] sm:$0xff]
    %v3898 = vld [vmem:[#allocation8 + $0x388] sm:$0xff]
    %v3899 = vld [vmem:[#allocation8 + $0x390] sm:$0xff]
    %v3900 = vld [vmem:[#allocation8 + $0x398] sm:$0xff]
    %v3901 = vld [vmem:[#allocation8 + $0x3a0] sm:$0xff]
    %v3902 = vld [vmem:[#allocation8 + $0x3a8] sm:$0xff]
    %v3903 = vld [vmem:[#allocation8 + $0x3b0] sm:$0xff]
    %v3904 = vld [vmem:[#allocation8 + $0x3b8] sm:$0xff]
    %v3905 = vld [vmem:[#allocation8 + $0x3c0] sm:$0xff]
    %v3906 = vld [vmem:[#allocation8 + $0x3c8] sm:$0xff]
    %v3907 = vld [vmem:[#allocation8 + $0x3d0] sm:$0xff]
    %v3908 = vld [vmem:[#allocation8 + $0x3d8] sm:$0xff]
    %v3909 = vld [vmem:[#allocation8 + $0x3e0] sm:$0xff]
    %v3910 = vld [vmem:[#allocation8 + $0x3e8] sm:$0xff]
    %v3911 = vld [vmem:[#allocation8 + $0x3f0] sm:$0xff]
    %v3912 = vld [vmem:[#allocation8 + $0x3f8] sm:$0xff]
    %v3913 = vld [vmem:[#allocation8 + $0x400] sm:$0xff]
    %v3914 = vld [vmem:[#allocation8 + $0x408] sm:$0xff]
    %v3915 = vld [vmem:[#allocation8 + $0x410] sm:$0xff]
    %v3916 = vld [vmem:[#allocation8 + $0x418] sm:$0xff]
    %v3917 = vld [vmem:[#allocation8 + $0x420] sm:$0xff]
    %v3918 = vld [vmem:[#allocation8 + $0x428] sm:$0xff]
    %v3919 = vld [vmem:[#allocation8 + $0x430] sm:$0xff]
    %v3920 = vld [vmem:[#allocation8 + $0x438] sm:$0xff]
    %v3921 = vld [vmem:[#allocation8 + $0x440] sm:$0xff]
    %v3922 = vld [vmem:[#allocation8 + $0x448] sm:$0xff]
    %v3923 = vld [vmem:[#allocation8 + $0x450] sm:$0xff]
    %v3924 = vld [vmem:[#allocation8 + $0x458] sm:$0xff]
    %v3925 = vld [vmem:[#allocation8 + $0x460] sm:$0xff]
    %v3926 = vld [vmem:[#allocation8 + $0x468] sm:$0xff]
    %v3927 = vld [vmem:[#allocation8 + $0x470] sm:$0xff]
    %v3928 = vld [vmem:[#allocation8 + $0x478] sm:$0xff]
    %v3929 = vld [vmem:[#allocation8 + $0x480] sm:$0xff]
    %v3930 = vld [vmem:[#allocation8 + $0x488] sm:$0xff]
    %v3931 = vld [vmem:[#allocation8 + $0x490] sm:$0xff]
    %v3932 = vld [vmem:[#allocation8 + $0x498] sm:$0xff]
    %v3933 = vld [vmem:[#allocation8 + $0x4a0] sm:$0xff]
    %v3934 = vld [vmem:[#allocation8 + $0x4a8] sm:$0xff]
    %v3935 = vld [vmem:[#allocation8 + $0x4b0] sm:$0xff]
    %v3936 = vld [vmem:[#allocation8 + $0x4b8] sm:$0xff]
    %v3937 = vld [vmem:[#allocation8 + $0x4c0] sm:$0xff]
    %v3938 = vld [vmem:[#allocation8 + $0x4c8] sm:$0xff]
    %v3939 = vld [vmem:[#allocation8 + $0x4d0] sm:$0xff]
    %v3940 = vld [vmem:[#allocation8 + $0x4d8] sm:$0xff]
    %v3941 = vld [vmem:[#allocation8 + $0x4e0] sm:$0xff]
    %v3942 = vld [vmem:[#allocation8 + $0x4e8] sm:$0xff]
    %v3943 = vld [vmem:[#allocation8 + $0x4f0] sm:$0xff]
    %v3944 = vld [vmem:[#allocation8 + $0x4f8] sm:$0xff]
    %v3945 = vld [vmem:[#allocation8 + $0x500] sm:$0xff]
    %v3946 = vld [vmem:[#allocation8 + $0x508] sm:$0xff]
    %v3947 = vld [vmem:[#allocation8 + $0x510] sm:$0xff]
    %v3948 = vld [vmem:[#allocation8 + $0x518] sm:$0xff]
    %v3949 = vld [vmem:[#allocation8 + $0x520] sm:$0xff]
    %v3950 = vld [vmem:[#allocation8 + $0x528] sm:$0xff]
    %v3951 = vld [vmem:[#allocation8 + $0x530] sm:$0xff]
    %v3952 = vld [vmem:[#allocation8 + $0x538] sm:$0xff]
    %v3953 = vld [vmem:[#allocation8 + $0x540] sm:$0xff]
    %v3954 = vld [vmem:[#allocation8 + $0x548] sm:$0xff]
    %v3955 = vld [vmem:[#allocation8 + $0x550] sm:$0xff]
    %v3956 = vld [vmem:[#allocation8 + $0x558] sm:$0xff]
    %v3957 = vld [vmem:[#allocation8 + $0x560] sm:$0xff]
    %v3958 = vld [vmem:[#allocation8 + $0x568] sm:$0xff]
    %v3959 = vld [vmem:[#allocation8 + $0x570] sm:$0xff]
    %v3960 = vld [vmem:[#allocation8 + $0x578] sm:$0xff]
    %v3961 = vld [vmem:[#allocation8 + $0x580] sm:$0xff]
    %v3962 = vld [vmem:[#allocation8 + $0x588] sm:$0xff]
    %v3963 = vld [vmem:[#allocation8 + $0x590] sm:$0xff]
    %v3964 = vld [vmem:[#allocation8 + $0x598] sm:$0xff]
    %v3965 = vld [vmem:[#allocation8 + $0x5a0] sm:$0xff]
    %v3966 = vld [vmem:[#allocation8 + $0x5a8] sm:$0xff]
    %v3967 = vld [vmem:[#allocation8 + $0x5b0] sm:$0xff]
    %v3968 = vld [vmem:[#allocation8 + $0x5b8] sm:$0xff]
    %v3969 = vld [vmem:[#allocation8 + $0x5c0] sm:$0xff]
    %v3970 = vld [vmem:[#allocation8 + $0x5c8] sm:$0xff]
    %v3971 = vld [vmem:[#allocation8 + $0x5d0] sm:$0xff]
    %v3972 = vld [vmem:[#allocation8 + $0x5d8] sm:$0xff]
    %v3973 = vld [vmem:[#allocation8 + $0x5e0] sm:$0xff]
    %v3974 = vld [vmem:[#allocation8 + $0x5e8] sm:$0xff]
    %v3975 = vld [vmem:[#allocation8 + $0x5f0] sm:$0xff]
    %v3976 = vld [vmem:[#allocation8 + $0x5f8] sm:$0xff]
    %3977 = vmatprep.subr.mxu0 %v3786
    %3978 = vmatpush1.msra.mxu0 %v3785
    %3979 = vmatprep.subr.mxu0 %v3792
    %3980 = vmatpush1.msra.mxu0 %v3791
    %3981 = vmatprep.subr.mxu0 %v3798
    %3982 = vmatpush1.msra.mxu0 %v3797
    %3983 = vmatprep.subr.mxu0 %v3804
    %3984 = vmatpush1.msra.mxu0 %v3803
    %3985 = vmatprep.subr.mxu0 %v3810
    %3986 = vmatpush1.msra.mxu0 %v3809
    %3987 = vmatprep.subr.mxu0 %v3816
    %3988 = vmatpush1.msra.mxu0 %v3815
    %3989 = vmatprep.subr.mxu0 %v3822
    %3990 = vmatpush1.msra.mxu0 %v3821
    %3991 = vmatprep.subr.mxu0 %v3828
    %3992 = vmatpush1.msra.mxu0 %v3827
    %3993 = vmatprep.subr.mxu0 %v3834
    %3994 = vmatpush1.msra.mxu0 %v3833
    %3995 = vmatprep.subr.mxu0 %v3840
    %3996 = vmatpush1.msra.mxu0 %v3839
    %3997 = vmatprep.subr.mxu0 %v3846
    %3998 = vmatpush1.msra.mxu0 %v3845
    %3999 = vmatprep.subr.mxu0 %v3852
    %4000 = vmatpush1.msra.mxu0 %v3851
    %4001 = vmatprep.subr.mxu0 %v3858
    %4002 = vmatpush1.msra.mxu0 %v3857
    %4003 = vmatprep.subr.mxu0 %v3864
    %4004 = vmatpush1.msra.mxu0 %v3863
    %4005 = vmatprep.subr.mxu0 %v3870
    %4006 = vmatpush1.msra.mxu0 %v3869
    %4007 = vmatprep.subr.mxu0 %v3876
    %4008 = vmatpush1.msra.mxu0 %v3875
    %4009 = vmatprep.subr.mxu0 %v3882
    %4010 = vmatpush1.msra.mxu0 %v3881
    %4011 = vmatprep.subr.mxu0 %v3888
    %4012 = vmatpush1.msra.mxu0 %v3887
    %4013 = vmatprep.subr.mxu0 %v3894
    %4014 = vmatpush1.msra.mxu0 %v3893
    %4015 = vmatprep.subr.mxu0 %v3900
    %4016 = vmatpush1.msra.mxu0 %v3899
    %4017 = vmatprep.subr.mxu0 %v3906
    %4018 = vmatpush1.msra.mxu0 %v3905
    %4019 = vmatprep.subr.mxu0 %v3912
    %4020 = vmatpush1.msra.mxu0 %v3911
    %4021 = vmatprep.subr.mxu0 %v3918
    %4022 = vmatpush1.msra.mxu0 %v3917
    %4023 = vmatprep.subr.mxu0 %v3924
    %4024 = vmatpush1.msra.mxu0 %v3923
    %4025 = vmatprep.subr.mxu0 %v3930
    %4026 = vmatpush1.msra.mxu0 %v3929
    %4027 = vmatprep.subr.mxu0 %v3936
    %4028 = vmatpush1.msra.mxu0 %v3935
    %4029 = vmatprep.subr.mxu0 %v3942
    %4030 = vmatpush1.msra.mxu0 %v3941
    %4031 = vmatprep.subr.mxu0 %v3948
    %4032 = vmatpush1.msra.mxu0 %v3947
    %4033 = vmatprep.subr.mxu0 %v3954
    %4034 = vmatpush1.msra.mxu0 %v3953
    %4035 = vmatprep.subr.mxu0 %v3960
    %4036 = vmatpush1.msra.mxu0 %v3959
    %4037 = vmatprep.subr.mxu0 %v3966
    %4038 = vmatpush1.msra.mxu0 %v3965
    %4039 = vmatprep.subr.mxu0 %v3972
    %4040 = vmatpush1.msra.mxu0 %v3971
    %4041 = vmatprep.mubr.f32.mxu0 %v3776
    %4042 = vmatmul.mubr.f32.gmra.mrb[0].mxu0 %v3775
    %v4043 = vpop.f32.mrb[0].mxu0
    %v4044 = vadd.f32 %v765, %v4043
    %v4045 = vpop.f32.mrb[0].mxu0
    %v4046 = vadd.f32 %v769, %v4045
    %4047 = vdwg.mxu0
    %4048 = vmatprep.subr.mxu0 %v3788
    %4049 = vmatpush1.msra.mxu0 %v3787
    %4050 = vmatprep.subr.mxu0 %v3794
    %4051 = vmatpush1.msra.mxu0 %v3793
    %4052 = vmatprep.subr.mxu0 %v3800
    %4053 = vmatpush1.msra.mxu0 %v3799
    %4054 = vmatprep.subr.mxu0 %v3806
    %4055 = vmatpush1.msra.mxu0 %v3805
    %4056 = vmatprep.subr.mxu0 %v3812
    %4057 = vmatpush1.msra.mxu0 %v3811
    %4058 = vmatprep.subr.mxu0 %v3818
    %4059 = vmatpush1.msra.mxu0 %v3817
    %4060 = vmatprep.subr.mxu0 %v3824
    %4061 = vmatpush1.msra.mxu0 %v3823
    %4062 = vmatprep.subr.mxu0 %v3830
    %4063 = vmatpush1.msra.mxu0 %v3829
    %4064 = vmatprep.subr.mxu0 %v3836
    %4065 = vmatpush1.msra.mxu0 %v3835
    %4066 = vmatprep.subr.mxu0 %v3842
    %4067 = vmatpush1.msra.mxu0 %v3841
    %4068 = vmatprep.subr.mxu0 %v3848
    %4069 = vmatpush1.msra.mxu0 %v3847
    %4070 = vmatprep.subr.mxu0 %v3854
    %4071 = vmatpush1.msra.mxu0 %v3853
    %4072 = vmatprep.subr.mxu0 %v3860
    %4073 = vmatpush1.msra.mxu0 %v3859
    %4074 = vmatprep.subr.mxu0 %v3866
    %4075 = vmatpush1.msra.mxu0 %v3865
    %4076 = vmatprep.subr.mxu0 %v3872
    %4077 = vmatpush1.msra.mxu0 %v3871
    %4078 = vmatprep.subr.mxu0 %v3878
    %4079 = vmatpush1.msra.mxu0 %v3877
    %4080 = vmatprep.subr.mxu0 %v3884
    %4081 = vmatpush1.msra.mxu0 %v3883
    %4082 = vmatprep.subr.mxu0 %v3890
    %4083 = vmatpush1.msra.mxu0 %v3889
    %4084 = vmatprep.subr.mxu0 %v3896
    %4085 = vmatpush1.msra.mxu0 %v3895
    %4086 = vmatprep.subr.mxu0 %v3902
    %4087 = vmatpush1.msra.mxu0 %v3901
    %4088 = vmatprep.subr.mxu0 %v3908
    %4089 = vmatpush1.msra.mxu0 %v3907
    %4090 = vmatprep.subr.mxu0 %v3914
    %4091 = vmatpush1.msra.mxu0 %v3913
    %4092 = vmatprep.subr.mxu0 %v3920
    %4093 = vmatpush1.msra.mxu0 %v3919
    %4094 = vmatprep.subr.mxu0 %v3926
    %4095 = vmatpush1.msra.mxu0 %v3925
    %4096 = vmatprep.subr.mxu0 %v3932
    %4097 = vmatpush1.msra.mxu0 %v3931
    %4098 = vmatprep.subr.mxu0 %v3938
    %4099 = vmatpush1.msra.mxu0 %v3937
    %4100 = vmatprep.subr.mxu0 %v3944
    %4101 = vmatpush1.msra.mxu0 %v3943
    %4102 = vmatprep.subr.mxu0 %v3950
    %4103 = vmatpush1.msra.mxu0 %v3949
    %4104 = vmatprep.subr.mxu0 %v3956
    %4105 = vmatpush1.msra.mxu0 %v3955
    %4106 = vmatprep.subr.mxu0 %v3962
    %4107 = vmatpush1.msra.mxu0 %v3961
    %4108 = vmatprep.subr.mxu0 %v3968
    %4109 = vmatpush1.msra.mxu0 %v3967
    %4110 = vmatprep.subr.mxu0 %v3974
    %4111 = vmatpush1.msra.mxu0 %v3973
    %4112 = vmatprep.mubr.f32.mxu0 %v3776
    %4113 = vmatmul.mubr.f32.gmra.mrb[0].mxu0 %v3775
    %v4114 = vpop.f32.mrb[0].mxu0
    %v4115 = vadd.f32 %v773, %v4114
    %v4116 = vpop.f32.mrb[0].mxu0
    %v4117 = vadd.f32 %v777, %v4116
    %4118 = vdwg.mxu0
    %4119 = vmatprep.subr.mxu0 %v3790
    %4120 = vmatpush1.msra.mxu0 %v3789
    %4121 = vmatprep.subr.mxu0 %v3796
    %4122 = vmatpush1.msra.mxu0 %v3795
    %4123 = vmatprep.subr.mxu0 %v3802
    %4124 = vmatpush1.msra.mxu0 %v3801
    %4125 = vmatprep.subr.mxu0 %v3808
    %4126 = vmatpush1.msra.mxu0 %v3807
    %4127 = vmatprep.subr.mxu0 %v3814
    %4128 = vmatpush1.msra.mxu0 %v3813
    %4129 = vmatprep.subr.mxu0 %v3820
    %4130 = vmatpush1.msra.mxu0 %v3819
    %4131 = vmatprep.subr.mxu0 %v3826
    %4132 = vmatpush1.msra.mxu0 %v3825
    %4133 = vmatprep.subr.mxu0 %v3832
    %4134 = vmatpush1.msra.mxu0 %v3831
    %4135 = vmatprep.subr.mxu0 %v3838
    %4136 = vmatpush1.msra.mxu0 %v3837
    %4137 = vmatprep.subr.mxu0 %v3844
    %4138 = vmatpush1.msra.mxu0 %v3843
    %4139 = vmatprep.subr.mxu0 %v3850
    %4140 = vmatpush1.msra.mxu0 %v3849
    %4141 = vmatprep.subr.mxu0 %v3856
    %4142 = vmatpush1.msra.mxu0 %v3855
    %4143 = vmatprep.subr.mxu0 %v3862
    %4144 = vmatpush1.msra.mxu0 %v3861
    %4145 = vmatprep.subr.mxu0 %v3868
    %4146 = vmatpush1.msra.mxu0 %v3867
    %4147 = vmatprep.subr.mxu0 %v3874
    %4148 = vmatpush1.msra.mxu0 %v3873
    %4149 = vmatprep.subr.mxu0 %v3880
    %4150 = vmatpush1.msra.mxu0 %v3879
    %4151 = vmatprep.subr.mxu0 %v3886
    %4152 = vmatpush1.msra.mxu0 %v3885
    %4153 = vmatprep.subr.mxu0 %v3892
    %4154 = vmatpush1.msra.mxu0 %v3891
    %4155 = vmatprep.subr.mxu0 %v3898
    %4156 = vmatpush1.msra.mxu0 %v3897
    %4157 = vmatprep.subr.mxu0 %v3904
    %4158 = vmatpush1.msra.mxu0 %v3903
    %4159 = vmatprep.subr.mxu0 %v3910
    %4160 = vmatpush1.msra.mxu0 %v3909
    %4161 = vmatprep.subr.mxu0 %v3916
    %4162 = vmatpush1.msra.mxu0 %v3915
    %4163 = vmatprep.subr.mxu0 %v3922
    %4164 = vmatpush1.msra.mxu0 %v3921
    %4165 = vmatprep.subr.mxu0 %v3928
    %4166 = vmatpush1.msra.mxu0 %v3927
    %4167 = vmatprep.subr.mxu0 %v3934
    %4168 = vmatpush1.msra.mxu0 %v3933
    %4169 = vmatprep.subr.mxu0 %v3940
    %4170 = vmatpush1.msra.mxu0 %v3939
    %4171 = vmatprep.subr.mxu0 %v3946
    %4172 = vmatpush1.msra.mxu0 %v3945
    %4173 = vmatprep.subr.mxu0 %v3952
    %4174 = vmatpush1.msra.mxu0 %v3951
    %4175 = vmatprep.subr.mxu0 %v3958
    %4176 = vmatpush1.msra.mxu0 %v3957
    %4177 = vmatprep.subr.mxu0 %v3964
    %4178 = vmatpush1.msra.mxu0 %v3963
    %4179 = vmatprep.subr.mxu0 %v3970
    %4180 = vmatpush1.msra.mxu0 %v3969
    %4181 = vmatprep.subr.mxu0 %v3976
    %4182 = vmatpush1.msra.mxu0 %v3975
    %4183 = vmatprep.mubr.f32.mxu0 %v3776
    %4184 = vmatmul.mubr.f32.gmra.mrb[0].mxu0 %v3775
    %v4185 = vpop.f32.mrb[0].mxu0
    %v4186 = vadd.f32 %v781, %v4185
    %v4187 = vpop.f32.mrb[0].mxu0
    %v4188 = vadd.f32 %v785, %v4187
    %4189 = vdwg.mxu0
    %v4190 = vadd.f32 %v3779, %v4044
    %v4191 = vadd.f32 %v3780, %v4046
    %v4192 = vxor.u32 %v4190, 2147483648
    %v4193 = vxor.u32 %v4191, 2147483648
    %v4194 = vmul.f32 %v4192, 1.442695
    %v4195 = vpow.pop %v4194
    %v4196 = vmul.f32 %v4193, 1.442695
    %v4197 = vpow.pop %v4196
    %v4198 = vadd.f32 %v4195, 1.0
    %v4199 = vadd.f32 %v4197, 1.0
    %v4200 = vrcp.pop %v4198
    %v4201 = vmul.f32 1.0, %v4200
    %v4202 = vrcp.pop %v4199
    %v4203 = vmul.f32 1.0, %v4202
    %v4204 = vadd.f32 %v3781, %v4115
    %v4205 = vadd.f32 %v3782, %v4117
    %v4206 = vxor.u32 %v4204, 2147483648
    %v4207 = vxor.u32 %v4205, 2147483648
    %v4208 = vmul.f32 %v4206, 1.442695
    %v4209 = vpow.pop %v4208
    %v4210 = vmul.f32 %v4207, 1.442695
    %v4211 = vpow.pop %v4210
    %v4212 = vadd.f32 %v4209, 1.0
    %v4213 = vadd.f32 %v4211, 1.0
    %v4214 = vrcp.pop %v4212
    %v4215 = vmul.f32 1.0, %v4214
    %v4216 = vrcp.pop %v4213
    %v4217 = vmul.f32 1.0, %v4216
    %v4218 = vmul.f32 %v4201, %v4186
    %v4219 = vmul.f32 %v4203, %v4188
    %v4220 = vadd.f32 %v3783, %v4218
    %v4221 = vadd.f32 %v3784, %v4219
    %v4222 = vtanh.pop %v4220
    %v4223 = vtanh.pop %v4221
    %v4224 = vsub.f32 1.0, %v4215
    %v4225 = vsub.f32 1.0, %v4217
    %v4226 = vmul.f32 %v4224, %v4222
    %v4227 = vmul.f32 %v4225, %v4223
    %v4228 = vmul.f32 %v4215, %v3775
    %v4229 = vmul.f32 %v4217, %v3776
    %v4230 = vadd.f32 %v4226, %v4228
    %v4231 = vadd.f32 %v4227, %v4229
    %4232 = vst [vmem:[#allocation9 + $0x70] sm:$0xff] %v4230
    %4233 = vst [vmem:[#allocation9 + $0x78] sm:$0xff] %v4231
    // Predicated region
    $region34: #{tpu_custom_call.1} parent=1 // pred_check
      _
    $region35: #{tpu_custom_call.1} parent=1 // pred_check_branch
      %4235 = sbr.rel (0) target = $region37
    $region36: #{tpu_custom_call.1} parent=1 // pred_region
      %s4237 = ssub.s32 2048, 2048
      %4238 = vsyncadd [#allocation5], %s4237
      %s4239 = sshll.u32 [#allocation9], 4
      %s4240 = int_to_ptr.vmem [resolvable:$true] %s4239
      %4245 = dma.vmem_to_hbm [thread:$0]  %s4240, 2048, %s5, [#allocation5], 256, 256, 16
    $region37: #{tpu_custom_call.1} parent=1 // pred_fallthru
      _
    // Predicated region
    $region38: #{tpu_custom_call.1} parent=1 // pred_check
      _
    $region39: #{tpu_custom_call.1} parent=1 // pred_check_branch
      %4247 = sbr.rel (0) target = $region41
    $region40: #{tpu_custom_call.1} parent=1 // pred_region
      %4248 = dma.done [#allocation5], 2048
    $region41: #{tpu_custom_call.1} parent=1 // pred_fallthru
      _
    %4249 = vsyncpa [#allocation4], 1
    %4250 = vsyncpa [#allocation7], 1
    %4251 = vsyncpa [#allocation5], 1

</llo_original>
